<compile_context>
chip_gen: v5e
topology: v5e:2x2
jax: 0.10.0
libtpu: 0.0.40
codegen_flags: <defaults>
</compile_context>

<pallas_src>
import functools
import math

import jax
import jax.numpy as jnp
from jax.experimental import pallas as pl
from jax.experimental.pallas import tpu as pltpu

SELU_ALPHA = 1.6732632423543772
SELU_SCALE = 1.0507009873554805
EPS = 1e-5  # torch InstanceNorm2d default


# ----------------------------- kernel helpers ------------------------------

def _apply_act(y, act):
    if act == "relu":
        return jnp.maximum(y, 0.0)
    if act == "selu":
        # exp only ever sees non-positive arguments -> no transient inf
        return SELU_SCALE * (jnp.maximum(y, 0.0)
                             + SELU_ALPHA * (jnp.exp(jnp.minimum(y, 0.0)) - 1.0))
    if act == "tanh":
        return jnp.tanh(y)
    return y  # "none"


def _instance_norm(acc):
    # acc: [C, M], stats per channel over the lane (spatial) axis, single pass,
    # biased variance (torch semantics).
    mean = jnp.mean(acc, axis=-1, keepdims=True)
    msq = jnp.mean(acc * acc, axis=-1, keepdims=True)
    var = msq - mean * mean
    return (acc - mean) * jax.lax.rsqrt(var + EPS)


# ------------------------------ fused kernels ------------------------------

def _conv_fused_kernel(x_ref, w_ref, b_ref, o_ref, *, norm, act):
    # x: [1, K, M] (K = kh*kw*Cin, M = Ho*Wo), w: [Cout, K], b: [Cout, 1]
    acc = jnp.dot(w_ref[...], x_ref[0], preferred_element_type=jnp.float32)
    acc = acc + b_ref[...]
    if norm:
        acc = _instance_norm(acc)
    o_ref[0] = _apply_act(acc, act)


def _conv_fused_res_kernel(x_ref, res_ref, w_ref, b_ref, o_ref, *, norm, act):
    acc = jnp.dot(w_ref[...], x_ref[0], preferred_element_type=jnp.float32)
    acc = acc + b_ref[...]
    if norm:
        acc = _instance_norm(acc)
    acc = _apply_act(acc, act)
    o_ref[0] = acc + res_ref[0]          # ResnetBlock skip connection


def _upconv_fused_kernel(x_ref, w_ref, b_ref, o_ref, *, act):
    # Sub-pixel decomposed ConvTranspose2d(k=3, s=2, p=1, output_padding=1).
    # x: [1, 4*Cin, M] (2x2 taps of the undilated input), w: [4, Cout, 4*Cin]
    # (phase-packed, zeros for unused taps), o: [1, 4, Cout, M].
    x = x_ref[0]
    b = b_ref[...]
    accs = [jnp.dot(w_ref[p], x, preferred_element_type=jnp.float32) + b
            for p in range(4)]
    # InstanceNorm statistics over the FULL (2H x 2W) output map = all phases.
    m_count = 4.0 * accs[0].shape[-1]
    tot = sum(jnp.sum(a, axis=-1, keepdims=True) for a in accs)
    tot_sq = sum(jnp.sum(a * a, axis=-1, keepdims=True) for a in accs)
    mean = tot / m_count
    var = tot_sq / m_count - mean * mean
    inv = jax.lax.rsqrt(var + EPS)
    for p in range(4):
        y = (accs[p] - mean) * inv
        o_ref[0, p] = _apply_act(y, act)


# --------------------------- pallas_call wrappers ---------------------------

_CPARAMS = pltpu.CompilerParams(dimension_semantics=("parallel",))


def _conv_fused(taps, w2, b, *, norm, act, residual=None):
    N, K, M = taps.shape
    Co = w2.shape[0]
    b2 = b.reshape(Co, 1)
    out_shape = jax.ShapeDtypeStruct((N, Co, M), jnp.float32)
    if residual is None:
        kern = functools.partial(_conv_fused_kernel, norm=norm, act=act)
        in_specs = [
            pl.BlockSpec((1, K, M), lambda n: (n, 0, 0)),
            pl.BlockSpec((Co, K), lambda n: (0, 0)),
            pl.BlockSpec((Co, 1), lambda n: (0, 0)),
        ]
        args = (taps, w2, b2)
    else:
        kern = functools.partial(_conv_fused_res_kernel, norm=norm, act=act)
        in_specs = [
            pl.BlockSpec((1, K, M), lambda n: (n, 0, 0)),
            pl.BlockSpec((1, Co, M), lambda n: (n, 0, 0)),
            pl.BlockSpec((Co, K), lambda n: (0, 0)),
            pl.BlockSpec((Co, 1), lambda n: (0, 0)),
        ]
        args = (taps, residual, w2, b2)
    return pl.pallas_call(
        kern,
        grid=(N,),
        in_specs=in_specs,
        out_specs=pl.BlockSpec((1, Co, M), lambda n: (n, 0, 0)),
        out_shape=out_shape,
        compiler_params=_CPARAMS,
    )(*args)


def _upconv_fused(taps, wpk, b, *, act):
    N, K4, M = taps.shape
    Co = wpk.shape[1]
    b2 = b.reshape(Co, 1)
    return pl.pallas_call(
        functools.partial(_upconv_fused_kernel, act=act),
        grid=(N,),
        in_specs=[
            pl.BlockSpec((1, K4, M), lambda n: (n, 0, 0)),
            pl.BlockSpec((4, Co, K4), lambda n: (0, 0, 0)),
            pl.BlockSpec((Co, 1), lambda n: (0, 0)),
        ],
        out_specs=pl.BlockSpec((1, 4, Co, M), lambda n: (n, 0, 0, 0)),
        out_shape=jax.ShapeDtypeStruct((N, 4, Co, M), jnp.float32),
        compiler_params=_CPARAMS,
    )(taps, wpk, b2)


# ------------------------------ JAX glue (jitted) ---------------------------

def _extract_taps(xp, k, stride):
    # xp: [N, C, Hp, Wp] already padded -> taps [N, k*k*C, Ho*Wo]
    N, C, Hp, Wp = xp.shape
    Ho = (Hp - k) // stride + 1
    Wo = (Wp - k) // stride + 1
    taps = []
    for di in range(k):
        for dj in range(k):
            taps.append(xp[:, :, di:di + (Ho - 1) * stride + 1:stride,
                                 dj:dj + (Wo - 1) * stride + 1:stride])
    t = jnp.stack(taps, axis=1)                      # [N, T, C, Ho, Wo]
    return t.reshape(N, k * k * C, Ho * Wo), (Ho, Wo)


def conv_block(x, w_hwio, b, *, stride, pad, pad_mode, norm, act, residual=None):
    # x: [N, Cin, H, W]; w: [kh, kw, Cin, Cout]
    N = x.shape[0]
    kh, kw, Cin, Cout = w_hwio.shape
    if pad > 0:
        x = jnp.pad(x, ((0, 0), (0, 0), (pad, pad), (pad, pad)), mode=pad_mode)
    taps, (Ho, Wo) = _extract_taps(x, kh, stride)
    w2 = w_hwio.reshape(kh * kw * Cin, Cout).T       # [Cout, kh*kw*Cin]
    res = None if residual is None else residual.reshape(N, Cout, Ho * Wo)
    y = _conv_fused(taps, w2, b, norm=norm, act=act, residual=res)
    return y.reshape(N, Cout, Ho, Wo)


def conv_transpose_block(x, w_t, b, *, act):
    # ConvTranspose2d(k=3, s=2, p=1, output_padding=1) + InstanceNorm + act.
    # w_t[ky, kx, ci, co] == torch ConvTranspose2d weight[ci, co, ky, kx]
    # (exact polyphase decomposition -> no spatial-flip ambiguity).
    N, Cin, H, W = x.shape
    Cout = w_t.shape[3]
    xp = jnp.pad(x, ((0, 0), (0, 0), (0, 1), (0, 1)))  # zero pad bottom/right
    taps, _ = _extract_taps(xp, 2, 1)                  # [N, 4*Cin, H*W]
    # Phase p=(py,px) gets tap t=(a,b) (a<=py, b<=px) with kernel index
    # (ky, kx) = (1+py-2a, 1+px-2b); unused taps stay zero.
    wpk = jnp.zeros((4, Cout, 4 * Cin), jnp.float32)
    for py in range(2):
        for px in range(2):
            p = 2 * py + px
            for a in range(py + 1):
                for bb in range(px + 1):
                    t = 2 * a + bb
                    ky, kx = 1 + py - 2 * a, 1 + px - 2 * bb
                    wpk = wpk.at[p, :, t * Cin:(t + 1) * Cin].set(w_t[ky, kx].T)
    y = _upconv_fused(taps, wpk, b, act=act)           # [N, 4, Cout, H*W]
    y = y.reshape(N, 2, 2, Cout, H, W)                 # (N, py, px, C, H, W)
    y = jnp.transpose(y, (0, 3, 4, 1, 5, 2))           # (N, C, H, py, W, px)
    return y.reshape(N, Cout, 2 * H, 2 * W)


# --------------------------- parameters & model ----------------------------

def init_params(key, input_nc=3, output_nc=3, ngf=8, n_blocks=2):
    n_layers = 1 + 2 + 2 * n_blocks + 2 + 1
    keys = iter(jax.random.split(key, 2 * n_layers))

    def conv(kh, kw, cin, cout):
        fan_in = kh * kw * cin
        w = jax.random.normal(next(keys), (kh, kw, cin, cout),
                              jnp.float32) / math.sqrt(fan_in)
        b = jax.random.normal(next(keys), (cout,), jnp.float32) * 0.01
        return w, b

    p = {"stem": conv(7, 7, input_nc, ngf)}
    for i in range(2):                                   # downsampling
        mult = 2 ** i
        p[f"down{i}"] = conv(3, 3, ngf * mult, ngf * mult * 2)
    mult = 4
    for i in range(n_blocks):                            # resnet blocks
        p[f"res{i}_1"] = conv(3, 3, ngf * mult, ngf * mult)
        p[f"res{i}_2"] = conv(3, 3, ngf * mult, ngf * mult)
    for i in range(2):                                   # upsampling (transpose)
        m = 2 ** (2 - i)
        p[f"up{i}"] = conv(3, 3, ngf * m, ngf * m // 2)  # [ky,kx,Cin,Cout]
    p["out"] = conv(7, 7, ngf, output_nc)
    return p


def resnet_generator_forward(params, x_nchw, n_blocks=2):
    h = x_nchw.astype(jnp.float32)                       # NCHW throughout

    # stem: ReflectionPad2d(3) -> Conv 7x7 -> InstanceNorm -> SELU
    w, b = params["stem"]
    h = conv_block(h, w, b, stride=1, pad=3, pad_mode="reflect",
                   norm=True, act="selu")

    # 2x downsampling: Conv 3x3 s2 p1 -> InstanceNorm -> SELU
    for i in range(2):
        w, b = params[f"down{i}"]
        h = conv_block(h, w, b, stride=2, pad=1, pad_mode="constant",
                       norm=True, act="selu")

    # resnet blocks (reflect, conv, IN, ReLU, reflect, conv, IN) + skip
    # TODO(synk): use_dropout=False here, so the nn.Dropout(0.5) branch is omitted.
    for i in range(n_blocks):
        w1, b1 = params[f"res{i}_1"]
        w2, b2 = params[f"res{i}_2"]
        t = conv_block(h, w1, b1, stride=1, pad=1, pad_mode="reflect",
                       norm=True, act="relu")
        h = conv_block(t, w2, b2, stride=1, pad=1, pad_mode="reflect",
                       norm=True, act="none", residual=h)

    # 2x upsampling: ConvTranspose2d(3, s2, p1, op1) -> InstanceNorm -> SELU
    for i in range(2):
        w, b = params[f"up{i}"]
        h = conv_transpose_block(h, w, b, act="selu")

    # head: ReflectionPad2d(3) -> Conv 7x7 (bias) -> Tanh (fused in kernel)
    w, b = params["out"]
    h = conv_block(h, w, b, stride=1, pad=3, pad_mode="reflect",
                   norm=False, act="tanh")
    return h                                             # NCHW


# --------------------------------- main ------------------------------------

if __name__ == "__main__":
    key = jax.random.PRNGKey(0)
    pkey, xkey = jax.random.split(key)

    INPUT_NC, OUTPUT_NC, NGF, N_BLOCKS = 3, 3, 8, 2  # small config (module default n_blocks=6)
    params = init_params(pkey, INPUT_NC, OUTPUT_NC, NGF, N_BLOCKS)

    x = jax.random.normal(xkey, (2, INPUT_NC, 16, 16), jnp.float32)  # NCHW

    fwd = jax.jit(functools.partial(resnet_generator_forward, n_blocks=N_BLOCKS))
    out = jax.block_until_ready(fwd(params, x))

    assert out.shape == (2, OUTPUT_NC, 16, 16), out.shape
    assert bool(jnp.all(jnp.isfinite(out)))
    assert bool(jnp.all(jnp.abs(out) <= 1.0))  # tanh output range
    print("KERNEL_OK")
</pallas_src>

<mosaic_0001>
module attributes {stable_mosaic.version = 11 : i64} {
  func.func @_conv_fused_kernel(%arg0: i32, %arg1: memref<1x147x256xf32, #tpu.memory_space<vmem>>, %arg2: memref<8x147xf32, #tpu.memory_space<vmem>>, %arg3: memref<8x1xf32, #tpu.memory_space<vmem>>, %arg4: memref<1x8x256xf32, #tpu.memory_space<vmem>>) attributes {dimension_semantics = [#tpu.dimension_semantics<parallel>], iteration_bounds = array<i64: 2>, scalar_prefetch = 0 : i64, scratch_operands = 0 : i64, tpu.core_type = #tpu.core_type<tc>, window_params = [{transform_indices = @transform_0, window_bounds = array<i64: 1, 147, 256>}, {pipeline_mode = #tpu.pipeline_mode<synchronous>, transform_indices = @transform_1, window_bounds = array<i64: 8, 147>}, {pipeline_mode = #tpu.pipeline_mode<synchronous>, transform_indices = @transform_2, window_bounds = array<i64: 8, 1>}, {transform_indices = @transform_3, window_bounds = array<i64: 1, 8, 256>}]} {
    %c0 = arith.constant 0 : index
    %c0_0 = arith.constant 0 : index
    %0 = vector.load %arg2[%c0, %c0_0] : memref<8x147xf32, #tpu.memory_space<vmem>>, vector<8x147xf32>
    %c0_1 = arith.constant 0 : index
    %c0_2 = arith.constant 0 : index
    %c0_3 = arith.constant 0 : index
    %1 = vector.load %arg1[%c0_1, %c0_2, %c0_3] : memref<1x147x256xf32, #tpu.memory_space<vmem>>, vector<1x147x256xf32>
    %2 = vector.shape_cast %1 : vector<1x147x256xf32> to vector<147x256xf32>
    %cst = arith.constant dense<0.000000e+00> : vector<8x256xf32>
    %3 = tpu.matmul %0, %2, %cst {dimension_numbers = #tpu.dot_dimension_numbers<[1], [0], [0], [1], [0, 0, 1, 1], [], []>} : vector<8x147xf32>, vector<147x256xf32>, vector<8x256xf32> -> vector<8x256xf32>
    %c0_4 = arith.constant 0 : index
    %c0_5 = arith.constant 0 : index
    %4 = vector.load %arg3[%c0_4, %c0_5] : memref<8x1xf32, #tpu.memory_space<vmem>>, vector<8x1xf32>
    %5 = vector.broadcast %4 : vector<8x1xf32> to vector<8x256xf32>
    %6 = arith.addf %3, %5 : vector<8x256xf32>
    %cst_6 = arith.constant dense<0.000000e+00> : vector<8xf32>
    %7 = vector.multi_reduction <add>, %6, %cst_6 [1] : vector<8x256xf32> to vector<8xf32>
    %8 = vector.shape_cast %7 : vector<8xf32> to vector<8x1xf32>
    %cst_7 = arith.constant 2.560000e+02 : f32
    %9 = vector.broadcast %cst_7 : f32 to vector<8x1xf32>
    %10 = arith.divf %8, %9 : vector<8x1xf32>
    %11 = arith.mulf %6, %6 : vector<8x256xf32>
    %cst_8 = arith.constant dense<0.000000e+00> : vector<8xf32>
    %12 = vector.multi_reduction <add>, %11, %cst_8 [1] : vector<8x256xf32> to vector<8xf32>
    %13 = vector.shape_cast %12 : vector<8xf32> to vector<8x1xf32>
    %cst_9 = arith.constant 2.560000e+02 : f32
    %14 = vector.broadcast %cst_9 : f32 to vector<8x1xf32>
    %15 = arith.divf %13, %14 : vector<8x1xf32>
    %16 = arith.mulf %10, %10 : vector<8x1xf32>
    %17 = arith.subf %15, %16 : vector<8x1xf32>
    %18 = vector.broadcast %10 : vector<8x1xf32> to vector<8x256xf32>
    %19 = arith.subf %6, %18 : vector<8x256xf32>
    %cst_10 = arith.constant 9.99999974E-6 : f32
    %20 = vector.broadcast %cst_10 : f32 to vector<8x1xf32>
    %21 = arith.addf %17, %20 : vector<8x1xf32>
    %22 = math.rsqrt %21 : vector<8x1xf32>
    %23 = vector.broadcast %22 : vector<8x1xf32> to vector<8x256xf32>
    %24 = arith.mulf %19, %23 : vector<8x256xf32>
    %cst_11 = arith.constant 0.000000e+00 : f32
    %25 = vector.broadcast %cst_11 : f32 to vector<8x256xf32>
    %26 = arith.maximumf %24, %25 : vector<8x256xf32>
    %cst_12 = arith.constant 0.000000e+00 : f32
    %27 = vector.broadcast %cst_12 : f32 to vector<8x256xf32>
    %28 = arith.minimumf %24, %27 : vector<8x256xf32>
    %29 = math.exp %28 : vector<8x256xf32>
    %cst_13 = arith.constant 1.000000e+00 : f32
    %30 = vector.broadcast %cst_13 : f32 to vector<8x256xf32>
    %31 = arith.subf %29, %30 : vector<8x256xf32>
    %cst_14 = arith.constant 1.67326319 : f32
    %32 = vector.broadcast %cst_14 : f32 to vector<8x256xf32>
    %33 = arith.mulf %32, %31 : vector<8x256xf32>
    %34 = arith.addf %26, %33 : vector<8x256xf32>
    %cst_15 = arith.constant 1.05070102 : f32
    %35 = vector.broadcast %cst_15 : f32 to vector<8x256xf32>
    %36 = arith.mulf %35, %34 : vector<8x256xf32>
    %c0_16 = arith.constant 0 : index
    %c0_17 = arith.constant 0 : index
    %c0_18 = arith.constant 0 : index
    %37 = vector.load %arg4[%c0_16, %c0_17, %c0_18] : memref<1x8x256xf32, #tpu.memory_space<vmem>>, vector<1x8x256xf32>
    %38 = vector.shape_cast %37 : vector<1x8x256xf32> to vector<8x256xf32>
    %39 = vector.shape_cast %36 : vector<8x256xf32> to vector<1x8x256xf32>
    tpu.vector_store %arg4[%c0_16, %c0_17, %c0_18], %39 {strides = array<i32>} : memref<1x8x256xf32, #tpu.memory_space<vmem>>, vector<1x8x256xf32>,
    return
  }
  func.func @transform_0(%arg0: i32) -> (i32, i32, i32) {
    %c0_i32 = arith.constant 0 : i32
    %c0_i32_0 = arith.constant 0 : i32
    %c0_i32_1 = arith.constant 0 : i32
    return %arg0, %c0_i32, %c0_i32_0 : i32, i32, i32
  }
  func.func @transform_1(%arg0: i32) -> (i32, i32) {
    %c0_i32 = arith.constant 0 : i32
    %c0_i32_0 = arith.constant 0 : i32
    %c0_i32_1 = arith.constant 0 : i32
    return %c0_i32, %c0_i32_0 : i32, i32
  }
  func.func @transform_2(%arg0: i32) -> (i32, i32) {
    %c0_i32 = arith.constant 0 : i32
    %c0_i32_0 = arith.constant 0 : i32
    %c0_i32_1 = arith.constant 0 : i32
    return %c0_i32, %c0_i32_0 : i32, i32
  }
  func.func @transform_3(%arg0: i32) -> (i32, i32, i32) {
    %c0_i32 = arith.constant 0 : i32
    %c0_i32_0 = arith.constant 0 : i32
    %c0_i32_1 = arith.constant 0 : i32
    return %arg0, %c0_i32, %c0_i32_0 : i32, i32, i32
  }
}

module attributes {stable_mosaic.version = 11 : i64} {
  func.func @_conv_fused_kernel(%arg0: i32, %arg1: memref<1x72x64xf32, #tpu.memory_space<vmem>>, %arg2: memref<16x72xf32, #tpu.memory_space<vmem>>, %arg3: memref<16x1xf32, #tpu.memory_space<vmem>>, %arg4: memref<1x16x64xf32, #tpu.memory_space<vmem>>) attributes {dimension_semantics = [#tpu.dimension_semantics<parallel>], iteration_bounds = array<i64: 2>, scalar_prefetch = 0 : i64, scratch_operands = 0 : i64, tpu.core_type = #tpu.core_type<tc>, window_params = [{transform_indices = @transform_0, window_bounds = array<i64: 1, 72, 64>}, {pipeline_mode = #tpu.pipeline_mode<synchronous>, transform_indices = @transform_1, window_bounds = array<i64: 16, 72>}, {pipeline_mode = #tpu.pipeline_mode<synchronous>, transform_indices = @transform_2, window_bounds = array<i64: 16, 1>}, {transform_indices = @transform_3, window_bounds = array<i64: 1, 16, 64>}]} {
    %c0 = arith.constant 0 : index
    %c0_0 = arith.constant 0 : index
    %0 = vector.load %arg2[%c0, %c0_0] : memref<16x72xf32, #tpu.memory_space<vmem>>, vector<16x72xf32>
    %c0_1 = arith.constant 0 : index
    %c0_2 = arith.constant 0 : index
    %c0_3 = arith.constant 0 : index
    %1 = vector.load %arg1[%c0_1, %c0_2, %c0_3] : memref<1x72x64xf32, #tpu.memory_space<vmem>>, vector<1x72x64xf32>
    %2 = vector.shape_cast %1 : vector<1x72x64xf32> to vector<72x64xf32>
    %cst = arith.constant dense<0.000000e+00> : vector<16x64xf32>
    %3 = tpu.matmul %0, %2, %cst {dimension_numbers = #tpu.dot_dimension_numbers<[1], [0], [0], [1], [0, 0, 1, 1], [], []>} : vector<16x72xf32>, vector<72x64xf32>, vector<16x64xf32> -> vector<16x64xf32>
    %c0_4 = arith.constant 0 : index
    %c0_5 = arith.constant 0 : index
    %4 = vector.load %arg3[%c0_4, %c0_5] : memref<16x1xf32, #tpu.memory_space<vmem>>, vector<16x1xf32>
    %5 = vector.broadcast %4 : vector<16x1xf32> to vector<16x64xf32>
    %6 = arith.addf %3, %5 : vector<16x64xf32>
    %cst_6 = arith.constant dense<0.000000e+00> : vector<16xf32>
    %7 = vector.multi_reduction <add>, %6, %cst_6 [1] : vector<16x64xf32> to vector<16xf32>
    %8 = vector.shape_cast %7 : vector<16xf32> to vector<16x1xf32>
    %cst_7 = arith.constant 6.400000e+01 : f32
    %9 = vector.broadcast %cst_7 : f32 to vector<16x1xf32>
    %10 = arith.divf %8, %9 : vector<16x1xf32>
    %11 = arith.mulf %6, %6 : vector<16x64xf32>
    %cst_8 = arith.constant dense<0.000000e+00> : vector<16xf32>
    %12 = vector.multi_reduction <add>, %11, %cst_8 [1] : vector<16x64xf32> to vector<16xf32>
    %13 = vector.shape_cast %12 : vector<16xf32> to vector<16x1xf32>
    %cst_9 = arith.constant 6.400000e+01 : f32
    %14 = vector.broadcast %cst_9 : f32 to vector<16x1xf32>
    %15 = arith.divf %13, %14 : vector<16x1xf32>
    %16 = arith.mulf %10, %10 : vector<16x1xf32>
    %17 = arith.subf %15, %16 : vector<16x1xf32>
    %18 = vector.broadcast %10 : vector<16x1xf32> to vector<16x64xf32>
    %19 = arith.subf %6, %18 : vector<16x64xf32>
    %cst_10 = arith.constant 9.99999974E-6 : f32
    %20 = vector.broadcast %cst_10 : f32 to vector<16x1xf32>
    %21 = arith.addf %17, %20 : vector<16x1xf32>
    %22 = math.rsqrt %21 : vector<16x1xf32>
    %23 = vector.broadcast %22 : vector<16x1xf32> to vector<16x64xf32>
    %24 = arith.mulf %19, %23 : vector<16x64xf32>
    %cst_11 = arith.constant 0.000000e+00 : f32
    %25 = vector.broadcast %cst_11 : f32 to vector<16x64xf32>
    %26 = arith.maximumf %24, %25 : vector<16x64xf32>
    %cst_12 = arith.constant 0.000000e+00 : f32
    %27 = vector.broadcast %cst_12 : f32 to vector<16x64xf32>
    %28 = arith.minimumf %24, %27 : vector<16x64xf32>
    %29 = math.exp %28 : vector<16x64xf32>
    %cst_13 = arith.constant 1.000000e+00 : f32
    %30 = vector.broadcast %cst_13 : f32 to vector<16x64xf32>
    %31 = arith.subf %29, %30 : vector<16x64xf32>
    %cst_14 = arith.constant 1.67326319 : f32
    %32 = vector.broadcast %cst_14 : f32 to vector<16x64xf32>
    %33 = arith.mulf %32, %31 : vector<16x64xf32>
    %34 = arith.addf %26, %33 : vector<16x64xf32>
    %cst_15 = arith.constant 1.05070102 : f32
    %35 = vector.broadcast %cst_15 : f32 to vector<16x64xf32>
    %36 = arith.mulf %35, %34 : vector<16x64xf32>
    %c0_16 = arith.constant 0 : index
    %c0_17 = arith.constant 0 : index
    %c0_18 = arith.constant 0 : index
    %37 = vector.load %arg4[%c0_16, %c0_17, %c0_18] : memref<1x16x64xf32, #tpu.memory_space<vmem>>, vector<1x16x64xf32>
    %38 = vector.shape_cast %37 : vector<1x16x64xf32> to vector<16x64xf32>
    %39 = vector.shape_cast %36 : vector<16x64xf32> to vector<1x16x64xf32>
    tpu.vector_store %arg4[%c0_16, %c0_17, %c0_18], %39 {strides = array<i32>} : memref<1x16x64xf32, #tpu.memory_space<vmem>>, vector<1x16x64xf32>,
    return
  }
  func.func @transform_0(%arg0: i32) -> (i32, i32, i32) {
    %c0_i32 = arith.constant 0 : i32
    %c0_i32_0 = arith.constant 0 : i32
    %c0_i32_1 = arith.constant 0 : i32
    return %arg0, %c0_i32, %c0_i32_0 : i32, i32, i32
  }
  func.func @transform_1(%arg0: i32) -> (i32, i32) {
    %c0_i32 = arith.constant 0 : i32
    %c0_i32_0 = arith.constant 0 : i32
    %c0_i32_1 = arith.constant 0 : i32
    return %c0_i32, %c0_i32_0 : i32, i32
  }
  func.func @transform_2(%arg0: i32) -> (i32, i32) {
    %c0_i32 = arith.constant 0 : i32
    %c0_i32_0 = arith.constant 0 : i32
    %c0_i32_1 = arith.constant 0 : i32
    return %c0_i32, %c0_i32_0 : i32, i32
  }
  func.func @transform_3(%arg0: i32) -> (i32, i32, i32) {
    %c0_i32 = arith.constant 0 : i32
    %c0_i32_0 = arith.constant 0 : i32
    %c0_i32_1 = arith.constant 0 : i32
    return %arg0, %c0_i32, %c0_i32_0 : i32, i32, i32
  }
}

module attributes {stable_mosaic.version = 11 : i64} {
  func.func @_conv_fused_kernel(%arg0: i32, %arg1: memref<1x144x16xf32, #tpu.memory_space<vmem>>, %arg2: memref<32x144xf32, #tpu.memory_space<vmem>>, %arg3: memref<32x1xf32, #tpu.memory_space<vmem>>, %arg4: memref<1x32x16xf32, #tpu.memory_space<vmem>>) attributes {dimension_semantics = [#tpu.dimension_semantics<parallel>], iteration_bounds = array<i64: 2>, scalar_prefetch = 0 : i64, scratch_operands = 0 : i64, tpu.core_type = #tpu.core_type<tc>, window_params = [{transform_indices = @transform_0, window_bounds = array<i64: 1, 144, 16>}, {pipeline_mode = #tpu.pipeline_mode<synchronous>, transform_indices = @transform_1, window_bounds = array<i64: 32, 144>}, {pipeline_mode = #tpu.pipeline_mode<synchronous>, transform_indices = @transform_2, window_bounds = array<i64: 32, 1>}, {transform_indices = @transform_3, window_bounds = array<i64: 1, 32, 16>}]} {
    %c0 = arith.constant 0 : index
    %c0_0 = arith.constant 0 : index
    %0 = vector.load %arg2[%c0, %c0_0] : memref<32x144xf32, #tpu.memory_space<vmem>>, vector<32x144xf32>
    %c0_1 = arith.constant 0 : index
    %c0_2 = arith.constant 0 : index
    %c0_3 = arith.constant 0 : index
    %1 = vector.load %arg1[%c0_1, %c0_2, %c0_3] : memref<1x144x16xf32, #tpu.memory_space<vmem>>, vector<1x144x16xf32>
    %2 = vector.shape_cast %1 : vector<1x144x16xf32> to vector<144x16xf32>
    %cst = arith.constant dense<0.000000e+00> : vector<32x16xf32>
    %3 = tpu.matmul %0, %2, %cst {dimension_numbers = #tpu.dot_dimension_numbers<[1], [0], [0], [1], [0, 0, 1, 1], [], []>} : vector<32x144xf32>, vector<144x16xf32>, vector<32x16xf32> -> vector<32x16xf32>
    %c0_4 = arith.constant 0 : index
    %c0_5 = arith.constant 0 : index
    %4 = vector.load %arg3[%c0_4, %c0_5] : memref<32x1xf32, #tpu.memory_space<vmem>>, vector<32x1xf32>
    %5 = vector.broadcast %4 : vector<32x1xf32> to vector<32x16xf32>
    %6 = arith.addf %3, %5 : vector<32x16xf32>
    %cst_6 = arith.constant dense<0.000000e+00> : vector<32xf32>
    %7 = vector.multi_reduction <add>, %6, %cst_6 [1] : vector<32x16xf32> to vector<32xf32>
    %8 = vector.shape_cast %7 : vector<32xf32> to vector<32x1xf32>
    %cst_7 = arith.constant 1.600000e+01 : f32
    %9 = vector.broadcast %cst_7 : f32 to vector<32x1xf32>
    %10 = arith.divf %8, %9 : vector<32x1xf32>
    %11 = arith.mulf %6, %6 : vector<32x16xf32>
    %cst_8 = arith.constant dense<0.000000e+00> : vector<32xf32>
    %12 = vector.multi_reduction <add>, %11, %cst_8 [1] : vector<32x16xf32> to vector<32xf32>
    %13 = vector.shape_cast %12 : vector<32xf32> to vector<32x1xf32>
    %cst_9 = arith.constant 1.600000e+01 : f32
    %14 = vector.broadcast %cst_9 : f32 to vector<32x1xf32>
    %15 = arith.divf %13, %14 : vector<32x1xf32>
    %16 = arith.mulf %10, %10 : vector<32x1xf32>
    %17 = arith.subf %15, %16 : vector<32x1xf32>
    %18 = vector.broadcast %10 : vector<32x1xf32> to vector<32x16xf32>
    %19 = arith.subf %6, %18 : vector<32x16xf32>
    %cst_10 = arith.constant 9.99999974E-6 : f32
    %20 = vector.broadcast %cst_10 : f32 to vector<32x1xf32>
    %21 = arith.addf %17, %20 : vector<32x1xf32>
    %22 = math.rsqrt %21 : vector<32x1xf32>
    %23 = vector.broadcast %22 : vector<32x1xf32> to vector<32x16xf32>
    %24 = arith.mulf %19, %23 : vector<32x16xf32>
    %cst_11 = arith.constant 0.000000e+00 : f32
    %25 = vector.broadcast %cst_11 : f32 to vector<32x16xf32>
    %26 = arith.maximumf %24, %25 : vector<32x16xf32>
    %cst_12 = arith.constant 0.000000e+00 : f32
    %27 = vector.broadcast %cst_12 : f32 to vector<32x16xf32>
    %28 = arith.minimumf %24, %27 : vector<32x16xf32>
    %29 = math.exp %28 : vector<32x16xf32>
    %cst_13 = arith.constant 1.000000e+00 : f32
    %30 = vector.broadcast %cst_13 : f32 to vector<32x16xf32>
    %31 = arith.subf %29, %30 : vector<32x16xf32>
    %cst_14 = arith.constant 1.67326319 : f32
    %32 = vector.broadcast %cst_14 : f32 to vector<32x16xf32>
    %33 = arith.mulf %32, %31 : vector<32x16xf32>
    %34 = arith.addf %26, %33 : vector<32x16xf32>
    %cst_15 = arith.constant 1.05070102 : f32
    %35 = vector.broadcast %cst_15 : f32 to vector<32x16xf32>
    %36 = arith.mulf %35, %34 : vector<32x16xf32>
    %c0_16 = arith.constant 0 : index
    %c0_17 = arith.constant 0 : index
    %c0_18 = arith.constant 0 : index
    %37 = vector.load %arg4[%c0_16, %c0_17, %c0_18] : memref<1x32x16xf32, #tpu.memory_space<vmem>>, vector<1x32x16xf32>
    %38 = vector.shape_cast %37 : vector<1x32x16xf32> to vector<32x16xf32>
    %39 = vector.shape_cast %36 : vector<32x16xf32> to vector<1x32x16xf32>
    tpu.vector_store %arg4[%c0_16, %c0_17, %c0_18], %39 {strides = array<i32>} : memref<1x32x16xf32, #tpu.memory_space<vmem>>, vector<1x32x16xf32>,
    return
  }
  func.func @transform_0(%arg0: i32) -> (i32, i32, i32) {
    %c0_i32 = arith.constant 0 : i32
    %c0_i32_0 = arith.constant 0 : i32
    %c0_i32_1 = arith.constant 0 : i32
    return %arg0, %c0_i32, %c0_i32_0 : i32, i32, i32
  }
  func.func @transform_1(%arg0: i32) -> (i32, i32) {
    %c0_i32 = arith.constant 0 : i32
    %c0_i32_0 = arith.constant 0 : i32
    %c0_i32_1 = arith.constant 0 : i32
    return %c0_i32, %c0_i32_0 : i32, i32
  }
  func.func @transform_2(%arg0: i32) -> (i32, i32) {
    %c0_i32 = arith.constant 0 : i32
    %c0_i32_0 = arith.constant 0 : i32
    %c0_i32_1 = arith.constant 0 : i32
    return %c0_i32, %c0_i32_0 : i32, i32
  }
  func.func @transform_3(%arg0: i32) -> (i32, i32, i32) {
    %c0_i32 = arith.constant 0 : i32
    %c0_i32_0 = arith.constant 0 : i32
    %c0_i32_1 = arith.constant 0 : i32
    return %arg0, %c0_i32, %c0_i32_0 : i32, i32, i32
  }
}

module attributes {stable_mosaic.version = 11 : i64} {
  func.func @_conv_fused_kernel(%arg0: i32, %arg1: memref<1x288x16xf32, #tpu.memory_space<vmem>>, %arg2: memref<32x288xf32, #tpu.memory_space<vmem>>, %arg3: memref<32x1xf32, #tpu.memory_space<vmem>>, %arg4: memref<1x32x16xf32, #tpu.memory_space<vmem>>) attributes {dimension_semantics = [#tpu.dimension_semantics<parallel>], iteration_bounds = array<i64: 2>, scalar_prefetch = 0 : i64, scratch_operands = 0 : i64, tpu.core_type = #tpu.core_type<tc>, window_params = [{transform_indices = @transform_0, window_bounds = array<i64: 1, 288, 16>}, {pipeline_mode = #tpu.pipeline_mode<synchronous>, transform_indices = @transform_1, window_bounds = array<i64: 32, 288>}, {pipeline_mode = #tpu.pipeline_mode<synchronous>, transform_indices = @transform_2, window_bounds = array<i64: 32, 1>}, {transform_indices = @transform_3, window_bounds = array<i64: 1, 32, 16>}]} {
    %c0 = arith.constant 0 : index
    %c0_0 = arith.constant 0 : index
    %0 = vector.load %arg2[%c0, %c0_0] : memref<32x288xf32, #tpu.memory_space<vmem>>, vector<32x288xf32>
    %c0_1 = arith.constant 0 : index
    %c0_2 = arith.constant 0 : index
    %c0_3 = arith.constant 0 : index
    %1 = vector.load %arg1[%c0_1, %c0_2, %c0_3] : memref<1x288x16xf32, #tpu.memory_space<vmem>>, vector<1x288x16xf32>
    %2 = vector.shape_cast %1 : vector<1x288x16xf32> to vector<288x16xf32>
    %cst = arith.constant dense<0.000000e+00> : vector<32x16xf32>
    %3 = tpu.matmul %0, %2, %cst {dimension_numbers = #tpu.dot_dimension_numbers<[1], [0], [0], [1], [0, 0, 1, 1], [], []>} : vector<32x288xf32>, vector<288x16xf32>, vector<32x16xf32> -> vector<32x16xf32>
    %c0_4 = arith.constant 0 : index
    %c0_5 = arith.constant 0 : index
    %4 = vector.load %arg3[%c0_4, %c0_5] : memref<32x1xf32, #tpu.memory_space<vmem>>, vector<32x1xf32>
    %5 = vector.broadcast %4 : vector<32x1xf32> to vector<32x16xf32>
    %6 = arith.addf %3, %5 : vector<32x16xf32>
    %cst_6 = arith.constant dense<0.000000e+00> : vector<32xf32>
    %7 = vector.multi_reduction <add>, %6, %cst_6 [1] : vector<32x16xf32> to vector<32xf32>
    %8 = vector.shape_cast %7 : vector<32xf32> to vector<32x1xf32>
    %cst_7 = arith.constant 1.600000e+01 : f32
    %9 = vector.broadcast %cst_7 : f32 to vector<32x1xf32>
    %10 = arith.divf %8, %9 : vector<32x1xf32>
    %11 = arith.mulf %6, %6 : vector<32x16xf32>
    %cst_8 = arith.constant dense<0.000000e+00> : vector<32xf32>
    %12 = vector.multi_reduction <add>, %11, %cst_8 [1] : vector<32x16xf32> to vector<32xf32>
    %13 = vector.shape_cast %12 : vector<32xf32> to vector<32x1xf32>
    %cst_9 = arith.constant 1.600000e+01 : f32
    %14 = vector.broadcast %cst_9 : f32 to vector<32x1xf32>
    %15 = arith.divf %13, %14 : vector<32x1xf32>
    %16 = arith.mulf %10, %10 : vector<32x1xf32>
    %17 = arith.subf %15, %16 : vector<32x1xf32>
    %18 = vector.broadcast %10 : vector<32x1xf32> to vector<32x16xf32>
    %19 = arith.subf %6, %18 : vector<32x16xf32>
    %cst_10 = arith.constant 9.99999974E-6 : f32
    %20 = vector.broadcast %cst_10 : f32 to vector<32x1xf32>
    %21 = arith.addf %17, %20 : vector<32x1xf32>
    %22 = math.rsqrt %21 : vector<32x1xf32>
    %23 = vector.broadcast %22 : vector<32x1xf32> to vector<32x16xf32>
    %24 = arith.mulf %19, %23 : vector<32x16xf32>
    %cst_11 = arith.constant 0.000000e+00 : f32
    %25 = vector.broadcast %cst_11 : f32 to vector<32x16xf32>
    %26 = arith.maximumf %24, %25 : vector<32x16xf32>
    %c0_12 = arith.constant 0 : index
    %c0_13 = arith.constant 0 : index
    %c0_14 = arith.constant 0 : index
    %27 = vector.load %arg4[%c0_12, %c0_13, %c0_14] : memref<1x32x16xf32, #tpu.memory_space<vmem>>, vector<1x32x16xf32>
    %28 = vector.shape_cast %27 : vector<1x32x16xf32> to vector<32x16xf32>
    %29 = vector.shape_cast %26 : vector<32x16xf32> to vector<1x32x16xf32>
    tpu.vector_store %arg4[%c0_12, %c0_13, %c0_14], %29 {strides = array<i32>} : memref<1x32x16xf32, #tpu.memory_space<vmem>>, vector<1x32x16xf32>,
    return
  }
  func.func @transform_0(%arg0: i32) -> (i32, i32, i32) {
    %c0_i32 = arith.constant 0 : i32
    %c0_i32_0 = arith.constant 0 : i32
    %c0_i32_1 = arith.constant 0 : i32
    return %arg0, %c0_i32, %c0_i32_0 : i32, i32, i32
  }
  func.func @transform_1(%arg0: i32) -> (i32, i32) {
    %c0_i32 = arith.constant 0 : i32
    %c0_i32_0 = arith.constant 0 : i32
    %c0_i32_1 = arith.constant 0 : i32
    return %c0_i32, %c0_i32_0 : i32, i32
  }
  func.func @transform_2(%arg0: i32) -> (i32, i32) {
    %c0_i32 = arith.constant 0 : i32
    %c0_i32_0 = arith.constant 0 : i32
    %c0_i32_1 = arith.constant 0 : i32
    return %c0_i32, %c0_i32_0 : i32, i32
  }
  func.func @transform_3(%arg0: i32) -> (i32, i32, i32) {
    %c0_i32 = arith.constant 0 : i32
    %c0_i32_0 = arith.constant 0 : i32
    %c0_i32_1 = arith.constant 0 : i32
    return %arg0, %c0_i32, %c0_i32_0 : i32, i32, i32
  }
}

module attributes {stable_mosaic.version = 11 : i64} {
  func.func @_conv_fused_res_kernel(%arg0: i32, %arg1: memref<1x288x16xf32, #tpu.memory_space<vmem>>, %arg2: memref<1x32x16xf32, #tpu.memory_space<vmem>>, %arg3: memref<32x288xf32, #tpu.memory_space<vmem>>, %arg4: memref<32x1xf32, #tpu.memory_space<vmem>>, %arg5: memref<1x32x16xf32, #tpu.memory_space<vmem>>) attributes {dimension_semantics = [#tpu.dimension_semantics<parallel>], iteration_bounds = array<i64: 2>, scalar_prefetch = 0 : i64, scratch_operands = 0 : i64, tpu.core_type = #tpu.core_type<tc>, window_params = [{transform_indices = @transform_0, window_bounds = array<i64: 1, 288, 16>}, {transform_indices = @transform_1, window_bounds = array<i64: 1, 32, 16>}, {pipeline_mode = #tpu.pipeline_mode<synchronous>, transform_indices = @transform_2, window_bounds = array<i64: 32, 288>}, {pipeline_mode = #tpu.pipeline_mode<synchronous>, transform_indices = @transform_3, window_bounds = array<i64: 32, 1>}, {transform_indices = @transform_4, window_bounds = array<i64: 1, 32, 16>}]} {
    %c0 = arith.constant 0 : index
    %c0_0 = arith.constant 0 : index
    %0 = vector.load %arg3[%c0, %c0_0] : memref<32x288xf32, #tpu.memory_space<vmem>>, vector<32x288xf32>
    %c0_1 = arith.constant 0 : index
    %c0_2 = arith.constant 0 : index
    %c0_3 = arith.constant 0 : index
    %1 = vector.load %arg1[%c0_1, %c0_2, %c0_3] : memref<1x288x16xf32, #tpu.memory_space<vmem>>, vector<1x288x16xf32>
    %2 = vector.shape_cast %1 : vector<1x288x16xf32> to vector<288x16xf32>
    %cst = arith.constant dense<0.000000e+00> : vector<32x16xf32>
    %3 = tpu.matmul %0, %2, %cst {dimension_numbers = #tpu.dot_dimension_numbers<[1], [0], [0], [1], [0, 0, 1, 1], [], []>} : vector<32x288xf32>, vector<288x16xf32>, vector<32x16xf32> -> vector<32x16xf32>
    %c0_4 = arith.constant 0 : index
    %c0_5 = arith.constant 0 : index
    %4 = vector.load %arg4[%c0_4, %c0_5] : memref<32x1xf32, #tpu.memory_space<vmem>>, vector<32x1xf32>
    %5 = vector.broadcast %4 : vector<32x1xf32> to vector<32x16xf32>
    %6 = arith.addf %3, %5 : vector<32x16xf32>
    %cst_6 = arith.constant dense<0.000000e+00> : vector<32xf32>
    %7 = vector.multi_reduction <add>, %6, %cst_6 [1] : vector<32x16xf32> to vector<32xf32>
    %8 = vector.shape_cast %7 : vector<32xf32> to vector<32x1xf32>
    %cst_7 = arith.constant 1.600000e+01 : f32
    %9 = vector.broadcast %cst_7 : f32 to vector<32x1xf32>
    %10 = arith.divf %8, %9 : vector<32x1xf32>
    %11 = arith.mulf %6, %6 : vector<32x16xf32>
    %cst_8 = arith.constant dense<0.000000e+00> : vector<32xf32>
    %12 = vector.multi_reduction <add>, %11, %cst_8 [1] : vector<32x16xf32> to vector<32xf32>
    %13 = vector.shape_cast %12 : vector<32xf32> to vector<32x1xf32>
    %cst_9 = arith.constant 1.600000e+01 : f32
    %14 = vector.broadcast %cst_9 : f32 to vector<32x1xf32>
    %15 = arith.divf %13, %14 : vector<32x1xf32>
    %16 = arith.mulf %10, %10 : vector<32x1xf32>
    %17 = arith.subf %15, %16 : vector<32x1xf32>
    %18 = vector.broadcast %10 : vector<32x1xf32> to vector<32x16xf32>
    %19 = arith.subf %6, %18 : vector<32x16xf32>
    %cst_10 = arith.constant 9.99999974E-6 : f32
    %20 = vector.broadcast %cst_10 : f32 to vector<32x1xf32>
    %21 = arith.addf %17, %20 : vector<32x1xf32>
    %22 = math.rsqrt %21 : vector<32x1xf32>
    %23 = vector.broadcast %22 : vector<32x1xf32> to vector<32x16xf32>
    %24 = arith.mulf %19, %23 : vector<32x16xf32>
    %c0_11 = arith.constant 0 : index
    %c0_12 = arith.constant 0 : index
    %c0_13 = arith.constant 0 : index
    %25 = vector.load %arg2[%c0_11, %c0_12, %c0_13] : memref<1x32x16xf32, #tpu.memory_space<vmem>>, vector<1x32x16xf32>
    %26 = vector.shape_cast %25 : vector<1x32x16xf32> to vector<32x16xf32>
    %27 = arith.addf %24, %26 : vector<32x16xf32>
    %c0_14 = arith.constant 0 : index
    %c0_15 = arith.constant 0 : index
    %c0_16 = arith.constant 0 : index
    %28 = vector.load %arg5[%c0_14, %c0_15, %c0_16] : memref<1x32x16xf32, #tpu.memory_space<vmem>>, vector<1x32x16xf32>
    %29 = vector.shape_cast %28 : vector<1x32x16xf32> to vector<32x16xf32>
    %30 = vector.shape_cast %27 : vector<32x16xf32> to vector<1x32x16xf32>
    tpu.vector_store %arg5[%c0_14, %c0_15, %c0_16], %30 {strides = array<i32>} : memref<1x32x16xf32, #tpu.memory_space<vmem>>, vector<1x32x16xf32>,
    return
  }
  func.func @transform_0(%arg0: i32) -> (i32, i32, i32) {
    %c0_i32 = arith.constant 0 : i32
    %c0_i32_0 = arith.constant 0 : i32
    %c0_i32_1 = arith.constant 0 : i32
    return %arg0, %c0_i32, %c0_i32_0 : i32, i32, i32
  }
  func.func @transform_1(%arg0: i32) -> (i32, i32, i32) {
    %c0_i32 = arith.constant 0 : i32
    %c0_i32_0 = arith.constant 0 : i32
    %c0_i32_1 = arith.constant 0 : i32
    return %arg0, %c0_i32, %c0_i32_0 : i32, i32, i32
  }
  func.func @transform_2(%arg0: i32) -> (i32, i32) {
    %c0_i32 = arith.constant 0 : i32
    %c0_i32_0 = arith.constant 0 : i32
    %c0_i32_1 = arith.constant 0 : i32
    return %c0_i32, %c0_i32_0 : i32, i32
  }
  func.func @transform_3(%arg0: i32) -> (i32, i32) {
    %c0_i32 = arith.constant 0 : i32
    %c0_i32_0 = arith.constant 0 : i32
    %c0_i32_1 = arith.constant 0 : i32
    return %c0_i32, %c0_i32_0 : i32, i32
  }
  func.func @transform_4(%arg0: i32) -> (i32, i32, i32) {
    %c0_i32 = arith.constant 0 : i32
    %c0_i32_0 = arith.constant 0 : i32
    %c0_i32_1 = arith.constant 0 : i32
    return %arg0, %c0_i32, %c0_i32_0 : i32, i32, i32
  }
}

module attributes {stable_mosaic.version = 11 : i64} {
  func.func @_upconv_fused_kernel(%arg0: i32, %arg1: memref<1x128x16xf32, #tpu.memory_space<vmem>>, %arg2: memref<4x16x128xf32, #tpu.memory_space<vmem>>, %arg3: memref<16x1xf32, #tpu.memory_space<vmem>>, %arg4: memref<1x4x16x16xf32, #tpu.memory_space<vmem>>) attributes {dimension_semantics = [#tpu.dimension_semantics<parallel>], iteration_bounds = array<i64: 2>, scalar_prefetch = 0 : i64, scratch_operands = 0 : i64, tpu.core_type = #tpu.core_type<tc>, window_params = [{transform_indices = @transform_0, window_bounds = array<i64: 1, 128, 16>}, {pipeline_mode = #tpu.pipeline_mode<synchronous>, transform_indices = @transform_1, window_bounds = array<i64: 4, 16, 128>}, {pipeline_mode = #tpu.pipeline_mode<synchronous>, transform_indices = @transform_2, window_bounds = array<i64: 16, 1>}, {transform_indices = @transform_3, window_bounds = array<i64: 1, 4, 16, 16>}]} {
    %c0 = arith.constant 0 : index
    %c0_0 = arith.constant 0 : index
    %c0_1 = arith.constant 0 : index
    %0 = vector.load %arg1[%c0, %c0_0, %c0_1] : memref<1x128x16xf32, #tpu.memory_space<vmem>>, vector<1x128x16xf32>
    %1 = vector.shape_cast %0 : vector<1x128x16xf32> to vector<128x16xf32>
    %c0_2 = arith.constant 0 : index
    %c0_3 = arith.constant 0 : index
    %2 = vector.load %arg3[%c0_2, %c0_3] : memref<16x1xf32, #tpu.memory_space<vmem>>, vector<16x1xf32>
    %c0_4 = arith.constant 0 : index
    %c0_5 = arith.constant 0 : index
    %c0_6 = arith.constant 0 : index
    %3 = vector.load %arg2[%c0_4, %c0_5, %c0_6] : memref<4x16x128xf32, #tpu.memory_space<vmem>>, vector<1x16x128xf32>
    %4 = vector.shape_cast %3 : vector<1x16x128xf32> to vector<16x128xf32>
    %cst = arith.constant dense<0.000000e+00> : vector<16x16xf32>
    %5 = tpu.matmul %4, %1, %cst {dimension_numbers = #tpu.dot_dimension_numbers<[1], [0], [0], [1], [0, 0, 1, 1], [], []>} : vector<16x128xf32>, vector<128x16xf32>, vector<16x16xf32> -> vector<16x16xf32>
    %6 = vector.broadcast %2 : vector<16x1xf32> to vector<16x16xf32>
    %7 = arith.addf %5, %6 : vector<16x16xf32>
    %c1 = arith.constant 1 : index
    %c0_7 = arith.constant 0 : index
    %c0_8 = arith.constant 0 : index
    %8 = vector.load %arg2[%c1, %c0_7, %c0_8] : memref<4x16x128xf32, #tpu.memory_space<vmem>>, vector<1x16x128xf32>
    %9 = vector.shape_cast %8 : vector<1x16x128xf32> to vector<16x128xf32>
    %cst_9 = arith.constant dense<0.000000e+00> : vector<16x16xf32>
    %10 = tpu.matmul %9, %1, %cst_9 {dimension_numbers = #tpu.dot_dimension_numbers<[1], [0], [0], [1], [0, 0, 1, 1], [], []>} : vector<16x128xf32>, vector<128x16xf32>, vector<16x16xf32> -> vector<16x16xf32>
    %11 = vector.broadcast %2 : vector<16x1xf32> to vector<16x16xf32>
    %12 = arith.addf %10, %11 : vector<16x16xf32>
    %c2 = arith.constant 2 : index
    %c0_10 = arith.constant 0 : index
    %c0_11 = arith.constant 0 : index
    %13 = vector.load %arg2[%c2, %c0_10, %c0_11] : memref<4x16x128xf32, #tpu.memory_space<vmem>>, vector<1x16x128xf32>
    %14 = vector.shape_cast %13 : vector<1x16x128xf32> to vector<16x128xf32>
    %cst_12 = arith.constant dense<0.000000e+00> : vector<16x16xf32>
    %15 = tpu.matmul %14, %1, %cst_12 {dimension_numbers = #tpu.dot_dimension_numbers<[1], [0], [0], [1], [0, 0, 1, 1], [], []>} : vector<16x128xf32>, vector<128x16xf32>, vector<16x16xf32> -> vector<16x16xf32>
    %16 = vector.broadcast %2 : vector<16x1xf32> to vector<16x16xf32>
    %17 = arith.addf %15, %16 : vector<16x16xf32>
    %c3 = arith.constant 3 : index
    %c0_13 = arith.constant 0 : index
    %c0_14 = arith.constant 0 : index
    %18 = vector.load %arg2[%c3, %c0_13, %c0_14] : memref<4x16x128xf32, #tpu.memory_space<vmem>>, vector<1x16x128xf32>
    %19 = vector.shape_cast %18 : vector<1x16x128xf32> to vector<16x128xf32>
    %cst_15 = arith.constant dense<0.000000e+00> : vector<16x16xf32>
    %20 = tpu.matmul %19, %1, %cst_15 {dimension_numbers = #tpu.dot_dimension_numbers<[1], [0], [0], [1], [0, 0, 1, 1], [], []>} : vector<16x128xf32>, vector<128x16xf32>, vector<16x16xf32> -> vector<16x16xf32>
    %21 = vector.broadcast %2 : vector<16x1xf32> to vector<16x16xf32>
    %22 = arith.addf %20, %21 : vector<16x16xf32>
    %cst_16 = arith.constant dense<0.000000e+00> : vector<16xf32>
    %23 = vector.multi_reduction <add>, %7, %cst_16 [1] : vector<16x16xf32> to vector<16xf32>
    %24 = vector.shape_cast %23 : vector<16xf32> to vector<16x1xf32>
    %cst_17 = arith.constant 0.000000e+00 : f32
    %25 = vector.broadcast %cst_17 : f32 to vector<16x1xf32>
    %26 = arith.addf %25, %24 : vector<16x1xf32>
    %cst_18 = arith.constant dense<0.000000e+00> : vector<16xf32>
    %27 = vector.multi_reduction <add>, %12, %cst_18 [1] : vector<16x16xf32> to vector<16xf32>
    %28 = vector.shape_cast %27 : vector<16xf32> to vector<16x1xf32>
    %29 = arith.addf %26, %28 : vector<16x1xf32>
    %cst_19 = arith.constant dense<0.000000e+00> : vector<16xf32>
    %30 = vector.multi_reduction <add>, %17, %cst_19 [1] : vector<16x16xf32> to vector<16xf32>
    %31 = vector.shape_cast %30 : vector<16xf32> to vector<16x1xf32>
    %32 = arith.addf %29, %31 : vector<16x1xf32>
    %cst_20 = arith.constant dense<0.000000e+00> : vector<16xf32>
    %33 = vector.multi_reduction <add>, %22, %cst_20 [1] : vector<16x16xf32> to vector<16xf32>
    %34 = vector.shape_cast %33 : vector<16xf32> to vector<16x1xf32>
    %35 = arith.addf %32, %34 : vector<16x1xf32>
    %36 = arith.mulf %7, %7 : vector<16x16xf32>
    %cst_21 = arith.constant dense<0.000000e+00> : vector<16xf32>
    %37 = vector.multi_reduction <add>, %36, %cst_21 [1] : vector<16x16xf32> to vector<16xf32>
    %38 = vector.shape_cast %37 : vector<16xf32> to vector<16x1xf32>
    %cst_22 = arith.constant 0.000000e+00 : f32
    %39 = vector.broadcast %cst_22 : f32 to vector<16x1xf32>
    %40 = arith.addf %39, %38 : vector<16x1xf32>
    %41 = arith.mulf %12, %12 : vector<16x16xf32>
    %cst_23 = arith.constant dense<0.000000e+00> : vector<16xf32>
    %42 = vector.multi_reduction <add>, %41, %cst_23 [1] : vector<16x16xf32> to vector<16xf32>
    %43 = vector.shape_cast %42 : vector<16xf32> to vector<16x1xf32>
    %44 = arith.addf %40, %43 : vector<16x1xf32>
    %45 = arith.mulf %17, %17 : vector<16x16xf32>
    %cst_24 = arith.constant dense<0.000000e+00> : vector<16xf32>
    %46 = vector.multi_reduction <add>, %45, %cst_24 [1] : vector<16x16xf32> to vector<16xf32>
    %47 = vector.shape_cast %46 : vector<16xf32> to vector<16x1xf32>
    %48 = arith.addf %44, %47 : vector<16x1xf32>
    %49 = arith.mulf %22, %22 : vector<16x16xf32>
    %cst_25 = arith.constant dense<0.000000e+00> : vector<16xf32>
    %50 = vector.multi_reduction <add>, %49, %cst_25 [1] : vector<16x16xf32> to vector<16xf32>
    %51 = vector.shape_cast %50 : vector<16xf32> to vector<16x1xf32>
    %52 = arith.addf %48, %51 : vector<16x1xf32>
    %cst_26 = arith.constant 6.400000e+01 : f32
    %53 = vector.broadcast %cst_26 : f32 to vector<16x1xf32>
    %54 = arith.divf %35, %53 : vector<16x1xf32>
    %cst_27 = arith.constant 6.400000e+01 : f32
    %55 = vector.broadcast %cst_27 : f32 to vector<16x1xf32>
    %56 = arith.divf %52, %55 : vector<16x1xf32>
    %57 = arith.mulf %54, %54 : vector<16x1xf32>
    %58 = arith.subf %56, %57 : vector<16x1xf32>
    %cst_28 = arith.constant 9.99999974E-6 : f32
    %59 = vector.broadcast %cst_28 : f32 to vector<16x1xf32>
    %60 = arith.addf %58, %59 : vector<16x1xf32>
    %61 = math.rsqrt %60 : vector<16x1xf32>
    %62 = vector.broadcast %54 : vector<16x1xf32> to vector<16x16xf32>
    %63 = arith.subf %7, %62 : vector<16x16xf32>
    %64 = vector.broadcast %61 : vector<16x1xf32> to vector<16x16xf32>
    %65 = arith.mulf %63, %64 : vector<16x16xf32>
    %cst_29 = arith.constant 0.000000e+00 : f32
    %66 = vector.broadcast %cst_29 : f32 to vector<16x16xf32>
    %67 = arith.maximumf %65, %66 : vector<16x16xf32>
    %cst_30 = arith.constant 0.000000e+00 : f32
    %68 = vector.broadcast %cst_30 : f32 to vector<16x16xf32>
    %69 = arith.minimumf %65, %68 : vector<16x16xf32>
    %70 = math.exp %69 : vector<16x16xf32>
    %cst_31 = arith.constant 1.000000e+00 : f32
    %71 = vector.broadcast %cst_31 : f32 to vector<16x16xf32>
    %72 = arith.subf %70, %71 : vector<16x16xf32>
    %cst_32 = arith.constant 1.67326319 : f32
    %73 = vector.broadcast %cst_32 : f32 to vector<16x16xf32>
    %74 = arith.mulf %73, %72 : vector<16x16xf32>
    %75 = arith.addf %67, %74 : vector<16x16xf32>
    %cst_33 = arith.constant 1.05070102 : f32
    %76 = vector.broadcast %cst_33 : f32 to vector<16x16xf32>
    %77 = arith.mulf %76, %75 : vector<16x16xf32>
    %c0_34 = arith.constant 0 : index
    %c0_35 = arith.constant 0 : index
    %c0_36 = arith.constant 0 : index
    %c0_37 = arith.constant 0 : index
    %78 = vector.load %arg4[%c0_34, %c0_35, %c0_36, %c0_37] : memref<1x4x16x16xf32, #tpu.memory_space<vmem>>, vector<1x1x16x16xf32>
    %79 = vector.shape_cast %78 : vector<1x1x16x16xf32> to vector<16x16xf32>
    %80 = vector.shape_cast %77 : vector<16x16xf32> to vector<1x1x16x16xf32>
    tpu.vector_store %arg4[%c0_34, %c0_35, %c0_36, %c0_37], %80 {strides = array<i32>} : memref<1x4x16x16xf32, #tpu.memory_space<vmem>>, vector<1x1x16x16xf32>,
    %81 = vector.broadcast %54 : vector<16x1xf32> to vector<16x16xf32>
    %82 = arith.subf %12, %81 : vector<16x16xf32>
    %83 = vector.broadcast %61 : vector<16x1xf32> to vector<16x16xf32>
    %84 = arith.mulf %82, %83 : vector<16x16xf32>
    %cst_38 = arith.constant 0.000000e+00 : f32
    %85 = vector.broadcast %cst_38 : f32 to vector<16x16xf32>
    %86 = arith.maximumf %84, %85 : vector<16x16xf32>
    %cst_39 = arith.constant 0.000000e+00 : f32
    %87 = vector.broadcast %cst_39 : f32 to vector<16x16xf32>
    %88 = arith.minimumf %84, %87 : vector<16x16xf32>
    %89 = math.exp %88 : vector<16x16xf32>
    %cst_40 = arith.constant 1.000000e+00 : f32
    %90 = vector.broadcast %cst_40 : f32 to vector<16x16xf32>
    %91 = arith.subf %89, %90 : vector<16x16xf32>
    %cst_41 = arith.constant 1.67326319 : f32
    %92 = vector.broadcast %cst_41 : f32 to vector<16x16xf32>
    %93 = arith.mulf %92, %91 : vector<16x16xf32>
    %94 = arith.addf %86, %93 : vector<16x16xf32>
    %cst_42 = arith.constant 1.05070102 : f32
    %95 = vector.broadcast %cst_42 : f32 to vector<16x16xf32>
    %96 = arith.mulf %95, %94 : vector<16x16xf32>
    %c0_43 = arith.constant 0 : index
    %c1_44 = arith.constant 1 : index
    %c0_45 = arith.constant 0 : index
    %c0_46 = arith.constant 0 : index
    %97 = vector.load %arg4[%c0_43, %c1_44, %c0_45, %c0_46] : memref<1x4x16x16xf32, #tpu.memory_space<vmem>>, vector<1x1x16x16xf32>
    %98 = vector.shape_cast %97 : vector<1x1x16x16xf32> to vector<16x16xf32>
    %99 = vector.shape_cast %96 : vector<16x16xf32> to vector<1x1x16x16xf32>
    tpu.vector_store %arg4[%c0_43, %c1_44, %c0_45, %c0_46], %99 {strides = array<i32>} : memref<1x4x16x16xf32, #tpu.memory_space<vmem>>, vector<1x1x16x16xf32>,
    %100 = vector.broadcast %54 : vector<16x1xf32> to vector<16x16xf32>
    %101 = arith.subf %17, %100 : vector<16x16xf32>
    %102 = vector.broadcast %61 : vector<16x1xf32> to vector<16x16xf32>
    %103 = arith.mulf %101, %102 : vector<16x16xf32>
    %cst_47 = arith.constant 0.000000e+00 : f32
    %104 = vector.broadcast %cst_47 : f32 to vector<16x16xf32>
    %105 = arith.maximumf %103, %104 : vector<16x16xf32>
    %cst_48 = arith.constant 0.000000e+00 : f32
    %106 = vector.broadcast %cst_48 : f32 to vector<16x16xf32>
    %107 = arith.minimumf %103, %106 : vector<16x16xf32>
    %108 = math.exp %107 : vector<16x16xf32>
    %cst_49 = arith.constant 1.000000e+00 : f32
    %109 = vector.broadcast %cst_49 : f32 to vector<16x16xf32>
    %110 = arith.subf %108, %109 : vector<16x16xf32>
    %cst_50 = arith.constant 1.67326319 : f32
    %111 = vector.broadcast %cst_50 : f32 to vector<16x16xf32>
    %112 = arith.mulf %111, %110 : vector<16x16xf32>
    %113 = arith.addf %105, %112 : vector<16x16xf32>
    %cst_51 = arith.constant 1.05070102 : f32
    %114 = vector.broadcast %cst_51 : f32 to vector<16x16xf32>
    %115 = arith.mulf %114, %113 : vector<16x16xf32>
    %c0_52 = arith.constant 0 : index
    %c2_53 = arith.constant 2 : index
    %c0_54 = arith.constant 0 : index
    %c0_55 = arith.constant 0 : index
    %116 = vector.load %arg4[%c0_52, %c2_53, %c0_54, %c0_55] : memref<1x4x16x16xf32, #tpu.memory_space<vmem>>, vector<1x1x16x16xf32>
    %117 = vector.shape_cast %116 : vector<1x1x16x16xf32> to vector<16x16xf32>
    %118 = vector.shape_cast %115 : vector<16x16xf32> to vector<1x1x16x16xf32>
    tpu.vector_store %arg4[%c0_52, %c2_53, %c0_54, %c0_55], %118 {strides = array<i32>} : memref<1x4x16x16xf32, #tpu.memory_space<vmem>>, vector<1x1x16x16xf32>,
    %119 = vector.broadcast %54 : vector<16x1xf32> to vector<16x16xf32>
    %120 = arith.subf %22, %119 : vector<16x16xf32>
    %121 = vector.broadcast %61 : vector<16x1xf32> to vector<16x16xf32>
    %122 = arith.mulf %120, %121 : vector<16x16xf32>
    %cst_56 = arith.constant 0.000000e+00 : f32
    %123 = vector.broadcast %cst_56 : f32 to vector<16x16xf32>
    %124 = arith.maximumf %122, %123 : vector<16x16xf32>
    %cst_57 = arith.constant 0.000000e+00 : f32
    %125 = vector.broadcast %cst_57 : f32 to vector<16x16xf32>
    %126 = arith.minimumf %122, %125 : vector<16x16xf32>
    %127 = math.exp %126 : vector<16x16xf32>
    %cst_58 = arith.constant 1.000000e+00 : f32
    %128 = vector.broadcast %cst_58 : f32 to vector<16x16xf32>
    %129 = arith.subf %127, %128 : vector<16x16xf32>
    %cst_59 = arith.constant 1.67326319 : f32
    %130 = vector.broadcast %cst_59 : f32 to vector<16x16xf32>
    %131 = arith.mulf %130, %129 : vector<16x16xf32>
    %132 = arith.addf %124, %131 : vector<16x16xf32>
    %cst_60 = arith.constant 1.05070102 : f32
    %133 = vector.broadcast %cst_60 : f32 to vector<16x16xf32>
    %134 = arith.mulf %133, %132 : vector<16x16xf32>
    %c0_61 = arith.constant 0 : index
    %c3_62 = arith.constant 3 : index
    %c0_63 = arith.constant 0 : index
    %c0_64 = arith.constant 0 : index
    %135 = vector.load %arg4[%c0_61, %c3_62, %c0_63, %c0_64] : memref<1x4x16x16xf32, #tpu.memory_space<vmem>>, vector<1x1x16x16xf32>
    %136 = vector.shape_cast %135 : vector<1x1x16x16xf32> to vector<16x16xf32>
    %137 = vector.shape_cast %134 : vector<16x16xf32> to vector<1x1x16x16xf32>
    tpu.vector_store %arg4[%c0_61, %c3_62, %c0_63, %c0_64], %137 {strides = array<i32>} : memref<1x4x16x16xf32, #tpu.memory_space<vmem>>, vector<1x1x16x16xf32>,
    return
  }
  func.func @transform_0(%arg0: i32) -> (i32, i32, i32) {
    %c0_i32 = arith.constant 0 : i32
    %c0_i32_0 = arith.constant 0 : i32
    %c0_i32_1 = arith.constant 0 : i32
    return %arg0, %c0_i32, %c0_i32_0 : i32, i32, i32
  }
  func.func @transform_1(%arg0: i32) -> (i32, i32, i32) {
    %c0_i32 = arith.constant 0 : i32
    %c0_i32_0 = arith.constant 0 : i32
    %c0_i32_1 = arith.constant 0 : i32
    %c0_i32_2 = arith.constant 0 : i32
    return %c0_i32, %c0_i32_0, %c0_i32_1 : i32, i32, i32
  }
  func.func @transform_2(%arg0: i32) -> (i32, i32) {
    %c0_i32 = arith.constant 0 : i32
    %c0_i32_0 = arith.constant 0 : i32
    %c0_i32_1 = arith.constant 0 : i32
    return %c0_i32, %c0_i32_0 : i32, i32
  }
  func.func @transform_3(%arg0: i32) -> (i32, i32, i32, i32) {
    %c0_i32 = arith.constant 0 : i32
    %c0_i32_0 = arith.constant 0 : i32
    %c0_i32_1 = arith.constant 0 : i32
    %c0_i32_2 = arith.constant 0 : i32
    return %arg0, %c0_i32, %c0_i32_0, %c0_i32_1 : i32, i32, i32, i32
  }
}

module attributes {stable_mosaic.version = 11 : i64} {
  func.func @_upconv_fused_kernel(%arg0: i32, %arg1: memref<1x64x64xf32, #tpu.memory_space<vmem>>, %arg2: memref<4x8x64xf32, #tpu.memory_space<vmem>>, %arg3: memref<8x1xf32, #tpu.memory_space<vmem>>, %arg4: memref<1x4x8x64xf32, #tpu.memory_space<vmem>>) attributes {dimension_semantics = [#tpu.dimension_semantics<parallel>], iteration_bounds = array<i64: 2>, scalar_prefetch = 0 : i64, scratch_operands = 0 : i64, tpu.core_type = #tpu.core_type<tc>, window_params = [{transform_indices = @transform_0, window_bounds = array<i64: 1, 64, 64>}, {pipeline_mode = #tpu.pipeline_mode<synchronous>, transform_indices = @transform_1, window_bounds = array<i64: 4, 8, 64>}, {pipeline_mode = #tpu.pipeline_mode<synchronous>, transform_indices = @transform_2, window_bounds = array<i64: 8, 1>}, {transform_indices = @transform_3, window_bounds = array<i64: 1, 4, 8, 64>}]} {
    %c0 = arith.constant 0 : index
    %c0_0 = arith.constant 0 : index
    %c0_1 = arith.constant 0 : index
    %0 = vector.load %arg1[%c0, %c0_0, %c0_1] : memref<1x64x64xf32, #tpu.memory_space<vmem>>, vector<1x64x64xf32>
    %1 = vector.shape_cast %0 : vector<1x64x64xf32> to vector<64x64xf32>
    %c0_2 = arith.constant 0 : index
    %c0_3 = arith.constant 0 : index
    %2 = vector.load %arg3[%c0_2, %c0_3] : memref<8x1xf32, #tpu.memory_space<vmem>>, vector<8x1xf32>
    %c0_4 = arith.constant 0 : index
    %c0_5 = arith.constant 0 : index
    %c0_6 = arith.constant 0 : index
    %3 = vector.load %arg2[%c0_4, %c0_5, %c0_6] : memref<4x8x64xf32, #tpu.memory_space<vmem>>, vector<1x8x64xf32>
    %4 = vector.shape_cast %3 : vector<1x8x64xf32> to vector<8x64xf32>
    %cst = arith.constant dense<0.000000e+00> : vector<8x64xf32>
    %5 = tpu.matmul %4, %1, %cst {dimension_numbers = #tpu.dot_dimension_numbers<[1], [0], [0], [1], [0, 0, 1, 1], [], []>} : vector<8x64xf32>, vector<64x64xf32>, vector<8x64xf32> -> vector<8x64xf32>
    %6 = vector.broadcast %2 : vector<8x1xf32> to vector<8x64xf32>
    %7 = arith.addf %5, %6 : vector<8x64xf32>
    %c1 = arith.constant 1 : index
    %c0_7 = arith.constant 0 : index
    %c0_8 = arith.constant 0 : index
    %8 = vector.load %arg2[%c1, %c0_7, %c0_8] : memref<4x8x64xf32, #tpu.memory_space<vmem>>, vector<1x8x64xf32>
    %9 = vector.shape_cast %8 : vector<1x8x64xf32> to vector<8x64xf32>
    %cst_9 = arith.constant dense<0.000000e+00> : vector<8x64xf32>
    %10 = tpu.matmul %9, %1, %cst_9 {dimension_numbers = #tpu.dot_dimension_numbers<[1], [0], [0], [1], [0, 0, 1, 1], [], []>} : vector<8x64xf32>, vector<64x64xf32>, vector<8x64xf32> -> vector<8x64xf32>
    %11 = vector.broadcast %2 : vector<8x1xf32> to vector<8x64xf32>
    %12 = arith.addf %10, %11 : vector<8x64xf32>
    %c2 = arith.constant 2 : index
    %c0_10 = arith.constant 0 : index
    %c0_11 = arith.constant 0 : index
    %13 = vector.load %arg2[%c2, %c0_10, %c0_11] : memref<4x8x64xf32, #tpu.memory_space<vmem>>, vector<1x8x64xf32>
    %14 = vector.shape_cast %13 : vector<1x8x64xf32> to vector<8x64xf32>
    %cst_12 = arith.constant dense<0.000000e+00> : vector<8x64xf32>
    %15 = tpu.matmul %14, %1, %cst_12 {dimension_numbers = #tpu.dot_dimension_numbers<[1], [0], [0], [1], [0, 0, 1, 1], [], []>} : vector<8x64xf32>, vector<64x64xf32>, vector<8x64xf32> -> vector<8x64xf32>
    %16 = vector.broadcast %2 : vector<8x1xf32> to vector<8x64xf32>
    %17 = arith.addf %15, %16 : vector<8x64xf32>
    %c3 = arith.constant 3 : index
    %c0_13 = arith.constant 0 : index
    %c0_14 = arith.constant 0 : index
    %18 = vector.load %arg2[%c3, %c0_13, %c0_14] : memref<4x8x64xf32, #tpu.memory_space<vmem>>, vector<1x8x64xf32>
    %19 = vector.shape_cast %18 : vector<1x8x64xf32> to vector<8x64xf32>
    %cst_15 = arith.constant dense<0.000000e+00> : vector<8x64xf32>
    %20 = tpu.matmul %19, %1, %cst_15 {dimension_numbers = #tpu.dot_dimension_numbers<[1], [0], [0], [1], [0, 0, 1, 1], [], []>} : vector<8x64xf32>, vector<64x64xf32>, vector<8x64xf32> -> vector<8x64xf32>
    %21 = vector.broadcast %2 : vector<8x1xf32> to vector<8x64xf32>
    %22 = arith.addf %20, %21 : vector<8x64xf32>
    %cst_16 = arith.constant dense<0.000000e+00> : vector<8xf32>
    %23 = vector.multi_reduction <add>, %7, %cst_16 [1] : vector<8x64xf32> to vector<8xf32>
    %24 = vector.shape_cast %23 : vector<8xf32> to vector<8x1xf32>
    %cst_17 = arith.constant 0.000000e+00 : f32
    %25 = vector.broadcast %cst_17 : f32 to vector<8x1xf32>
    %26 = arith.addf %25, %24 : vector<8x1xf32>
    %cst_18 = arith.constant dense<0.000000e+00> : vector<8xf32>
    %27 = vector.multi_reduction <add>, %12, %cst_18 [1] : vector<8x64xf32> to vector<8xf32>
    %28 = vector.shape_cast %27 : vector<8xf32> to vector<8x1xf32>
    %29 = arith.addf %26, %28 : vector<8x1xf32>
    %cst_19 = arith.constant dense<0.000000e+00> : vector<8xf32>
    %30 = vector.multi_reduction <add>, %17, %cst_19 [1] : vector<8x64xf32> to vector<8xf32>
    %31 = vector.shape_cast %30 : vector<8xf32> to vector<8x1xf32>
    %32 = arith.addf %29, %31 : vector<8x1xf32>
    %cst_20 = arith.constant dense<0.000000e+00> : vector<8xf32>
    %33 = vector.multi_reduction <add>, %22, %cst_20 [1] : vector<8x64xf32> to vector<8xf32>
    %34 = vector.shape_cast %33 : vector<8xf32> to vector<8x1xf32>
    %35 = arith.addf %32, %34 : vector<8x1xf32>
    %36 = arith.mulf %7, %7 : vector<8x64xf32>
    %cst_21 = arith.constant dense<0.000000e+00> : vector<8xf32>
    %37 = vector.multi_reduction <add>, %36, %cst_21 [1] : vector<8x64xf32> to vector<8xf32>
    %38 = vector.shape_cast %37 : vector<8xf32> to vector<8x1xf32>
    %cst_22 = arith.constant 0.000000e+00 : f32
    %39 = vector.broadcast %cst_22 : f32 to vector<8x1xf32>
    %40 = arith.addf %39, %38 : vector<8x1xf32>
    %41 = arith.mulf %12, %12 : vector<8x64xf32>
    %cst_23 = arith.constant dense<0.000000e+00> : vector<8xf32>
    %42 = vector.multi_reduction <add>, %41, %cst_23 [1] : vector<8x64xf32> to vector<8xf32>
    %43 = vector.shape_cast %42 : vector<8xf32> to vector<8x1xf32>
    %44 = arith.addf %40, %43 : vector<8x1xf32>
    %45 = arith.mulf %17, %17 : vector<8x64xf32>
    %cst_24 = arith.constant dense<0.000000e+00> : vector<8xf32>
    %46 = vector.multi_reduction <add>, %45, %cst_24 [1] : vector<8x64xf32> to vector<8xf32>
    %47 = vector.shape_cast %46 : vector<8xf32> to vector<8x1xf32>
    %48 = arith.addf %44, %47 : vector<8x1xf32>
    %49 = arith.mulf %22, %22 : vector<8x64xf32>
    %cst_25 = arith.constant dense<0.000000e+00> : vector<8xf32>
    %50 = vector.multi_reduction <add>, %49, %cst_25 [1] : vector<8x64xf32> to vector<8xf32>
    %51 = vector.shape_cast %50 : vector<8xf32> to vector<8x1xf32>
    %52 = arith.addf %48, %51 : vector<8x1xf32>
    %cst_26 = arith.constant 2.560000e+02 : f32
    %53 = vector.broadcast %cst_26 : f32 to vector<8x1xf32>
    %54 = arith.divf %35, %53 : vector<8x1xf32>
    %cst_27 = arith.constant 2.560000e+02 : f32
    %55 = vector.broadcast %cst_27 : f32 to vector<8x1xf32>
    %56 = arith.divf %52, %55 : vector<8x1xf32>
    %57 = arith.mulf %54, %54 : vector<8x1xf32>
    %58 = arith.subf %56, %57 : vector<8x1xf32>
    %cst_28 = arith.constant 9.99999974E-6 : f32
    %59 = vector.broadcast %cst_28 : f32 to vector<8x1xf32>
    %60 = arith.addf %58, %59 : vector<8x1xf32>
    %61 = math.rsqrt %60 : vector<8x1xf32>
    %62 = vector.broadcast %54 : vector<8x1xf32> to vector<8x64xf32>
    %63 = arith.subf %7, %62 : vector<8x64xf32>
    %64 = vector.broadcast %61 : vector<8x1xf32> to vector<8x64xf32>
    %65 = arith.mulf %63, %64 : vector<8x64xf32>
    %cst_29 = arith.constant 0.000000e+00 : f32
    %66 = vector.broadcast %cst_29 : f32 to vector<8x64xf32>
    %67 = arith.maximumf %65, %66 : vector<8x64xf32>
    %cst_30 = arith.constant 0.000000e+00 : f32
    %68 = vector.broadcast %cst_30 : f32 to vector<8x64xf32>
    %69 = arith.minimumf %65, %68 : vector<8x64xf32>
    %70 = math.exp %69 : vector<8x64xf32>
    %cst_31 = arith.constant 1.000000e+00 : f32
    %71 = vector.broadcast %cst_31 : f32 to vector<8x64xf32>
    %72 = arith.subf %70, %71 : vector<8x64xf32>
    %cst_32 = arith.constant 1.67326319 : f32
    %73 = vector.broadcast %cst_32 : f32 to vector<8x64xf32>
    %74 = arith.mulf %73, %72 : vector<8x64xf32>
    %75 = arith.addf %67, %74 : vector<8x64xf32>
    %cst_33 = arith.constant 1.05070102 : f32
    %76 = vector.broadcast %cst_33 : f32 to vector<8x64xf32>
    %77 = arith.mulf %76, %75 : vector<8x64xf32>
    %c0_34 = arith.constant 0 : index
    %c0_35 = arith.constant 0 : index
    %c0_36 = arith.constant 0 : index
    %c0_37 = arith.constant 0 : index
    %78 = vector.load %arg4[%c0_34, %c0_35, %c0_36, %c0_37] : memref<1x4x8x64xf32, #tpu.memory_space<vmem>>, vector<1x1x8x64xf32>
    %79 = vector.shape_cast %78 : vector<1x1x8x64xf32> to vector<8x64xf32>
    %80 = vector.shape_cast %77 : vector<8x64xf32> to vector<1x1x8x64xf32>
    tpu.vector_store %arg4[%c0_34, %c0_35, %c0_36, %c0_37], %80 {strides = array<i32>} : memref<1x4x8x64xf32, #tpu.memory_space<vmem>>, vector<1x1x8x64xf32>,
    %81 = vector.broadcast %54 : vector<8x1xf32> to vector<8x64xf32>
    %82 = arith.subf %12, %81 : vector<8x64xf32>
    %83 = vector.broadcast %61 : vector<8x1xf32> to vector<8x64xf32>
    %84 = arith.mulf %82, %83 : vector<8x64xf32>
    %cst_38 = arith.constant 0.000000e+00 : f32
    %85 = vector.broadcast %cst_38 : f32 to vector<8x64xf32>
    %86 = arith.maximumf %84, %85 : vector<8x64xf32>
    %cst_39 = arith.constant 0.000000e+00 : f32
    %87 = vector.broadcast %cst_39 : f32 to vector<8x64xf32>
    %88 = arith.minimumf %84, %87 : vector<8x64xf32>
    %89 = math.exp %88 : vector<8x64xf32>
    %cst_40 = arith.constant 1.000000e+00 : f32
    %90 = vector.broadcast %cst_40 : f32 to vector<8x64xf32>
    %91 = arith.subf %89, %90 : vector<8x64xf32>
    %cst_41 = arith.constant 1.67326319 : f32
    %92 = vector.broadcast %cst_41 : f32 to vector<8x64xf32>
    %93 = arith.mulf %92, %91 : vector<8x64xf32>
    %94 = arith.addf %86, %93 : vector<8x64xf32>
    %cst_42 = arith.constant 1.05070102 : f32
    %95 = vector.broadcast %cst_42 : f32 to vector<8x64xf32>
    %96 = arith.mulf %95, %94 : vector<8x64xf32>
    %c0_43 = arith.constant 0 : index
    %c1_44 = arith.constant 1 : index
    %c0_45 = arith.constant 0 : index
    %c0_46 = arith.constant 0 : index
    %97 = vector.load %arg4[%c0_43, %c1_44, %c0_45, %c0_46] : memref<1x4x8x64xf32, #tpu.memory_space<vmem>>, vector<1x1x8x64xf32>
    %98 = vector.shape_cast %97 : vector<1x1x8x64xf32> to vector<8x64xf32>
    %99 = vector.shape_cast %96 : vector<8x64xf32> to vector<1x1x8x64xf32>
    tpu.vector_store %arg4[%c0_43, %c1_44, %c0_45, %c0_46], %99 {strides = array<i32>} : memref<1x4x8x64xf32, #tpu.memory_space<vmem>>, vector<1x1x8x64xf32>,
    %100 = vector.broadcast %54 : vector<8x1xf32> to vector<8x64xf32>
    %101 = arith.subf %17, %100 : vector<8x64xf32>
    %102 = vector.broadcast %61 : vector<8x1xf32> to vector<8x64xf32>
    %103 = arith.mulf %101, %102 : vector<8x64xf32>
    %cst_47 = arith.constant 0.000000e+00 : f32
    %104 = vector.broadcast %cst_47 : f32 to vector<8x64xf32>
    %105 = arith.maximumf %103, %104 : vector<8x64xf32>
    %cst_48 = arith.constant 0.000000e+00 : f32
    %106 = vector.broadcast %cst_48 : f32 to vector<8x64xf32>
    %107 = arith.minimumf %103, %106 : vector<8x64xf32>
    %108 = math.exp %107 : vector<8x64xf32>
    %cst_49 = arith.constant 1.000000e+00 : f32
    %109 = vector.broadcast %cst_49 : f32 to vector<8x64xf32>
    %110 = arith.subf %108, %109 : vector<8x64xf32>
    %cst_50 = arith.constant 1.67326319 : f32
    %111 = vector.broadcast %cst_50 : f32 to vector<8x64xf32>
    %112 = arith.mulf %111, %110 : vector<8x64xf32>
    %113 = arith.addf %105, %112 : vector<8x64xf32>
    %cst_51 = arith.constant 1.05070102 : f32
    %114 = vector.broadcast %cst_51 : f32 to vector<8x64xf32>
    %115 = arith.mulf %114, %113 : vector<8x64xf32>
    %c0_52 = arith.constant 0 : index
    %c2_53 = arith.constant 2 : index
    %c0_54 = arith.constant 0 : index
    %c0_55 = arith.constant 0 : index
    %116 = vector.load %arg4[%c0_52, %c2_53, %c0_54, %c0_55] : memref<1x4x8x64xf32, #tpu.memory_space<vmem>>, vector<1x1x8x64xf32>
    %117 = vector.shape_cast %116 : vector<1x1x8x64xf32> to vector<8x64xf32>
    %118 = vector.shape_cast %115 : vector<8x64xf32> to vector<1x1x8x64xf32>
    tpu.vector_store %arg4[%c0_52, %c2_53, %c0_54, %c0_55], %118 {strides = array<i32>} : memref<1x4x8x64xf32, #tpu.memory_space<vmem>>, vector<1x1x8x64xf32>,
    %119 = vector.broadcast %54 : vector<8x1xf32> to vector<8x64xf32>
    %120 = arith.subf %22, %119 : vector<8x64xf32>
    %121 = vector.broadcast %61 : vector<8x1xf32> to vector<8x64xf32>
    %122 = arith.mulf %120, %121 : vector<8x64xf32>
    %cst_56 = arith.constant 0.000000e+00 : f32
    %123 = vector.broadcast %cst_56 : f32 to vector<8x64xf32>
    %124 = arith.maximumf %122, %123 : vector<8x64xf32>
    %cst_57 = arith.constant 0.000000e+00 : f32
    %125 = vector.broadcast %cst_57 : f32 to vector<8x64xf32>
    %126 = arith.minimumf %122, %125 : vector<8x64xf32>
    %127 = math.exp %126 : vector<8x64xf32>
    %cst_58 = arith.constant 1.000000e+00 : f32
    %128 = vector.broadcast %cst_58 : f32 to vector<8x64xf32>
    %129 = arith.subf %127, %128 : vector<8x64xf32>
    %cst_59 = arith.constant 1.67326319 : f32
    %130 = vector.broadcast %cst_59 : f32 to vector<8x64xf32>
    %131 = arith.mulf %130, %129 : vector<8x64xf32>
    %132 = arith.addf %124, %131 : vector<8x64xf32>
    %cst_60 = arith.constant 1.05070102 : f32
    %133 = vector.broadcast %cst_60 : f32 to vector<8x64xf32>
    %134 = arith.mulf %133, %132 : vector<8x64xf32>
    %c0_61 = arith.constant 0 : index
    %c3_62 = arith.constant 3 : index
    %c0_63 = arith.constant 0 : index
    %c0_64 = arith.constant 0 : index
    %135 = vector.load %arg4[%c0_61, %c3_62, %c0_63, %c0_64] : memref<1x4x8x64xf32, #tpu.memory_space<vmem>>, vector<1x1x8x64xf32>
    %136 = vector.shape_cast %135 : vector<1x1x8x64xf32> to vector<8x64xf32>
    %137 = vector.shape_cast %134 : vector<8x64xf32> to vector<1x1x8x64xf32>
    tpu.vector_store %arg4[%c0_61, %c3_62, %c0_63, %c0_64], %137 {strides = array<i32>} : memref<1x4x8x64xf32, #tpu.memory_space<vmem>>, vector<1x1x8x64xf32>,
    return
  }
  func.func @transform_0(%arg0: i32) -> (i32, i32, i32) {
    %c0_i32 = arith.constant 0 : i32
    %c0_i32_0 = arith.constant 0 : i32
    %c0_i32_1 = arith.constant 0 : i32
    return %arg0, %c0_i32, %c0_i32_0 : i32, i32, i32
  }
  func.func @transform_1(%arg0: i32) -> (i32, i32, i32) {
    %c0_i32 = arith.constant 0 : i32
    %c0_i32_0 = arith.constant 0 : i32
    %c0_i32_1 = arith.constant 0 : i32
    %c0_i32_2 = arith.constant 0 : i32
    return %c0_i32, %c0_i32_0, %c0_i32_1 : i32, i32, i32
  }
  func.func @transform_2(%arg0: i32) -> (i32, i32) {
    %c0_i32 = arith.constant 0 : i32
    %c0_i32_0 = arith.constant 0 : i32
    %c0_i32_1 = arith.constant 0 : i32
    return %c0_i32, %c0_i32_0 : i32, i32
  }
  func.func @transform_3(%arg0: i32) -> (i32, i32, i32, i32) {
    %c0_i32 = arith.constant 0 : i32
    %c0_i32_0 = arith.constant 0 : i32
    %c0_i32_1 = arith.constant 0 : i32
    %c0_i32_2 = arith.constant 0 : i32
    return %arg0, %c0_i32, %c0_i32_0, %c0_i32_1 : i32, i32, i32, i32
  }
}

module attributes {stable_mosaic.version = 11 : i64} {
  func.func @_conv_fused_kernel(%arg0: i32, %arg1: memref<1x392x256xf32, #tpu.memory_space<vmem>>, %arg2: memref<3x392xf32, #tpu.memory_space<vmem>>, %arg3: memref<3x1xf32, #tpu.memory_space<vmem>>, %arg4: memref<1x3x256xf32, #tpu.memory_space<vmem>>) attributes {dimension_semantics = [#tpu.dimension_semantics<parallel>], iteration_bounds = array<i64: 2>, scalar_prefetch = 0 : i64, scratch_operands = 0 : i64, tpu.core_type = #tpu.core_type<tc>, window_params = [{transform_indices = @transform_0, window_bounds = array<i64: 1, 392, 256>}, {pipeline_mode = #tpu.pipeline_mode<synchronous>, transform_indices = @transform_1, window_bounds = array<i64: 3, 392>}, {pipeline_mode = #tpu.pipeline_mode<synchronous>, transform_indices = @transform_2, window_bounds = array<i64: 3, 1>}, {transform_indices = @transform_3, window_bounds = array<i64: 1, 3, 256>}]} {
    %c0 = arith.constant 0 : index
    %c0_0 = arith.constant 0 : index
    %0 = vector.load %arg2[%c0, %c0_0] : memref<3x392xf32, #tpu.memory_space<vmem>>, vector<3x392xf32>
    %c0_1 = arith.constant 0 : index
    %c0_2 = arith.constant 0 : index
    %c0_3 = arith.constant 0 : index
    %1 = vector.load %arg1[%c0_1, %c0_2, %c0_3] : memref<1x392x256xf32, #tpu.memory_space<vmem>>, vector<1x392x256xf32>
    %2 = vector.shape_cast %1 : vector<1x392x256xf32> to vector<392x256xf32>
    %cst = arith.constant dense<0.000000e+00> : vector<3x256xf32>
    %3 = tpu.matmul %0, %2, %cst {dimension_numbers = #tpu.dot_dimension_numbers<[1], [0], [0], [1], [0, 0, 1, 1], [], []>} : vector<3x392xf32>, vector<392x256xf32>, vector<3x256xf32> -> vector<3x256xf32>
    %c0_4 = arith.constant 0 : index
    %c0_5 = arith.constant 0 : index
    %4 = vector.load %arg3[%c0_4, %c0_5] : memref<3x1xf32, #tpu.memory_space<vmem>>, vector<3x1xf32>
    %5 = vector.broadcast %4 : vector<3x1xf32> to vector<3x256xf32>
    %6 = arith.addf %3, %5 : vector<3x256xf32>
    %7 = math.tanh %6 : vector<3x256xf32>
    %c0_6 = arith.constant 0 : index
    %c0_7 = arith.constant 0 : index
    %c0_8 = arith.constant 0 : index
    %8 = vector.load %arg4[%c0_6, %c0_7, %c0_8] : memref<1x3x256xf32, #tpu.memory_space<vmem>>, vector<1x3x256xf32>
    %9 = vector.shape_cast %8 : vector<1x3x256xf32> to vector<3x256xf32>
    %10 = vector.shape_cast %7 : vector<3x256xf32> to vector<1x3x256xf32>
    tpu.vector_store %arg4[%c0_6, %c0_7, %c0_8], %10 {strides = array<i32>} : memref<1x3x256xf32, #tpu.memory_space<vmem>>, vector<1x3x256xf32>,
    return
  }
  func.func @transform_0(%arg0: i32) -> (i32, i32, i32) {
    %c0_i32 = arith.constant 0 : i32
    %c0_i32_0 = arith.constant 0 : i32
    %c0_i32_1 = arith.constant 0 : i32
    return %arg0, %c0_i32, %c0_i32_0 : i32, i32, i32
  }
  func.func @transform_1(%arg0: i32) -> (i32, i32) {
    %c0_i32 = arith.constant 0 : i32
    %c0_i32_0 = arith.constant 0 : i32
    %c0_i32_1 = arith.constant 0 : i32
    return %c0_i32, %c0_i32_0 : i32, i32
  }
  func.func @transform_2(%arg0: i32) -> (i32, i32) {
    %c0_i32 = arith.constant 0 : i32
    %c0_i32_0 = arith.constant 0 : i32
    %c0_i32_1 = arith.constant 0 : i32
    return %c0_i32, %c0_i32_0 : i32, i32
  }
  func.func @transform_3(%arg0: i32) -> (i32, i32, i32) {
    %c0_i32 = arith.constant 0 : i32
    %c0_i32_0 = arith.constant 0 : i32
    %c0_i32_1 = arith.constant 0 : i32
    return %arg0, %c0_i32, %c0_i32_0 : i32, i32, i32
  }
}

</mosaic_0001>

<llo_original>
// kernel: resnet_generator_forward.10
$region0: #{resnet_generator_forward.10}
  #allocation0 [shape = 'u32[]', space=smem, size = 0x4, offset = 0x4, fixed_abs, tag = 'smem constant byte address 0x4 - core index']
  #allocation1 [shape = 'u32[72,128]{1,0:T(1,128)}', space=vmem, size = 0x9000, scoped, tag = 'internal scratch']
  %s0 = inlined_call_operand.vmem [shape: f32[2,147,256], index: 0, kind: input, shape index: {}]
  %s1 = inlined_call_operand.vmem [shape: f32[8,147], index: 1, kind: input, shape index: {}]
  %s2 = inlined_call_operand.vmem [shape: f32[8,1], index: 2, kind: input, shape index: {}]
  %s3 = inlined_call_operand.vmem [shape: f32[2,8,256], index: 3, kind: output, shape index: {}]
  %s4 = sld [smem:[#allocation0]]
  $region45: #{resnet_generator_forward.10} parent=0
    _
  %s6 = ssub.s32 1, %s4
  %s7 = scalar_select 0, %s6, %s4
  loop: start=0, step=1, limit=4
  $region2: #{resnet_generator_forward.10} parent=0 // loop_pre_header
    _
  $region3: #{resnet_generator_forward.10} parent=0 // loop_header
    %s9 = sphi 0, %s13
    %p10 = scmp.ge.s32.totalorder %s9, 4
    %s19 = sphi 0, %s21
    %s22 = sphi 0, %s19
    %s23 = sphi 0, %s22
    %s39 = sphi 0, %s23
    %s43 = sphi 0, %s43
    %s45 = sphi 0, %s43
    %s46 = sphi 0, %s45
    %s60 = sphi 0, %s46
    %s64 = sphi 0, %s64
    %s66 = sphi 0, %s64
    %s67 = sphi 0, %s66
    %s81 = sphi 0, %s67
    %s87 = sphi 0, %s89
    %s90 = sphi 0, %s87
    %s91 = sphi 0, %s90
    %s107 = sphi 0, %s91
  $region4: #{resnet_generator_forward.10} parent=0 // loop_header_branch
    %12 = sbr.rel (%p10) target = $region8
  $region5: #{resnet_generator_forward.10} parent=0 // loop_body
    %s14 = ssub.s32 %s9, 1
    %s15 = ssub.s32 %s9, 2
    %s16 = sadd.s32 %s9, 1
    %s17 = ssub.s32 %s9, %s16
    %p18 = scmp.eq.s32.totalorder %s17, 0
    %s20 = sadd.s32 %s19, 1
    %s21 = scalar_select %p18, %s19, %s20
    %p24 = pneg %p18
    %p25 = scmp.eq.s32.totalorder %s9, 1
    %p26 = por %p24, %p25
    %p27 = scmp.ne.s32.totalorder %s19, %s22
    %p28 = scmp.eq.s32.totalorder %s9, 0
    %p29 = por %p27, %p28
    %p30 = scmp.ne.s32.totalorder %s19, %s22
    %p31 = scmp.eq.s32.totalorder %s14, 1
    %p32 = por %p30, %p31
    %p33 = scmp.ne.s32.totalorder %s22, %s23
    %p34 = scmp.eq.s32.totalorder %s14, 0
    %p35 = por %p33, %p34
    %p36 = scmp.ne.s32.totalorder %s22, %s23
    %p37 = scmp.eq.s32.totalorder %s15, 1
    %p38 = por %p36, %p37
    %p40 = scmp.ne.s32.totalorder %s23, %s39
    %p41 = scmp.eq.s32.totalorder %s15, 0
    %p42 = por %p40, %p41
    %s44 = sadd.s32 %s43, 1
    %p47 = scmp.eq.s32.totalorder %s9, 1
    %p48 = scmp.ne.s32.totalorder %s43, %s45
    %p49 = scmp.eq.s32.totalorder %s9, 0
    %p50 = por %p48, %p49
    %p51 = scmp.ne.s32.totalorder %s43, %s45
    %p52 = scmp.eq.s32.totalorder %s14, 1
    %p53 = por %p51, %p52
    %p54 = scmp.ne.s32.totalorder %s45, %s46
    %p55 = scmp.eq.s32.totalorder %s14, 0
    %p56 = por %p54, %p55
    %p57 = scmp.ne.s32.totalorder %s45, %s46
    %p58 = scmp.eq.s32.totalorder %s15, 1
    %p59 = por %p57, %p58
    %p61 = scmp.ne.s32.totalorder %s46, %s60
    %p62 = scmp.eq.s32.totalorder %s15, 0
    %p63 = por %p61, %p62
    %s65 = sadd.s32 %s64, 1
    %p68 = scmp.eq.s32.totalorder %s9, 1
    %p69 = scmp.ne.s32.totalorder %s64, %s66
    %p70 = scmp.eq.s32.totalorder %s9, 0
    %p71 = por %p69, %p70
    %p72 = scmp.ne.s32.totalorder %s64, %s66
    %p73 = scmp.eq.s32.totalorder %s14, 1
    %p74 = por %p72, %p73
    %p75 = scmp.ne.s32.totalorder %s66, %s67
    %p76 = scmp.eq.s32.totalorder %s14, 0
    %p77 = por %p75, %p76
    %p78 = scmp.ne.s32.totalorder %s66, %s67
    %p79 = scmp.eq.s32.totalorder %s15, 1
    %p80 = por %p78, %p79
    %p82 = scmp.ne.s32.totalorder %s67, %s81
    %p83 = scmp.eq.s32.totalorder %s15, 0
    %p84 = por %p82, %p83
    %s85 = ssub.s32 %s9, %s16
    %p86 = scmp.eq.s32.totalorder %s85, 0
    %s88 = sadd.s32 %s87, 1
    %s89 = scalar_select %p86, %s87, %s88
    %p92 = pneg %p86
    %p93 = scmp.eq.s32.totalorder %s9, 1
    %p94 = por %p92, %p93
    %p95 = scmp.ne.s32.totalorder %s87, %s90
    %p96 = scmp.eq.s32.totalorder %s9, 0
    %p97 = por %p95, %p96
    %p98 = scmp.ne.s32.totalorder %s87, %s90
    %p99 = scmp.eq.s32.totalorder %s14, 1
    %p100 = por %p98, %p99
    %p101 = scmp.ne.s32.totalorder %s90, %s91
    %p102 = scmp.eq.s32.totalorder %s14, 0
    %p103 = por %p101, %p102
    %p104 = scmp.ne.s32.totalorder %s90, %s91
    %p105 = scmp.eq.s32.totalorder %s15, 1
    %p106 = por %p104, %p105
    %p108 = scmp.ne.s32.totalorder %s91, %s107
    %p109 = scmp.eq.s32.totalorder %s15, 0
    %p110 = por %p108, %p109
    %p111 = scmp.le.s32.totalorder 1, %s9
    %p112 = scmp.lt.s32.totalorder %s9, 3
    %p113 = pnand %p111, %p112
    %p114 = pneg %p113
    // Predicated region
    $region9: #{resnet_generator_forward.10} parent=5 // pred_check
      _
    $region10: #{resnet_generator_forward.10} parent=5 // pred_check_branch
      %116 = sbr.rel (%p113) target = $region12
    $region11: #{resnet_generator_forward.10} parent=5 // pred_region
      %s117 = ssub.s32 %s9, 1
      // Predicated region
      $region13: #{resnet_generator_forward.10} parent=11 // pred_check
        %p118 = pneg %p56
      $region14: #{resnet_generator_forward.10} parent=11 // pred_check_branch
        %120 = sbr.rel (%p118) target = $region16
      $region15: #{resnet_generator_forward.10} parent=11 // pred_region
        _
      $region16: #{resnet_generator_forward.10} parent=11 // pred_fallthru
        _
      // Predicated region
      $region17: #{resnet_generator_forward.10} parent=11 // pred_check
        %p121 = pneg %p77
      $region18: #{resnet_generator_forward.10} parent=11 // pred_check_branch
        %123 = sbr.rel (%p121) target = $region20
      $region19: #{resnet_generator_forward.10} parent=11 // pred_region
        _
      $region20: #{resnet_generator_forward.10} parent=11 // pred_fallthru
        _
    $region12: #{resnet_generator_forward.10} parent=5 // pred_fallthru
      _
    %p124 = scmp.lt.s32.totalorder %s9, 2
    // Predicated region
    $region21: #{resnet_generator_forward.10} parent=5 // pred_check
      %p125 = pneg %p124
    $region22: #{resnet_generator_forward.10} parent=5 // pred_check_branch
      %127 = sbr.rel (%p125) target = $region24
    $region23: #{resnet_generator_forward.10} parent=5 // pred_region
      // Predicated region
      $region25: #{resnet_generator_forward.10} parent=23 // pred_check
        %p128 = pneg %p29
      $region26: #{resnet_generator_forward.10} parent=23 // pred_check_branch
        %130 = sbr.rel (%p128) target = $region28
      $region27: #{resnet_generator_forward.10} parent=23 // pred_region
        %p131 = scmp.lt.s32.totalorder %s9, 1
        %s132 = scalar_select %p131, %s9, 1
        %s133 = smul.addr %s132, 38
        %s134 = smul.addr %s133, 8
        %s135 = scalar_lea.vmem %s0, %s134
      $region28: #{resnet_generator_forward.10} parent=23 // pred_fallthru
        _
    $region24: #{resnet_generator_forward.10} parent=5 // pred_fallthru
      _
    %p136 = scmp.le.s32.totalorder 1, %s9
    %p137 = scmp.lt.s32.totalorder %s9, 3
    %p138 = pnand %p136, %p137
    %p139 = pneg %p138
    // Predicated region
    $region29: #{resnet_generator_forward.10} parent=5 // pred_check
      _
    $region30: #{resnet_generator_forward.10} parent=5 // pred_check_branch
      %141 = sbr.rel (%p138) target = $region32
    $region31: #{resnet_generator_forward.10} parent=5 // pred_region
      %s142 = ssub.s32 %s9, 1
      %p143 = scmp.lt.s32.totalorder %s14, 1
      %s144 = scalar_select %p143, %s14, 1
      %s145 = smul.addr %s144, 38
      %s146 = smul.addr %s145, 8
      %s147 = scalar_lea.vmem %s0, %s146
      %p148 = pneg %p35
      %p149 = pneg %p32
      %p150 = pneg %p56
      %p151 = pneg %p53
      %p152 = pneg %p77
      %p153 = pneg %p74
      %p154 = pneg %p103
      %p155 = pneg %p100
      %p156 = scmp.lt.s32.totalorder %s14, 1
      %s157 = scalar_select %p156, %s14, 1
      %s158 = smul.addr %s157, 2
      %s159 = smul.addr %s158, 8
      %s160 = scalar_lea.vmem %s3, %s159
      %p161 = scmp.lt.s32.totalorder %s14, 1
      %s162 = scalar_select %p161, %s14, 1
      %s163 = smul.addr %s162, 38
      %s164 = smul.addr %s163, 8
      %s165 = scalar_lea.vmem %s0, %s164
      %p166 = scmp.lt.s32.totalorder %s14, 1
      %s167 = scalar_select %p166, %s14, 1
      %s168 = smul.addr %s167, 2
      %s169 = smul.addr %s168, 8
      %s170 = scalar_lea.vmem %s3, %s169
      %v171 = vld [vmem:[%s1] sm:$0xff]
      %v172 = vld [vmem:[%s1 + $0x8] sm:$0xff]
      %v173 = vld [vmem:[%s165] sm:$0xff]
      %v174 = vld [vmem:[%s165 + $0x8] sm:$0xff]
      %v175 = vld [vmem:[%s165 + $0x10] sm:$0xff]
      %v176 = vld [vmem:[%s165 + $0x18] sm:$0xff]
      %v177 = vld [vmem:[%s165 + $0x20] sm:$0xff]
      %v178 = vld [vmem:[%s165 + $0x28] sm:$0xff]
      %v179 = vld [vmem:[%s165 + $0x30] sm:$0xff]
      %v180 = vld [vmem:[%s165 + $0x38] sm:$0xff]
      %v181 = vld [vmem:[%s165 + $0x40] sm:$0xff]
      %v182 = vld [vmem:[%s165 + $0x48] sm:$0xff]
      %v183 = vld [vmem:[%s165 + $0x50] sm:$0xff]
      %v184 = vld [vmem:[%s165 + $0x58] sm:$0xff]
      %v185 = vld [vmem:[%s165 + $0x60] sm:$0xff]
      %v186 = vld [vmem:[%s165 + $0x68] sm:$0xff]
      %v187 = vld [vmem:[%s165 + $0x70] sm:$0xff]
      %v188 = vld [vmem:[%s165 + $0x78] sm:$0xff]
      %v189 = vld [vmem:[%s165 + $0x80] sm:$0xff]
      %v190 = vld [vmem:[%s165 + $0x88] sm:$0xff]
      %v191 = vld [vmem:[%s165 + $0x90] sm:$0xff]
      %v192 = vld [vmem:[%s165 + $0x98] sm:$0xff]
      %v193 = vld [vmem:[%s165 + $0xa0] sm:$0xff]
      %v194 = vld [vmem:[%s165 + $0xa8] sm:$0xff]
      %v195 = vld [vmem:[%s165 + $0xb0] sm:$0xff]
      %v196 = vld [vmem:[%s165 + $0xb8] sm:$0xff]
      %v197 = vld [vmem:[%s165 + $0xc0] sm:$0xff]
      %v198 = vld [vmem:[%s165 + $0xc8] sm:$0xff]
      %v199 = vld [vmem:[%s165 + $0xd0] sm:$0xff]
      %v200 = vld [vmem:[%s165 + $0xd8] sm:$0xff]
      %v201 = vld [vmem:[%s165 + $0xe0] sm:$0xff]
      %v202 = vld [vmem:[%s165 + $0xe8] sm:$0xff]
      %v203 = vld [vmem:[%s165 + $0xf0] sm:$0xff]
      %v204 = vld [vmem:[%s165 + $0xf8] sm:$0xff]
      %v205 = vld [vmem:[%s165 + $0x100] sm:$0xff]
      %v206 = vld [vmem:[%s165 + $0x108] sm:$0xff]
      %v207 = vld [vmem:[%s165 + $0x110] sm:$0xff]
      %v208 = vld [vmem:[%s165 + $0x118] sm:$0xff]
      %v209 = vld [vmem:[%s165 + $0x120] sm:$0x7]
      %v210 = vld [vmem:[%s165 + $0x128] sm:$0x7]
      %v211 = vld [vmem:[%s2] sm:$0xff]
      %213 = vset.pattern.permute.xlu0 0
      %214 = vperm.xlu0 %213, %v211
      %v215 = vpop.permute.xlu0 %214
      %vm217 = vcmask 154624
      %v219 = vsel %vm217, %v172, 0
      %vm221 = vcmask 1042432
      %v223 = vsel %vm221, %v209, 0
      %v226 = vsel %vm221, %v210, 0
      %228 = vmatpush.msra.mxu0 %v203
      %229 = vmatpush.msra.mxu0 %v201
      %230 = vmatpush.msra.mxu0 %v199
      %231 = vmatpush.msra.mxu0 %v197
      %232 = vmatpush.msra.mxu0 %v195
      %233 = vmatpush.msra.mxu0 %v193
      %234 = vmatpush.msra.mxu0 %v191
      %235 = vmatpush.msra.mxu0 %v189
      %236 = vmatpush.msra.mxu0 %v187
      %237 = vmatpush.msra.mxu0 %v185
      %238 = vmatpush.msra.mxu0 %v183
      %239 = vmatpush.msra.mxu0 %v181
      %240 = vmatpush.msra.mxu0 %v179
      %241 = vmatpush.msra.mxu0 %v177
      %242 = vmatpush.msra.mxu0 %v175
      %243 = vmatpush.msra.mxu0 %v173
      %244 = vmatmul.f32.gmra.mxu0 %v171
      %v245 = vpop.f32.mrf.mxu0
      %v246 = vadd.f32 %v215, %v245
      %247 = vdwg.mxu0
      %248 = vmatpush.msra.mxu0 0.0
      %249 = vmatpush.msra.mxu0 0.0
      %250 = vmatpush.msra.mxu0 0.0
      %251 = vmatpush.msra.mxu0 0.0
      %252 = vmatpush.msra.mxu0 0.0
      %253 = vmatpush.msra.mxu0 0.0
      %254 = vmatpush.msra.mxu0 0.0
      %255 = vmatpush.msra.mxu0 0.0
      %256 = vmatpush.msra.mxu0 0.0
      %257 = vmatpush.msra.mxu0 0.0
      %258 = vmatpush.msra.mxu0 0.0
      %259 = vmatpush.msra.mxu0 0.0
      %260 = vmatpush.msra.mxu0 0.0
      %261 = vmatpush.msra.mxu0 %v223
      %262 = vmatpush.msra.mxu0 %v207
      %263 = vmatpush.msra.mxu0 %v205
      %264 = vmatmul.f32.gmra.mxu0 %v219
      %v265 = vpop.f32.mrf.mxu0
      %v266 = vadd.f32 %v246, %v265
      %267 = vdwg.mxu0
      %268 = vmatpush.msra.mxu0 %v204
      %269 = vmatpush.msra.mxu0 %v202
      %270 = vmatpush.msra.mxu0 %v200
      %271 = vmatpush.msra.mxu0 %v198
      %272 = vmatpush.msra.mxu0 %v196
      %273 = vmatpush.msra.mxu0 %v194
      %274 = vmatpush.msra.mxu0 %v192
      %275 = vmatpush.msra.mxu0 %v190
      %276 = vmatpush.msra.mxu0 %v188
      %277 = vmatpush.msra.mxu0 %v186
      %278 = vmatpush.msra.mxu0 %v184
      %279 = vmatpush.msra.mxu0 %v182
      %280 = vmatpush.msra.mxu0 %v180
      %281 = vmatpush.msra.mxu0 %v178
      %282 = vmatpush.msra.mxu0 %v176
      %283 = vmatpush.msra.mxu0 %v174
      %284 = vmatmul.f32.gmra.mxu0 %v171
      %v285 = vpop.f32.mrf.mxu0
      %v286 = vadd.f32 %v215, %v285
      %287 = vdwg.mxu0
      %288 = vmatpush.msra.mxu0 0.0
      %289 = vmatpush.msra.mxu0 0.0
      %290 = vmatpush.msra.mxu0 0.0
      %291 = vmatpush.msra.mxu0 0.0
      %292 = vmatpush.msra.mxu0 0.0
      %293 = vmatpush.msra.mxu0 0.0
      %294 = vmatpush.msra.mxu0 0.0
      %295 = vmatpush.msra.mxu0 0.0
      %296 = vmatpush.msra.mxu0 0.0
      %297 = vmatpush.msra.mxu0 0.0
      %298 = vmatpush.msra.mxu0 0.0
      %299 = vmatpush.msra.mxu0 0.0
      %300 = vmatpush.msra.mxu0 0.0
      %301 = vmatpush.msra.mxu0 %v226
      %302 = vmatpush.msra.mxu0 %v208
      %303 = vmatpush.msra.mxu0 %v206
      %304 = vmatmul.f32.gmra.mxu0 %v219
      %v305 = vpop.f32.mrf.mxu0
      %v306 = vadd.f32 %v286, %v305
      %307 = vdwg.mxu0
      %v308 = vadd.f32 %v266, %v306
      %309 = vadd.xlane.f32.xlu0 %v308
      %v310 = vpop.xlane.xlu0 %309
      %v311 = vrcp.pop 256.0
      %v312 = vmul.f32 256.0, %v311
      %v313 = vsub.f32 1.0, %v312
      %v314 = vmul.f32 %v311, %v313
      %v315 = vadd.f32 %v311, %v314
      %vm316 = vweird.f32 %v311
      %v317 = vsel %vm316, %v311, %v315
      %v318 = vmul.f32 %v310, %v317
      %v319 = vmul.f32 %v266, %v266
      %v320 = vmul.f32 %v306, %v306
      %v321 = vadd.f32 %v319, %v320
      %322 = vadd.xlane.f32.xlu0 %v321
      %v323 = vpop.xlane.xlu0 %322
      %v324 = vmul.f32 %v323, %v317
      %v325 = vmul.f32 %v318, %v318
      %v326 = vsub.f32 %v324, %v325
      %v327 = vsub.f32 %v266, %v318
      %v328 = vsub.f32 %v306, %v318
      %v329 = vadd.f32 %v326, 1e-05
      %v330 = vrsqrt.pop %v329
      %v331 = vmul.f32 %v330, %v329
      %v332 = vmul.f32 %v331, %v330
      %v333 = vmul.f32 0.5, %v332
      %v334 = vsub.f32 1.5, %v333
      %v335 = vmul.f32 %v330, %v334
      %vm336 = vweird.f32 %v329
      %vm337 = vweird.f32 %v330
      %vm338 = vmor %vm336, %vm337
      %v339 = vsel %vm338, %v330, %v335
      %v340 = vmul.f32 %v327, %v339
      %v341 = vmul.f32 %v328, %v339
      %v342 = vmax.f32 %v340, 0.0
      %v343 = vmax.f32 %v341, 0.0
      %v344 = vmin.f32 %v340, 0.0
      %v345 = vmin.f32 %v341, 0.0
      %v346 = vmul.f32 %v344, 1.442695
      %v347 = vpow.pop %v346
      %v348 = vmul.f32 %v345, 1.442695
      %v349 = vpow.pop %v348
      %v350 = vsub.f32 %v347, 1.0
      %v351 = vsub.f32 %v349, 1.0
      %v352 = vmul.f32 %v350, 1.6732632
      %v353 = vmul.f32 %v351, 1.6732632
      %v354 = vadd.f32 %v342, %v352
      %v355 = vadd.f32 %v343, %v353
      %v356 = vmul.f32 %v354, 1.050701
      %v357 = vmul.f32 %v355, 1.050701
      %358 = vst [vmem:[%s170] sm:$0xff] %v356
      %359 = vst [vmem:[%s170 + $0x8] sm:$0xff] %v357
      %p360 = scmp.lt.s32.totalorder %s14, 1
      %s361 = scalar_select %p360, %s14, 1
      %s362 = smul.addr %s361, 2
      %s363 = smul.addr %s362, 8
      %s364 = scalar_lea.vmem %s3, %s363
      // Predicated region
      $region33: #{resnet_generator_forward.10} parent=31 // pred_check
        %p365 = pneg %p100
      $region34: #{resnet_generator_forward.10} parent=31 // pred_check_branch
        %367 = sbr.rel (%p365) target = $region36
      $region35: #{resnet_generator_forward.10} parent=31 // pred_region
        _
      $region36: #{resnet_generator_forward.10} parent=31 // pred_fallthru
        _
    $region32: #{resnet_generator_forward.10} parent=5 // pred_fallthru
      _
    %p368 = scmp.le.s32.totalorder 2, %s9
    // Predicated region
    $region37: #{resnet_generator_forward.10} parent=5 // pred_check
      %p369 = pneg %p368
    $region38: #{resnet_generator_forward.10} parent=5 // pred_check_branch
      %371 = sbr.rel (%p369) target = $region40
    $region39: #{resnet_generator_forward.10} parent=5 // pred_region
      %s372 = ssub.s32 %s9, 2
      // Predicated region
      $region41: #{resnet_generator_forward.10} parent=39 // pred_check
        %p373 = pneg %p106
      $region42: #{resnet_generator_forward.10} parent=39 // pred_check_branch
        %375 = sbr.rel (%p373) target = $region44
      $region43: #{resnet_generator_forward.10} parent=39 // pred_region
        %p376 = scmp.lt.s32.totalorder %s15, 1
        %s377 = scalar_select %p376, %s15, 1
        %s378 = smul.addr %s377, 2
        %s379 = smul.addr %s378, 8
        %s380 = scalar_lea.vmem %s3, %s379
      $region44: #{resnet_generator_forward.10} parent=39 // pred_fallthru
        _
    $region40: #{resnet_generator_forward.10} parent=5 // pred_fallthru
      _
  $region6: #{resnet_generator_forward.10} parent=0 // loop_footer
    %s13 = sadd.s32 1, %s9
  $region7: #{resnet_generator_forward.10} parent=0 // loop_footer_branch
    %8 = sbr.rel target = $region3
  $region8: #{resnet_generator_forward.10} parent=0 // loop_exit
    _

// kernel: resnet_generator_forward.11
$region0: #{resnet_generator_forward.11}
  #allocation0 [shape = 'u32[]', space=smem, size = 0x4, offset = 0x4, fixed_abs, tag = 'smem constant byte address 0x4 - core index']
  #allocation1 [shape = 'u32[72,128]{1,0:T(1,128)}', space=vmem, size = 0x9000, scoped, tag = 'internal scratch']
  %s0 = inlined_call_operand.vmem [shape: f32[2,72,64], index: 0, kind: input, shape index: {}]
  %s1 = inlined_call_operand.vmem [shape: f32[16,72], index: 1, kind: input, shape index: {}]
  %s2 = inlined_call_operand.vmem [shape: f32[16,1], index: 2, kind: input, shape index: {}]
  %s3 = inlined_call_operand.vmem [shape: f32[2,16,64], index: 3, kind: output, shape index: {}]
  %s4 = sld [smem:[#allocation0]]
  $region45: #{resnet_generator_forward.11} parent=0
    _
  %s6 = ssub.s32 1, %s4
  %s7 = scalar_select 0, %s6, %s4
  loop: start=0, step=1, limit=4
  $region2: #{resnet_generator_forward.11} parent=0 // loop_pre_header
    _
  $region3: #{resnet_generator_forward.11} parent=0 // loop_header
    %s9 = sphi 0, %s13
    %p10 = scmp.ge.s32.totalorder %s9, 4
    %s19 = sphi 0, %s21
    %s22 = sphi 0, %s19
    %s23 = sphi 0, %s22
    %s39 = sphi 0, %s23
    %s43 = sphi 0, %s43
    %s45 = sphi 0, %s43
    %s46 = sphi 0, %s45
    %s60 = sphi 0, %s46
    %s64 = sphi 0, %s64
    %s66 = sphi 0, %s64
    %s67 = sphi 0, %s66
    %s81 = sphi 0, %s67
    %s87 = sphi 0, %s89
    %s90 = sphi 0, %s87
    %s91 = sphi 0, %s90
    %s107 = sphi 0, %s91
  $region4: #{resnet_generator_forward.11} parent=0 // loop_header_branch
    %12 = sbr.rel (%p10) target = $region8
  $region5: #{resnet_generator_forward.11} parent=0 // loop_body
    %s14 = ssub.s32 %s9, 1
    %s15 = ssub.s32 %s9, 2
    %s16 = sadd.s32 %s9, 1
    %s17 = ssub.s32 %s9, %s16
    %p18 = scmp.eq.s32.totalorder %s17, 0
    %s20 = sadd.s32 %s19, 1
    %s21 = scalar_select %p18, %s19, %s20
    %p24 = pneg %p18
    %p25 = scmp.eq.s32.totalorder %s9, 1
    %p26 = por %p24, %p25
    %p27 = scmp.ne.s32.totalorder %s19, %s22
    %p28 = scmp.eq.s32.totalorder %s9, 0
    %p29 = por %p27, %p28
    %p30 = scmp.ne.s32.totalorder %s19, %s22
    %p31 = scmp.eq.s32.totalorder %s14, 1
    %p32 = por %p30, %p31
    %p33 = scmp.ne.s32.totalorder %s22, %s23
    %p34 = scmp.eq.s32.totalorder %s14, 0
    %p35 = por %p33, %p34
    %p36 = scmp.ne.s32.totalorder %s22, %s23
    %p37 = scmp.eq.s32.totalorder %s15, 1
    %p38 = por %p36, %p37
    %p40 = scmp.ne.s32.totalorder %s23, %s39
    %p41 = scmp.eq.s32.totalorder %s15, 0
    %p42 = por %p40, %p41
    %s44 = sadd.s32 %s43, 1
    %p47 = scmp.eq.s32.totalorder %s9, 1
    %p48 = scmp.ne.s32.totalorder %s43, %s45
    %p49 = scmp.eq.s32.totalorder %s9, 0
    %p50 = por %p48, %p49
    %p51 = scmp.ne.s32.totalorder %s43, %s45
    %p52 = scmp.eq.s32.totalorder %s14, 1
    %p53 = por %p51, %p52
    %p54 = scmp.ne.s32.totalorder %s45, %s46
    %p55 = scmp.eq.s32.totalorder %s14, 0
    %p56 = por %p54, %p55
    %p57 = scmp.ne.s32.totalorder %s45, %s46
    %p58 = scmp.eq.s32.totalorder %s15, 1
    %p59 = por %p57, %p58
    %p61 = scmp.ne.s32.totalorder %s46, %s60
    %p62 = scmp.eq.s32.totalorder %s15, 0
    %p63 = por %p61, %p62
    %s65 = sadd.s32 %s64, 1
    %p68 = scmp.eq.s32.totalorder %s9, 1
    %p69 = scmp.ne.s32.totalorder %s64, %s66
    %p70 = scmp.eq.s32.totalorder %s9, 0
    %p71 = por %p69, %p70
    %p72 = scmp.ne.s32.totalorder %s64, %s66
    %p73 = scmp.eq.s32.totalorder %s14, 1
    %p74 = por %p72, %p73
    %p75 = scmp.ne.s32.totalorder %s66, %s67
    %p76 = scmp.eq.s32.totalorder %s14, 0
    %p77 = por %p75, %p76
    %p78 = scmp.ne.s32.totalorder %s66, %s67
    %p79 = scmp.eq.s32.totalorder %s15, 1
    %p80 = por %p78, %p79
    %p82 = scmp.ne.s32.totalorder %s67, %s81
    %p83 = scmp.eq.s32.totalorder %s15, 0
    %p84 = por %p82, %p83
    %s85 = ssub.s32 %s9, %s16
    %p86 = scmp.eq.s32.totalorder %s85, 0
    %s88 = sadd.s32 %s87, 1
    %s89 = scalar_select %p86, %s87, %s88
    %p92 = pneg %p86
    %p93 = scmp.eq.s32.totalorder %s9, 1
    %p94 = por %p92, %p93
    %p95 = scmp.ne.s32.totalorder %s87, %s90
    %p96 = scmp.eq.s32.totalorder %s9, 0
    %p97 = por %p95, %p96
    %p98 = scmp.ne.s32.totalorder %s87, %s90
    %p99 = scmp.eq.s32.totalorder %s14, 1
    %p100 = por %p98, %p99
    %p101 = scmp.ne.s32.totalorder %s90, %s91
    %p102 = scmp.eq.s32.totalorder %s14, 0
    %p103 = por %p101, %p102
    %p104 = scmp.ne.s32.totalorder %s90, %s91
    %p105 = scmp.eq.s32.totalorder %s15, 1
    %p106 = por %p104, %p105
    %p108 = scmp.ne.s32.totalorder %s91, %s107
    %p109 = scmp.eq.s32.totalorder %s15, 0
    %p110 = por %p108, %p109
    %p111 = scmp.le.s32.totalorder 1, %s9
    %p112 = scmp.lt.s32.totalorder %s9, 3
    %p113 = pnand %p111, %p112
    %p114 = pneg %p113
    // Predicated region
    $region9: #{resnet_generator_forward.11} parent=5 // pred_check
      _
    $region10: #{resnet_generator_forward.11} parent=5 // pred_check_branch
      %116 = sbr.rel (%p113) target = $region12
    $region11: #{resnet_generator_forward.11} parent=5 // pred_region
      %s117 = ssub.s32 %s9, 1
      // Predicated region
      $region13: #{resnet_generator_forward.11} parent=11 // pred_check
        %p118 = pneg %p56
      $region14: #{resnet_generator_forward.11} parent=11 // pred_check_branch
        %120 = sbr.rel (%p118) target = $region16
      $region15: #{resnet_generator_forward.11} parent=11 // pred_region
        _
      $region16: #{resnet_generator_forward.11} parent=11 // pred_fallthru
        _
      // Predicated region
      $region17: #{resnet_generator_forward.11} parent=11 // pred_check
        %p121 = pneg %p77
      $region18: #{resnet_generator_forward.11} parent=11 // pred_check_branch
        %123 = sbr.rel (%p121) target = $region20
      $region19: #{resnet_generator_forward.11} parent=11 // pred_region
        _
      $region20: #{resnet_generator_forward.11} parent=11 // pred_fallthru
        _
    $region12: #{resnet_generator_forward.11} parent=5 // pred_fallthru
      _
    %p124 = scmp.lt.s32.totalorder %s9, 2
    // Predicated region
    $region21: #{resnet_generator_forward.11} parent=5 // pred_check
      %p125 = pneg %p124
    $region22: #{resnet_generator_forward.11} parent=5 // pred_check_branch
      %127 = sbr.rel (%p125) target = $region24
    $region23: #{resnet_generator_forward.11} parent=5 // pred_region
      // Predicated region
      $region25: #{resnet_generator_forward.11} parent=23 // pred_check
        %p128 = pneg %p29
      $region26: #{resnet_generator_forward.11} parent=23 // pred_check_branch
        %130 = sbr.rel (%p128) target = $region28
      $region27: #{resnet_generator_forward.11} parent=23 // pred_region
        %p131 = scmp.lt.s32.totalorder %s9, 1
        %s132 = scalar_select %p131, %s9, 1
        %s133 = smul.addr %s132, 9
        %s134 = smul.addr %s133, 8
        %s135 = scalar_lea.vmem %s0, %s134
      $region28: #{resnet_generator_forward.11} parent=23 // pred_fallthru
        _
    $region24: #{resnet_generator_forward.11} parent=5 // pred_fallthru
      _
    %p136 = scmp.le.s32.totalorder 1, %s9
    %p137 = scmp.lt.s32.totalorder %s9, 3
    %p138 = pnand %p136, %p137
    %p139 = pneg %p138
    // Predicated region
    $region29: #{resnet_generator_forward.11} parent=5 // pred_check
      _
    $region30: #{resnet_generator_forward.11} parent=5 // pred_check_branch
      %141 = sbr.rel (%p138) target = $region32
    $region31: #{resnet_generator_forward.11} parent=5 // pred_region
      %s142 = ssub.s32 %s9, 1
      %p143 = scmp.lt.s32.totalorder %s14, 1
      %s144 = scalar_select %p143, %s14, 1
      %s145 = smul.addr %s144, 9
      %s146 = smul.addr %s145, 8
      %s147 = scalar_lea.vmem %s0, %s146
      %p148 = pneg %p35
      %p149 = pneg %p32
      %p150 = pneg %p56
      %p151 = pneg %p53
      %p152 = pneg %p77
      %p153 = pneg %p74
      %p154 = pneg %p103
      %p155 = pneg %p100
      %p156 = scmp.lt.s32.totalorder %s14, 1
      %s157 = scalar_select %p156, %s14, 1
      %s158 = smul.addr %s157, 2
      %s159 = smul.addr %s158, 8
      %s160 = scalar_lea.vmem %s3, %s159
      %p161 = scmp.lt.s32.totalorder %s14, 1
      %s162 = scalar_select %p161, %s14, 1
      %s163 = smul.addr %s162, 9
      %s164 = smul.addr %s163, 8
      %s165 = scalar_lea.vmem %s0, %s164
      %p166 = scmp.lt.s32.totalorder %s14, 1
      %s167 = scalar_select %p166, %s14, 1
      %s168 = smul.addr %s167, 2
      %s169 = smul.addr %s168, 8
      %s170 = scalar_lea.vmem %s3, %s169
      %v171 = vld [vmem:[%s1] sm:$0xff]
      %v172 = vld [vmem:[%s1 + $0x8] sm:$0xff]
      %v173 = vld [vmem:[%s165] sm:$0xff]
      %v174 = vld [vmem:[%s165 + $0x8] sm:$0xff]
      %v175 = vld [vmem:[%s165 + $0x10] sm:$0xff]
      %v176 = vld [vmem:[%s165 + $0x18] sm:$0xff]
      %v177 = vld [vmem:[%s165 + $0x20] sm:$0xff]
      %v178 = vld [vmem:[%s165 + $0x28] sm:$0xff]
      %v179 = vld [vmem:[%s165 + $0x30] sm:$0xff]
      %v180 = vld [vmem:[%s165 + $0x38] sm:$0xff]
      %v181 = vld [vmem:[%s165 + $0x40] sm:$0xff]
      %v182 = vld [vmem:[%s2] sm:$0xff]
      %v183 = vld [vmem:[%s2 + $0x8] sm:$0xff]
      %185 = vset.pattern.permute.xlu0 0
      %186 = vperm.xlu0 %185, %v182
      %v187 = vpop.permute.xlu0 %186
      %190 = vset.pattern.permute.xlu0 0
      %191 = vperm.xlu0 %190, %v183
      %v192 = vpop.permute.xlu0 %191
      %vm194 = vcmask 588800
      %v196 = vsel %vm194, %v171, 0
      %v199 = vsel %vm194, %v172, 0
      %201 = vmatpush.msra.mxu0 0.0
      %202 = vmatpush.msra.mxu0 0.0
      %203 = vmatpush.msra.mxu0 0.0
      %204 = vmatpush.msra.mxu0 0.0
      %205 = vmatpush.msra.mxu0 0.0
      %206 = vmatpush.msra.mxu0 0.0
      %207 = vmatpush.msra.mxu0 0.0
      %208 = vmatpush.msra.mxu0 %v181
      %209 = vmatpush.msra.mxu0 %v180
      %210 = vmatpush.msra.mxu0 %v179
      %211 = vmatpush.msra.mxu0 %v178
      %212 = vmatpush.msra.mxu0 %v177
      %213 = vmatpush.msra.mxu0 %v176
      %214 = vmatpush.msra.mxu0 %v175
      %215 = vmatpush.msra.mxu0 %v174
      %216 = vmatpush.msra.mxu0 %v173
      %217 = vmatmul.f32.gmra.mxu0 %v196
      %v218 = vpop.f32.mrf.mxu0
      %v219 = vadd.f32 %v187, %v218
      %220 = vmatmul.f32.gmra.mxu0 %v199
      %v221 = vpop.f32.mrf.mxu0
      %v222 = vadd.f32 %v192, %v221
      %223 = vdwg.mxu0
      %vm224 = vcmask 523264
      %v225 = vsel %vm224, %v219, 0.0
      %226 = vadd.xlane.f32.xlu0 %v225
      %v227 = vpop.xlane.xlu0 %226
      %v228 = vsel %vm224, %v222, 0.0
      %229 = vadd.xlane.f32.xlu0 %v228
      %v230 = vpop.xlane.xlu0 %229
      %v231 = vrcp.pop 64.0
      %v232 = vmul.f32 64.0, %v231
      %v233 = vsub.f32 1.0, %v232
      %v234 = vmul.f32 %v231, %v233
      %v235 = vadd.f32 %v231, %v234
      %vm236 = vweird.f32 %v231
      %v237 = vsel %vm236, %v231, %v235
      %v238 = vmul.f32 %v227, %v237
      %v239 = vmul.f32 %v230, %v237
      %v240 = vmul.f32 %v219, %v219
      %v241 = vmul.f32 %v222, %v222
      %v242 = vsel %vm224, %v240, 0.0
      %243 = vadd.xlane.f32.xlu0 %v242
      %v244 = vpop.xlane.xlu0 %243
      %v245 = vsel %vm224, %v241, 0.0
      %246 = vadd.xlane.f32.xlu0 %v245
      %v247 = vpop.xlane.xlu0 %246
      %v248 = vmul.f32 %v244, %v237
      %v249 = vmul.f32 %v247, %v237
      %v250 = vmul.f32 %v238, %v238
      %v251 = vmul.f32 %v239, %v239
      %v252 = vsub.f32 %v248, %v250
      %v253 = vsub.f32 %v249, %v251
      %v254 = vsub.f32 %v219, %v238
      %v255 = vsub.f32 %v222, %v239
      %v256 = vadd.f32 %v252, 1e-05
      %v257 = vadd.f32 %v253, 1e-05
      %v258 = vrsqrt.pop %v256
      %v259 = vmul.f32 %v258, %v256
      %v260 = vmul.f32 %v259, %v258
      %v261 = vmul.f32 0.5, %v260
      %v262 = vsub.f32 1.5, %v261
      %v263 = vmul.f32 %v258, %v262
      %vm264 = vweird.f32 %v256
      %vm265 = vweird.f32 %v258
      %vm266 = vmor %vm264, %vm265
      %v267 = vsel %vm266, %v258, %v263
      %v268 = vrsqrt.pop %v257
      %v269 = vmul.f32 %v268, %v257
      %v270 = vmul.f32 %v269, %v268
      %v271 = vmul.f32 0.5, %v270
      %v272 = vsub.f32 1.5, %v271
      %v273 = vmul.f32 %v268, %v272
      %vm274 = vweird.f32 %v257
      %vm275 = vweird.f32 %v268
      %vm276 = vmor %vm274, %vm275
      %v277 = vsel %vm276, %v268, %v273
      %v278 = vmul.f32 %v254, %v267
      %v279 = vmul.f32 %v255, %v277
      %v280 = vmax.f32 %v278, 0.0
      %v281 = vmax.f32 %v279, 0.0
      %v282 = vmin.f32 %v278, 0.0
      %v283 = vmin.f32 %v279, 0.0
      %v284 = vmul.f32 %v282, 1.442695
      %v285 = vpow.pop %v284
      %v286 = vmul.f32 %v283, 1.442695
      %v287 = vpow.pop %v286
      %v288 = vsub.f32 %v285, 1.0
      %v289 = vsub.f32 %v287, 1.0
      %v290 = vmul.f32 %v288, 1.6732632
      %v291 = vmul.f32 %v289, 1.6732632
      %v292 = vadd.f32 %v280, %v290
      %v293 = vadd.f32 %v281, %v291
      %v294 = vmul.f32 %v292, 1.050701
      %v295 = vmul.f32 %v293, 1.050701
      %296 = vst.msk [vmem:[%s170] sm:$0xff] %vm224, %v294
      %297 = vst.msk [vmem:[%s170 + $0x8] sm:$0xff] %vm224, %v295
      %p298 = scmp.lt.s32.totalorder %s14, 1
      %s299 = scalar_select %p298, %s14, 1
      %s300 = smul.addr %s299, 2
      %s301 = smul.addr %s300, 8
      %s302 = scalar_lea.vmem %s3, %s301
      // Predicated region
      $region33: #{resnet_generator_forward.11} parent=31 // pred_check
        %p303 = pneg %p100
      $region34: #{resnet_generator_forward.11} parent=31 // pred_check_branch
        %305 = sbr.rel (%p303) target = $region36
      $region35: #{resnet_generator_forward.11} parent=31 // pred_region
        _
      $region36: #{resnet_generator_forward.11} parent=31 // pred_fallthru
        _
    $region32: #{resnet_generator_forward.11} parent=5 // pred_fallthru
      _
    %p306 = scmp.le.s32.totalorder 2, %s9
    // Predicated region
    $region37: #{resnet_generator_forward.11} parent=5 // pred_check
      %p307 = pneg %p306
    $region38: #{resnet_generator_forward.11} parent=5 // pred_check_branch
      %309 = sbr.rel (%p307) target = $region40
    $region39: #{resnet_generator_forward.11} parent=5 // pred_region
      %s310 = ssub.s32 %s9, 2
      // Predicated region
      $region41: #{resnet_generator_forward.11} parent=39 // pred_check
        %p311 = pneg %p106
      $region42: #{resnet_generator_forward.11} parent=39 // pred_check_branch
        %313 = sbr.rel (%p311) target = $region44
      $region43: #{resnet_generator_forward.11} parent=39 // pred_region
        %p314 = scmp.lt.s32.totalorder %s15, 1
        %s315 = scalar_select %p314, %s15, 1
        %s316 = smul.addr %s315, 2
        %s317 = smul.addr %s316, 8
        %s318 = scalar_lea.vmem %s3, %s317
      $region44: #{resnet_generator_forward.11} parent=39 // pred_fallthru
        _
    $region40: #{resnet_generator_forward.11} parent=5 // pred_fallthru
      _
  $region6: #{resnet_generator_forward.11} parent=0 // loop_footer
    %s13 = sadd.s32 1, %s9
  $region7: #{resnet_generator_forward.11} parent=0 // loop_footer_branch
    %8 = sbr.rel target = $region3
  $region8: #{resnet_generator_forward.11} parent=0 // loop_exit
    _

// kernel: resnet_generator_forward.12
$region0: #{resnet_generator_forward.12}
  #allocation0 [shape = 'u32[]', space=smem, size = 0x4, offset = 0x4, fixed_abs, tag = 'smem constant byte address 0x4 - core index']
  #allocation1 [shape = 'u32[72,128]{1,0:T(1,128)}', space=vmem, size = 0x9000, scoped, tag = 'internal scratch']
  %s0 = inlined_call_operand.vmem [shape: f32[2,144,16], index: 0, kind: input, shape index: {}]
  %s1 = inlined_call_operand.vmem [shape: f32[32,144], index: 1, kind: input, shape index: {}]
  %s2 = inlined_call_operand.vmem [shape: f32[32,1], index: 2, kind: input, shape index: {}]
  %s3 = inlined_call_operand.vmem [shape: f32[2,32,16], index: 3, kind: output, shape index: {}]
  %s4 = sld [smem:[#allocation0]]
  $region45: #{resnet_generator_forward.12} parent=0
    _
  %s6 = ssub.s32 1, %s4
  %s7 = scalar_select 0, %s6, %s4
  loop: start=0, step=1, limit=4
  $region2: #{resnet_generator_forward.12} parent=0 // loop_pre_header
    _
  $region3: #{resnet_generator_forward.12} parent=0 // loop_header
    %s9 = sphi 0, %s13
    %p10 = scmp.ge.s32.totalorder %s9, 4
    %s19 = sphi 0, %s21
    %s22 = sphi 0, %s19
    %s23 = sphi 0, %s22
    %s39 = sphi 0, %s23
    %s43 = sphi 0, %s43
    %s45 = sphi 0, %s43
    %s46 = sphi 0, %s45
    %s60 = sphi 0, %s46
    %s64 = sphi 0, %s64
    %s66 = sphi 0, %s64
    %s67 = sphi 0, %s66
    %s81 = sphi 0, %s67
    %s87 = sphi 0, %s89
    %s90 = sphi 0, %s87
    %s91 = sphi 0, %s90
    %s107 = sphi 0, %s91
  $region4: #{resnet_generator_forward.12} parent=0 // loop_header_branch
    %12 = sbr.rel (%p10) target = $region8
  $region5: #{resnet_generator_forward.12} parent=0 // loop_body
    %s14 = ssub.s32 %s9, 1
    %s15 = ssub.s32 %s9, 2
    %s16 = sadd.s32 %s9, 1
    %s17 = ssub.s32 %s9, %s16
    %p18 = scmp.eq.s32.totalorder %s17, 0
    %s20 = sadd.s32 %s19, 1
    %s21 = scalar_select %p18, %s19, %s20
    %p24 = pneg %p18
    %p25 = scmp.eq.s32.totalorder %s9, 1
    %p26 = por %p24, %p25
    %p27 = scmp.ne.s32.totalorder %s19, %s22
    %p28 = scmp.eq.s32.totalorder %s9, 0
    %p29 = por %p27, %p28
    %p30 = scmp.ne.s32.totalorder %s19, %s22
    %p31 = scmp.eq.s32.totalorder %s14, 1
    %p32 = por %p30, %p31
    %p33 = scmp.ne.s32.totalorder %s22, %s23
    %p34 = scmp.eq.s32.totalorder %s14, 0
    %p35 = por %p33, %p34
    %p36 = scmp.ne.s32.totalorder %s22, %s23
    %p37 = scmp.eq.s32.totalorder %s15, 1
    %p38 = por %p36, %p37
    %p40 = scmp.ne.s32.totalorder %s23, %s39
    %p41 = scmp.eq.s32.totalorder %s15, 0
    %p42 = por %p40, %p41
    %s44 = sadd.s32 %s43, 1
    %p47 = scmp.eq.s32.totalorder %s9, 1
    %p48 = scmp.ne.s32.totalorder %s43, %s45
    %p49 = scmp.eq.s32.totalorder %s9, 0
    %p50 = por %p48, %p49
    %p51 = scmp.ne.s32.totalorder %s43, %s45
    %p52 = scmp.eq.s32.totalorder %s14, 1
    %p53 = por %p51, %p52
    %p54 = scmp.ne.s32.totalorder %s45, %s46
    %p55 = scmp.eq.s32.totalorder %s14, 0
    %p56 = por %p54, %p55
    %p57 = scmp.ne.s32.totalorder %s45, %s46
    %p58 = scmp.eq.s32.totalorder %s15, 1
    %p59 = por %p57, %p58
    %p61 = scmp.ne.s32.totalorder %s46, %s60
    %p62 = scmp.eq.s32.totalorder %s15, 0
    %p63 = por %p61, %p62
    %s65 = sadd.s32 %s64, 1
    %p68 = scmp.eq.s32.totalorder %s9, 1
    %p69 = scmp.ne.s32.totalorder %s64, %s66
    %p70 = scmp.eq.s32.totalorder %s9, 0
    %p71 = por %p69, %p70
    %p72 = scmp.ne.s32.totalorder %s64, %s66
    %p73 = scmp.eq.s32.totalorder %s14, 1
    %p74 = por %p72, %p73
    %p75 = scmp.ne.s32.totalorder %s66, %s67
    %p76 = scmp.eq.s32.totalorder %s14, 0
    %p77 = por %p75, %p76
    %p78 = scmp.ne.s32.totalorder %s66, %s67
    %p79 = scmp.eq.s32.totalorder %s15, 1
    %p80 = por %p78, %p79
    %p82 = scmp.ne.s32.totalorder %s67, %s81
    %p83 = scmp.eq.s32.totalorder %s15, 0
    %p84 = por %p82, %p83
    %s85 = ssub.s32 %s9, %s16
    %p86 = scmp.eq.s32.totalorder %s85, 0
    %s88 = sadd.s32 %s87, 1
    %s89 = scalar_select %p86, %s87, %s88
    %p92 = pneg %p86
    %p93 = scmp.eq.s32.totalorder %s9, 1
    %p94 = por %p92, %p93
    %p95 = scmp.ne.s32.totalorder %s87, %s90
    %p96 = scmp.eq.s32.totalorder %s9, 0
    %p97 = por %p95, %p96
    %p98 = scmp.ne.s32.totalorder %s87, %s90
    %p99 = scmp.eq.s32.totalorder %s14, 1
    %p100 = por %p98, %p99
    %p101 = scmp.ne.s32.totalorder %s90, %s91
    %p102 = scmp.eq.s32.totalorder %s14, 0
    %p103 = por %p101, %p102
    %p104 = scmp.ne.s32.totalorder %s90, %s91
    %p105 = scmp.eq.s32.totalorder %s15, 1
    %p106 = por %p104, %p105
    %p108 = scmp.ne.s32.totalorder %s91, %s107
    %p109 = scmp.eq.s32.totalorder %s15, 0
    %p110 = por %p108, %p109
    %p111 = scmp.le.s32.totalorder 1, %s9
    %p112 = scmp.lt.s32.totalorder %s9, 3
    %p113 = pnand %p111, %p112
    %p114 = pneg %p113
    // Predicated region
    $region9: #{resnet_generator_forward.12} parent=5 // pred_check
      _
    $region10: #{resnet_generator_forward.12} parent=5 // pred_check_branch
      %116 = sbr.rel (%p113) target = $region12
    $region11: #{resnet_generator_forward.12} parent=5 // pred_region
      %s117 = ssub.s32 %s9, 1
      // Predicated region
      $region13: #{resnet_generator_forward.12} parent=11 // pred_check
        %p118 = pneg %p56
      $region14: #{resnet_generator_forward.12} parent=11 // pred_check_branch
        %120 = sbr.rel (%p118) target = $region16
      $region15: #{resnet_generator_forward.12} parent=11 // pred_region
        _
      $region16: #{resnet_generator_forward.12} parent=11 // pred_fallthru
        _
      // Predicated region
      $region17: #{resnet_generator_forward.12} parent=11 // pred_check
        %p121 = pneg %p77
      $region18: #{resnet_generator_forward.12} parent=11 // pred_check_branch
        %123 = sbr.rel (%p121) target = $region20
      $region19: #{resnet_generator_forward.12} parent=11 // pred_region
        _
      $region20: #{resnet_generator_forward.12} parent=11 // pred_fallthru
        _
    $region12: #{resnet_generator_forward.12} parent=5 // pred_fallthru
      _
    %p124 = scmp.lt.s32.totalorder %s9, 2
    // Predicated region
    $region21: #{resnet_generator_forward.12} parent=5 // pred_check
      %p125 = pneg %p124
    $region22: #{resnet_generator_forward.12} parent=5 // pred_check_branch
      %127 = sbr.rel (%p125) target = $region24
    $region23: #{resnet_generator_forward.12} parent=5 // pred_region
      // Predicated region
      $region25: #{resnet_generator_forward.12} parent=23 // pred_check
        %p128 = pneg %p29
      $region26: #{resnet_generator_forward.12} parent=23 // pred_check_branch
        %130 = sbr.rel (%p128) target = $region28
      $region27: #{resnet_generator_forward.12} parent=23 // pred_region
        %p131 = scmp.lt.s32.totalorder %s9, 1
        %s132 = scalar_select %p131, %s9, 1
        %s133 = smul.addr %s132, 18
        %s134 = smul.addr %s133, 8
        %s135 = scalar_lea.vmem %s0, %s134
      $region28: #{resnet_generator_forward.12} parent=23 // pred_fallthru
        _
    $region24: #{resnet_generator_forward.12} parent=5 // pred_fallthru
      _
    %p136 = scmp.le.s32.totalorder 1, %s9
    %p137 = scmp.lt.s32.totalorder %s9, 3
    %p138 = pnand %p136, %p137
    %p139 = pneg %p138
    // Predicated region
    $region29: #{resnet_generator_forward.12} parent=5 // pred_check
      _
    $region30: #{resnet_generator_forward.12} parent=5 // pred_check_branch
      %141 = sbr.rel (%p138) target = $region32
    $region31: #{resnet_generator_forward.12} parent=5 // pred_region
      %s142 = ssub.s32 %s9, 1
      %p143 = scmp.lt.s32.totalorder %s14, 1
      %s144 = scalar_select %p143, %s14, 1
      %s145 = smul.addr %s144, 18
      %s146 = smul.addr %s145, 8
      %s147 = scalar_lea.vmem %s0, %s146
      %p148 = pneg %p35
      %p149 = pneg %p32
      %p150 = pneg %p56
      %p151 = pneg %p53
      %p152 = pneg %p77
      %p153 = pneg %p74
      %p154 = pneg %p103
      %p155 = pneg %p100
      %p156 = scmp.lt.s32.totalorder %s14, 1
      %s157 = scalar_select %p156, %s14, 1
      %s158 = smul.addr %s157, 4
      %s159 = smul.addr %s158, 8
      %s160 = scalar_lea.vmem %s3, %s159
      %p161 = scmp.lt.s32.totalorder %s14, 1
      %s162 = scalar_select %p161, %s14, 1
      %s163 = smul.addr %s162, 18
      %s164 = smul.addr %s163, 8
      %s165 = scalar_lea.vmem %s0, %s164
      %p166 = scmp.lt.s32.totalorder %s14, 1
      %s167 = scalar_select %p166, %s14, 1
      %s168 = smul.addr %s167, 4
      %s169 = smul.addr %s168, 8
      %s170 = scalar_lea.vmem %s3, %s169
      %v171 = vld [vmem:[%s1] sm:$0xff]
      %v172 = vld [vmem:[%s1 + $0x8] sm:$0xff]
      %v173 = vld [vmem:[%s1 + $0x10] sm:$0xff]
      %v174 = vld [vmem:[%s1 + $0x18] sm:$0xff]
      %v175 = vld [vmem:[%s1 + $0x20] sm:$0xff]
      %v176 = vld [vmem:[%s1 + $0x28] sm:$0xff]
      %v177 = vld [vmem:[%s1 + $0x30] sm:$0xff]
      %v178 = vld [vmem:[%s1 + $0x38] sm:$0xff]
      %v179 = vld [vmem:[%s165] sm:$0xff]
      %v180 = vld [vmem:[%s165 + $0x8] sm:$0xff]
      %v181 = vld [vmem:[%s165 + $0x10] sm:$0xff]
      %v182 = vld [vmem:[%s165 + $0x18] sm:$0xff]
      %v183 = vld [vmem:[%s165 + $0x20] sm:$0xff]
      %v184 = vld [vmem:[%s165 + $0x28] sm:$0xff]
      %v185 = vld [vmem:[%s165 + $0x30] sm:$0xff]
      %v186 = vld [vmem:[%s165 + $0x38] sm:$0xff]
      %v187 = vld [vmem:[%s165 + $0x40] sm:$0xff]
      %v188 = vld [vmem:[%s165 + $0x48] sm:$0xff]
      %v189 = vld [vmem:[%s165 + $0x50] sm:$0xff]
      %v190 = vld [vmem:[%s165 + $0x58] sm:$0xff]
      %v191 = vld [vmem:[%s165 + $0x60] sm:$0xff]
      %v192 = vld [vmem:[%s165 + $0x68] sm:$0xff]
      %v193 = vld [vmem:[%s165 + $0x70] sm:$0xff]
      %v194 = vld [vmem:[%s165 + $0x78] sm:$0xff]
      %v195 = vld [vmem:[%s165 + $0x80] sm:$0xff]
      %v196 = vld [vmem:[%s165 + $0x88] sm:$0xff]
      %v197 = vld [vmem:[%s2] sm:$0xff]
      %v198 = vld [vmem:[%s2 + $0x8] sm:$0xff]
      %v199 = vld [vmem:[%s2 + $0x10] sm:$0xff]
      %v200 = vld [vmem:[%s2 + $0x18] sm:$0xff]
      %202 = vset.pattern.permute.xlu0 0
      %203 = vperm.xlu0 %202, %v197
      %v204 = vpop.permute.xlu0 %203
      %207 = vset.pattern.permute.xlu0 0
      %208 = vperm.xlu0 %207, %v198
      %v209 = vpop.permute.xlu0 %208
      %212 = vset.pattern.permute.xlu0 0
      %213 = vperm.xlu0 %212, %v199
      %v214 = vpop.permute.xlu0 %213
      %217 = vset.pattern.permute.xlu0 0
      %218 = vperm.xlu0 %217, %v200
      %v219 = vpop.permute.xlu0 %218
      %vm221 = vcmask 130048
      %v223 = vsel %vm221, %v172, 0
      %v226 = vsel %vm221, %v174, 0
      %v229 = vsel %vm221, %v176, 0
      %v232 = vsel %vm221, %v178, 0
      %234 = vmatpush.msra.mxu0 %v194
      %235 = vmatpush.msra.mxu0 %v193
      %236 = vmatpush.msra.mxu0 %v192
      %237 = vmatpush.msra.mxu0 %v191
      %238 = vmatpush.msra.mxu0 %v190
      %239 = vmatpush.msra.mxu0 %v189
      %240 = vmatpush.msra.mxu0 %v188
      %241 = vmatpush.msra.mxu0 %v187
      %242 = vmatpush.msra.mxu0 %v186
      %243 = vmatpush.msra.mxu0 %v185
      %244 = vmatpush.msra.mxu0 %v184
      %245 = vmatpush.msra.mxu0 %v183
      %246 = vmatpush.msra.mxu0 %v182
      %247 = vmatpush.msra.mxu0 %v181
      %248 = vmatpush.msra.mxu0 %v180
      %249 = vmatpush.msra.mxu0 %v179
      %250 = vmatmul.f32.gmra.mxu0 %v171
      %v251 = vpop.f32.mrf.mxu0
      %v252 = vadd.f32 %v204, %v251
      %253 = vmatmul.f32.gmra.mxu0 %v173
      %v254 = vpop.f32.mrf.mxu0
      %v255 = vadd.f32 %v209, %v254
      %256 = vmatmul.f32.gmra.mxu0 %v175
      %v257 = vpop.f32.mrf.mxu0
      %v258 = vadd.f32 %v214, %v257
      %259 = vmatmul.f32.gmra.mxu0 %v177
      %v260 = vpop.f32.mrf.mxu0
      %v261 = vadd.f32 %v219, %v260
      %262 = vdwg.mxu0
      %263 = vmatpush.msra.mxu0 0.0
      %264 = vmatpush.msra.mxu0 0.0
      %265 = vmatpush.msra.mxu0 0.0
      %266 = vmatpush.msra.mxu0 0.0
      %267 = vmatpush.msra.mxu0 0.0
      %268 = vmatpush.msra.mxu0 0.0
      %269 = vmatpush.msra.mxu0 0.0
      %270 = vmatpush.msra.mxu0 0.0
      %271 = vmatpush.msra.mxu0 0.0
      %272 = vmatpush.msra.mxu0 0.0
      %273 = vmatpush.msra.mxu0 0.0
      %274 = vmatpush.msra.mxu0 0.0
      %275 = vmatpush.msra.mxu0 0.0
      %276 = vmatpush.msra.mxu0 0.0
      %277 = vmatpush.msra.mxu0 %v196
      %278 = vmatpush.msra.mxu0 %v195
      %279 = vmatmul.f32.gmra.mxu0 %v223
      %v280 = vpop.f32.mrf.mxu0
      %v281 = vadd.f32 %v252, %v280
      %282 = vmatmul.f32.gmra.mxu0 %v226
      %v283 = vpop.f32.mrf.mxu0
      %v284 = vadd.f32 %v255, %v283
      %285 = vmatmul.f32.gmra.mxu0 %v229
      %v286 = vpop.f32.mrf.mxu0
      %v287 = vadd.f32 %v258, %v286
      %288 = vmatmul.f32.gmra.mxu0 %v232
      %v289 = vpop.f32.mrf.mxu0
      %v290 = vadd.f32 %v261, %v289
      %291 = vdwg.mxu0
      %v292 = vsel %vm221, %v281, 0.0
      %293 = vadd.xlane.f32.xlu0 %v292
      %v294 = vpop.xlane.xlu0 %293
      %v295 = vsel %vm221, %v284, 0.0
      %296 = vadd.xlane.f32.xlu0 %v295
      %v297 = vpop.xlane.xlu0 %296
      %v298 = vsel %vm221, %v287, 0.0
      %299 = vadd.xlane.f32.xlu0 %v298
      %v300 = vpop.xlane.xlu0 %299
      %v301 = vsel %vm221, %v290, 0.0
      %302 = vadd.xlane.f32.xlu0 %v301
      %v303 = vpop.xlane.xlu0 %302
      %v304 = vrcp.pop 16.0
      %v305 = vmul.f32 16.0, %v304
      %v306 = vsub.f32 1.0, %v305
      %v307 = vmul.f32 %v304, %v306
      %v308 = vadd.f32 %v304, %v307
      %vm309 = vweird.f32 %v304
      %v310 = vsel %vm309, %v304, %v308
      %v311 = vmul.f32 %v294, %v310
      %v312 = vmul.f32 %v297, %v310
      %v313 = vmul.f32 %v300, %v310
      %v314 = vmul.f32 %v303, %v310
      %v315 = vmul.f32 %v281, %v281
      %v316 = vmul.f32 %v284, %v284
      %v317 = vmul.f32 %v287, %v287
      %v318 = vmul.f32 %v290, %v290
      %v319 = vsel %vm221, %v315, 0.0
      %320 = vadd.xlane.f32.xlu0 %v319
      %v321 = vpop.xlane.xlu0 %320
      %v322 = vsel %vm221, %v316, 0.0
      %323 = vadd.xlane.f32.xlu0 %v322
      %v324 = vpop.xlane.xlu0 %323
      %v325 = vsel %vm221, %v317, 0.0
      %326 = vadd.xlane.f32.xlu0 %v325
      %v327 = vpop.xlane.xlu0 %326
      %v328 = vsel %vm221, %v318, 0.0
      %329 = vadd.xlane.f32.xlu0 %v328
      %v330 = vpop.xlane.xlu0 %329
      %v331 = vmul.f32 %v321, %v310
      %v332 = vmul.f32 %v324, %v310
      %v333 = vmul.f32 %v327, %v310
      %v334 = vmul.f32 %v330, %v310
      %v335 = vmul.f32 %v311, %v311
      %v336 = vmul.f32 %v312, %v312
      %v337 = vmul.f32 %v313, %v313
      %v338 = vmul.f32 %v314, %v314
      %v339 = vsub.f32 %v331, %v335
      %v340 = vsub.f32 %v332, %v336
      %v341 = vsub.f32 %v333, %v337
      %v342 = vsub.f32 %v334, %v338
      %v343 = vsub.f32 %v281, %v311
      %v344 = vsub.f32 %v284, %v312
      %v345 = vsub.f32 %v287, %v313
      %v346 = vsub.f32 %v290, %v314
      %v347 = vadd.f32 %v339, 1e-05
      %v348 = vadd.f32 %v340, 1e-05
      %v349 = vadd.f32 %v341, 1e-05
      %v350 = vadd.f32 %v342, 1e-05
      %v351 = vrsqrt.pop %v347
      %v352 = vmul.f32 %v351, %v347
      %v353 = vmul.f32 %v352, %v351
      %v354 = vmul.f32 0.5, %v353
      %v355 = vsub.f32 1.5, %v354
      %v356 = vmul.f32 %v351, %v355
      %vm357 = vweird.f32 %v347
      %vm358 = vweird.f32 %v351
      %vm359 = vmor %vm357, %vm358
      %v360 = vsel %vm359, %v351, %v356
      %v361 = vrsqrt.pop %v348
      %v362 = vmul.f32 %v361, %v348
      %v363 = vmul.f32 %v362, %v361
      %v364 = vmul.f32 0.5, %v363
      %v365 = vsub.f32 1.5, %v364
      %v366 = vmul.f32 %v361, %v365
      %vm367 = vweird.f32 %v348
      %vm368 = vweird.f32 %v361
      %vm369 = vmor %vm367, %vm368
      %v370 = vsel %vm369, %v361, %v366
      %v371 = vrsqrt.pop %v349
      %v372 = vmul.f32 %v371, %v349
      %v373 = vmul.f32 %v372, %v371
      %v374 = vmul.f32 0.5, %v373
      %v375 = vsub.f32 1.5, %v374
      %v376 = vmul.f32 %v371, %v375
      %vm377 = vweird.f32 %v349
      %vm378 = vweird.f32 %v371
      %vm379 = vmor %vm377, %vm378
      %v380 = vsel %vm379, %v371, %v376
      %v381 = vrsqrt.pop %v350
      %v382 = vmul.f32 %v381, %v350
      %v383 = vmul.f32 %v382, %v381
      %v384 = vmul.f32 0.5, %v383
      %v385 = vsub.f32 1.5, %v384
      %v386 = vmul.f32 %v381, %v385
      %vm387 = vweird.f32 %v350
      %vm388 = vweird.f32 %v381
      %vm389 = vmor %vm387, %vm388
      %v390 = vsel %vm389, %v381, %v386
      %v391 = vmul.f32 %v343, %v360
      %v392 = vmul.f32 %v344, %v370
      %v393 = vmul.f32 %v345, %v380
      %v394 = vmul.f32 %v346, %v390
      %v395 = vmax.f32 %v391, 0.0
      %v396 = vmax.f32 %v392, 0.0
      %v397 = vmax.f32 %v393, 0.0
      %v398 = vmax.f32 %v394, 0.0
      %v399 = vmin.f32 %v391, 0.0
      %v400 = vmin.f32 %v392, 0.0
      %v401 = vmin.f32 %v393, 0.0
      %v402 = vmin.f32 %v394, 0.0
      %v403 = vmul.f32 %v399, 1.442695
      %v404 = vpow.pop %v403
      %v405 = vmul.f32 %v400, 1.442695
      %v406 = vpow.pop %v405
      %v407 = vmul.f32 %v401, 1.442695
      %v408 = vpow.pop %v407
      %v409 = vmul.f32 %v402, 1.442695
      %v410 = vpow.pop %v409
      %v411 = vsub.f32 %v404, 1.0
      %v412 = vsub.f32 %v406, 1.0
      %v413 = vsub.f32 %v408, 1.0
      %v414 = vsub.f32 %v410, 1.0
      %v415 = vmul.f32 %v411, 1.6732632
      %v416 = vmul.f32 %v412, 1.6732632
      %v417 = vmul.f32 %v413, 1.6732632
      %v418 = vmul.f32 %v414, 1.6732632
      %v419 = vadd.f32 %v395, %v415
      %v420 = vadd.f32 %v396, %v416
      %v421 = vadd.f32 %v397, %v417
      %v422 = vadd.f32 %v398, %v418
      %v423 = vmul.f32 %v419, 1.050701
      %v424 = vmul.f32 %v420, 1.050701
      %v425 = vmul.f32 %v421, 1.050701
      %v426 = vmul.f32 %v422, 1.050701
      %427 = vst.msk [vmem:[%s170] sm:$0xff] %vm221, %v423
      %428 = vst.msk [vmem:[%s170 + $0x8] sm:$0xff] %vm221, %v424
      %429 = vst.msk [vmem:[%s170 + $0x10] sm:$0xff] %vm221, %v425
      %430 = vst.msk [vmem:[%s170 + $0x18] sm:$0xff] %vm221, %v426
      %p431 = scmp.lt.s32.totalorder %s14, 1
      %s432 = scalar_select %p431, %s14, 1
      %s433 = smul.addr %s432, 4
      %s434 = smul.addr %s433, 8
      %s435 = scalar_lea.vmem %s3, %s434
      // Predicated region
      $region33: #{resnet_generator_forward.12} parent=31 // pred_check
        %p436 = pneg %p100
      $region34: #{resnet_generator_forward.12} parent=31 // pred_check_branch
        %438 = sbr.rel (%p436) target = $region36
      $region35: #{resnet_generator_forward.12} parent=31 // pred_region
        _
      $region36: #{resnet_generator_forward.12} parent=31 // pred_fallthru
        _
    $region32: #{resnet_generator_forward.12} parent=5 // pred_fallthru
      _
    %p439 = scmp.le.s32.totalorder 2, %s9
    // Predicated region
    $region37: #{resnet_generator_forward.12} parent=5 // pred_check
      %p440 = pneg %p439
    $region38: #{resnet_generator_forward.12} parent=5 // pred_check_branch
      %442 = sbr.rel (%p440) target = $region40
    $region39: #{resnet_generator_forward.12} parent=5 // pred_region
      %s443 = ssub.s32 %s9, 2
      // Predicated region
      $region41: #{resnet_generator_forward.12} parent=39 // pred_check
        %p444 = pneg %p106
      $region42: #{resnet_generator_forward.12} parent=39 // pred_check_branch
        %446 = sbr.rel (%p444) target = $region44
      $region43: #{resnet_generator_forward.12} parent=39 // pred_region
        %p447 = scmp.lt.s32.totalorder %s15, 1
        %s448 = scalar_select %p447, %s15, 1
        %s449 = smul.addr %s448, 4
        %s450 = smul.addr %s449, 8
        %s451 = scalar_lea.vmem %s3, %s450
      $region44: #{resnet_generator_forward.12} parent=39 // pred_fallthru
        _
    $region40: #{resnet_generator_forward.12} parent=5 // pred_fallthru
      _
  $region6: #{resnet_generator_forward.12} parent=0 // loop_footer
    %s13 = sadd.s32 1, %s9
  $region7: #{resnet_generator_forward.12} parent=0 // loop_footer_branch
    %8 = sbr.rel target = $region3
  $region8: #{resnet_generator_forward.12} parent=0 // loop_exit
    _

// kernel: resnet_generator_forward.13
$region0: #{resnet_generator_forward.13}
  #allocation0 [shape = 'u32[]', space=smem, size = 0x4, offset = 0x4, fixed_abs, tag = 'smem constant byte address 0x4 - core index']
  #allocation1 [shape = 'u32[72,128]{1,0:T(1,128)}', space=vmem, size = 0x9000, scoped, tag = 'internal scratch']
  %s0 = inlined_call_operand.vmem [shape: f32[2,288,16], index: 0, kind: input, shape index: {}]
  %s1 = inlined_call_operand.vmem [shape: f32[32,288], index: 1, kind: input, shape index: {}]
  %s2 = inlined_call_operand.vmem [shape: f32[32,1], index: 2, kind: input, shape index: {}]
  %s3 = inlined_call_operand.vmem [shape: f32[2,32,16], index: 3, kind: output, shape index: {}]
  %s4 = sld [smem:[#allocation0]]
  $region45: #{resnet_generator_forward.13} parent=0
    _
  %s6 = ssub.s32 1, %s4
  %s7 = scalar_select 0, %s6, %s4
  loop: start=0, step=1, limit=4
  $region2: #{resnet_generator_forward.13} parent=0 // loop_pre_header
    _
  $region3: #{resnet_generator_forward.13} parent=0 // loop_header
    %s9 = sphi 0, %s13
    %p10 = scmp.ge.s32.totalorder %s9, 4
    %s19 = sphi 0, %s21
    %s22 = sphi 0, %s19
    %s23 = sphi 0, %s22
    %s39 = sphi 0, %s23
    %s43 = sphi 0, %s43
    %s45 = sphi 0, %s43
    %s46 = sphi 0, %s45
    %s60 = sphi 0, %s46
    %s64 = sphi 0, %s64
    %s66 = sphi 0, %s64
    %s67 = sphi 0, %s66
    %s81 = sphi 0, %s67
    %s87 = sphi 0, %s89
    %s90 = sphi 0, %s87
    %s91 = sphi 0, %s90
    %s107 = sphi 0, %s91
  $region4: #{resnet_generator_forward.13} parent=0 // loop_header_branch
    %12 = sbr.rel (%p10) target = $region8
  $region5: #{resnet_generator_forward.13} parent=0 // loop_body
    %s14 = ssub.s32 %s9, 1
    %s15 = ssub.s32 %s9, 2
    %s16 = sadd.s32 %s9, 1
    %s17 = ssub.s32 %s9, %s16
    %p18 = scmp.eq.s32.totalorder %s17, 0
    %s20 = sadd.s32 %s19, 1
    %s21 = scalar_select %p18, %s19, %s20
    %p24 = pneg %p18
    %p25 = scmp.eq.s32.totalorder %s9, 1
    %p26 = por %p24, %p25
    %p27 = scmp.ne.s32.totalorder %s19, %s22
    %p28 = scmp.eq.s32.totalorder %s9, 0
    %p29 = por %p27, %p28
    %p30 = scmp.ne.s32.totalorder %s19, %s22
    %p31 = scmp.eq.s32.totalorder %s14, 1
    %p32 = por %p30, %p31
    %p33 = scmp.ne.s32.totalorder %s22, %s23
    %p34 = scmp.eq.s32.totalorder %s14, 0
    %p35 = por %p33, %p34
    %p36 = scmp.ne.s32.totalorder %s22, %s23
    %p37 = scmp.eq.s32.totalorder %s15, 1
    %p38 = por %p36, %p37
    %p40 = scmp.ne.s32.totalorder %s23, %s39
    %p41 = scmp.eq.s32.totalorder %s15, 0
    %p42 = por %p40, %p41
    %s44 = sadd.s32 %s43, 1
    %p47 = scmp.eq.s32.totalorder %s9, 1
    %p48 = scmp.ne.s32.totalorder %s43, %s45
    %p49 = scmp.eq.s32.totalorder %s9, 0
    %p50 = por %p48, %p49
    %p51 = scmp.ne.s32.totalorder %s43, %s45
    %p52 = scmp.eq.s32.totalorder %s14, 1
    %p53 = por %p51, %p52
    %p54 = scmp.ne.s32.totalorder %s45, %s46
    %p55 = scmp.eq.s32.totalorder %s14, 0
    %p56 = por %p54, %p55
    %p57 = scmp.ne.s32.totalorder %s45, %s46
    %p58 = scmp.eq.s32.totalorder %s15, 1
    %p59 = por %p57, %p58
    %p61 = scmp.ne.s32.totalorder %s46, %s60
    %p62 = scmp.eq.s32.totalorder %s15, 0
    %p63 = por %p61, %p62
    %s65 = sadd.s32 %s64, 1
    %p68 = scmp.eq.s32.totalorder %s9, 1
    %p69 = scmp.ne.s32.totalorder %s64, %s66
    %p70 = scmp.eq.s32.totalorder %s9, 0
    %p71 = por %p69, %p70
    %p72 = scmp.ne.s32.totalorder %s64, %s66
    %p73 = scmp.eq.s32.totalorder %s14, 1
    %p74 = por %p72, %p73
    %p75 = scmp.ne.s32.totalorder %s66, %s67
    %p76 = scmp.eq.s32.totalorder %s14, 0
    %p77 = por %p75, %p76
    %p78 = scmp.ne.s32.totalorder %s66, %s67
    %p79 = scmp.eq.s32.totalorder %s15, 1
    %p80 = por %p78, %p79
    %p82 = scmp.ne.s32.totalorder %s67, %s81
    %p83 = scmp.eq.s32.totalorder %s15, 0
    %p84 = por %p82, %p83
    %s85 = ssub.s32 %s9, %s16
    %p86 = scmp.eq.s32.totalorder %s85, 0
    %s88 = sadd.s32 %s87, 1
    %s89 = scalar_select %p86, %s87, %s88
    %p92 = pneg %p86
    %p93 = scmp.eq.s32.totalorder %s9, 1
    %p94 = por %p92, %p93
    %p95 = scmp.ne.s32.totalorder %s87, %s90
    %p96 = scmp.eq.s32.totalorder %s9, 0
    %p97 = por %p95, %p96
    %p98 = scmp.ne.s32.totalorder %s87, %s90
    %p99 = scmp.eq.s32.totalorder %s14, 1
    %p100 = por %p98, %p99
    %p101 = scmp.ne.s32.totalorder %s90, %s91
    %p102 = scmp.eq.s32.totalorder %s14, 0
    %p103 = por %p101, %p102
    %p104 = scmp.ne.s32.totalorder %s90, %s91
    %p105 = scmp.eq.s32.totalorder %s15, 1
    %p106 = por %p104, %p105
    %p108 = scmp.ne.s32.totalorder %s91, %s107
    %p109 = scmp.eq.s32.totalorder %s15, 0
    %p110 = por %p108, %p109
    %p111 = scmp.le.s32.totalorder 1, %s9
    %p112 = scmp.lt.s32.totalorder %s9, 3
    %p113 = pnand %p111, %p112
    %p114 = pneg %p113
    // Predicated region
    $region9: #{resnet_generator_forward.13} parent=5 // pred_check
      _
    $region10: #{resnet_generator_forward.13} parent=5 // pred_check_branch
      %116 = sbr.rel (%p113) target = $region12
    $region11: #{resnet_generator_forward.13} parent=5 // pred_region
      %s117 = ssub.s32 %s9, 1
      // Predicated region
      $region13: #{resnet_generator_forward.13} parent=11 // pred_check
        %p118 = pneg %p56
      $region14: #{resnet_generator_forward.13} parent=11 // pred_check_branch
        %120 = sbr.rel (%p118) target = $region16
      $region15: #{resnet_generator_forward.13} parent=11 // pred_region
        _
      $region16: #{resnet_generator_forward.13} parent=11 // pred_fallthru
        _
      // Predicated region
      $region17: #{resnet_generator_forward.13} parent=11 // pred_check
        %p121 = pneg %p77
      $region18: #{resnet_generator_forward.13} parent=11 // pred_check_branch
        %123 = sbr.rel (%p121) target = $region20
      $region19: #{resnet_generator_forward.13} parent=11 // pred_region
        _
      $region20: #{resnet_generator_forward.13} parent=11 // pred_fallthru
        _
    $region12: #{resnet_generator_forward.13} parent=5 // pred_fallthru
      _
    %p124 = scmp.lt.s32.totalorder %s9, 2
    // Predicated region
    $region21: #{resnet_generator_forward.13} parent=5 // pred_check
      %p125 = pneg %p124
    $region22: #{resnet_generator_forward.13} parent=5 // pred_check_branch
      %127 = sbr.rel (%p125) target = $region24
    $region23: #{resnet_generator_forward.13} parent=5 // pred_region
      // Predicated region
      $region25: #{resnet_generator_forward.13} parent=23 // pred_check
        %p128 = pneg %p29
      $region26: #{resnet_generator_forward.13} parent=23 // pred_check_branch
        %130 = sbr.rel (%p128) target = $region28
      $region27: #{resnet_generator_forward.13} parent=23 // pred_region
        %p131 = scmp.lt.s32.totalorder %s9, 1
        %s132 = scalar_select %p131, %s9, 1
        %s133 = smul.addr %s132, 36
        %s134 = smul.addr %s133, 8
        %s135 = scalar_lea.vmem %s0, %s134
      $region28: #{resnet_generator_forward.13} parent=23 // pred_fallthru
        _
    $region24: #{resnet_generator_forward.13} parent=5 // pred_fallthru
      _
    %p136 = scmp.le.s32.totalorder 1, %s9
    %p137 = scmp.lt.s32.totalorder %s9, 3
    %p138 = pnand %p136, %p137
    %p139 = pneg %p138
    // Predicated region
    $region29: #{resnet_generator_forward.13} parent=5 // pred_check
      _
    $region30: #{resnet_generator_forward.13} parent=5 // pred_check_branch
      %141 = sbr.rel (%p138) target = $region32
    $region31: #{resnet_generator_forward.13} parent=5 // pred_region
      %s142 = ssub.s32 %s9, 1
      %p143 = scmp.lt.s32.totalorder %s14, 1
      %s144 = scalar_select %p143, %s14, 1
      %s145 = smul.addr %s144, 36
      %s146 = smul.addr %s145, 8
      %s147 = scalar_lea.vmem %s0, %s146
      %p148 = pneg %p35
      %p149 = pneg %p32
      %p150 = pneg %p56
      %p151 = pneg %p53
      %p152 = pneg %p77
      %p153 = pneg %p74
      %p154 = pneg %p103
      %p155 = pneg %p100
      %p156 = scmp.lt.s32.totalorder %s14, 1
      %s157 = scalar_select %p156, %s14, 1
      %s158 = smul.addr %s157, 4
      %s159 = smul.addr %s158, 8
      %s160 = scalar_lea.vmem %s3, %s159
      %p161 = scmp.lt.s32.totalorder %s14, 1
      %s162 = scalar_select %p161, %s14, 1
      %s163 = smul.addr %s162, 36
      %s164 = smul.addr %s163, 8
      %s165 = scalar_lea.vmem %s0, %s164
      %p166 = scmp.lt.s32.totalorder %s14, 1
      %s167 = scalar_select %p166, %s14, 1
      %s168 = smul.addr %s167, 4
      %s169 = smul.addr %s168, 8
      %s170 = scalar_lea.vmem %s3, %s169
      %v171 = vld [vmem:[%s1] sm:$0xff]
      %v172 = vld [vmem:[%s1 + $0x8] sm:$0xff]
      %v173 = vld [vmem:[%s1 + $0x10] sm:$0xff]
      %v174 = vld [vmem:[%s1 + $0x18] sm:$0xff]
      %v175 = vld [vmem:[%s1 + $0x20] sm:$0xff]
      %v176 = vld [vmem:[%s1 + $0x28] sm:$0xff]
      %v177 = vld [vmem:[%s1 + $0x30] sm:$0xff]
      %v178 = vld [vmem:[%s1 + $0x38] sm:$0xff]
      %v179 = vld [vmem:[%s1 + $0x40] sm:$0xff]
      %v180 = vld [vmem:[%s1 + $0x48] sm:$0xff]
      %v181 = vld [vmem:[%s1 + $0x50] sm:$0xff]
      %v182 = vld [vmem:[%s1 + $0x58] sm:$0xff]
      %v183 = vld [vmem:[%s165] sm:$0xff]
      %v184 = vld [vmem:[%s165 + $0x8] sm:$0xff]
      %v185 = vld [vmem:[%s165 + $0x10] sm:$0xff]
      %v186 = vld [vmem:[%s165 + $0x18] sm:$0xff]
      %v187 = vld [vmem:[%s165 + $0x20] sm:$0xff]
      %v188 = vld [vmem:[%s165 + $0x28] sm:$0xff]
      %v189 = vld [vmem:[%s165 + $0x30] sm:$0xff]
      %v190 = vld [vmem:[%s165 + $0x38] sm:$0xff]
      %v191 = vld [vmem:[%s165 + $0x40] sm:$0xff]
      %v192 = vld [vmem:[%s165 + $0x48] sm:$0xff]
      %v193 = vld [vmem:[%s165 + $0x50] sm:$0xff]
      %v194 = vld [vmem:[%s165 + $0x58] sm:$0xff]
      %v195 = vld [vmem:[%s165 + $0x60] sm:$0xff]
      %v196 = vld [vmem:[%s165 + $0x68] sm:$0xff]
      %v197 = vld [vmem:[%s165 + $0x70] sm:$0xff]
      %v198 = vld [vmem:[%s165 + $0x78] sm:$0xff]
      %v199 = vld [vmem:[%s165 + $0x80] sm:$0xff]
      %v200 = vld [vmem:[%s165 + $0x88] sm:$0xff]
      %v201 = vld [vmem:[%s165 + $0x90] sm:$0xff]
      %v202 = vld [vmem:[%s165 + $0x98] sm:$0xff]
      %v203 = vld [vmem:[%s165 + $0xa0] sm:$0xff]
      %v204 = vld [vmem:[%s165 + $0xa8] sm:$0xff]
      %v205 = vld [vmem:[%s165 + $0xb0] sm:$0xff]
      %v206 = vld [vmem:[%s165 + $0xb8] sm:$0xff]
      %v207 = vld [vmem:[%s165 + $0xc0] sm:$0xff]
      %v208 = vld [vmem:[%s165 + $0xc8] sm:$0xff]
      %v209 = vld [vmem:[%s165 + $0xd0] sm:$0xff]
      %v210 = vld [vmem:[%s165 + $0xd8] sm:$0xff]
      %v211 = vld [vmem:[%s165 + $0xe0] sm:$0xff]
      %v212 = vld [vmem:[%s165 + $0xe8] sm:$0xff]
      %v213 = vld [vmem:[%s165 + $0xf0] sm:$0xff]
      %v214 = vld [vmem:[%s165 + $0xf8] sm:$0xff]
      %v215 = vld [vmem:[%s165 + $0x100] sm:$0xff]
      %v216 = vld [vmem:[%s165 + $0x108] sm:$0xff]
      %v217 = vld [vmem:[%s165 + $0x110] sm:$0xff]
      %v218 = vld [vmem:[%s165 + $0x118] sm:$0xff]
      %v219 = vld [vmem:[%s2] sm:$0xff]
      %v220 = vld [vmem:[%s2 + $0x8] sm:$0xff]
      %v221 = vld [vmem:[%s2 + $0x10] sm:$0xff]
      %v222 = vld [vmem:[%s2 + $0x18] sm:$0xff]
      %224 = vset.pattern.permute.xlu0 0
      %225 = vperm.xlu0 %224, %v219
      %v226 = vpop.permute.xlu0 %225
      %229 = vset.pattern.permute.xlu0 0
      %230 = vperm.xlu0 %229, %v220
      %v231 = vpop.permute.xlu0 %230
      %234 = vset.pattern.permute.xlu0 0
      %235 = vperm.xlu0 %234, %v221
      %v236 = vpop.permute.xlu0 %235
      %239 = vset.pattern.permute.xlu0 0
      %240 = vperm.xlu0 %239, %v222
      %v241 = vpop.permute.xlu0 %240
      %vm243 = vcmask 261120
      %v245 = vsel %vm243, %v173, 0
      %v248 = vsel %vm243, %v176, 0
      %v251 = vsel %vm243, %v179, 0
      %v254 = vsel %vm243, %v182, 0
      %256 = vmatpush.msra.mxu0 %v198
      %257 = vmatpush.msra.mxu0 %v197
      %258 = vmatpush.msra.mxu0 %v196
      %259 = vmatpush.msra.mxu0 %v195
      %260 = vmatpush.msra.mxu0 %v194
      %261 = vmatpush.msra.mxu0 %v193
      %262 = vmatpush.msra.mxu0 %v192
      %263 = vmatpush.msra.mxu0 %v191
      %264 = vmatpush.msra.mxu0 %v190
      %265 = vmatpush.msra.mxu0 %v189
      %266 = vmatpush.msra.mxu0 %v188
      %267 = vmatpush.msra.mxu0 %v187
      %268 = vmatpush.msra.mxu0 %v186
      %269 = vmatpush.msra.mxu0 %v185
      %270 = vmatpush.msra.mxu0 %v184
      %271 = vmatpush.msra.mxu0 %v183
      %272 = vmatmul.f32.gmra.mxu0 %v171
      %v273 = vpop.f32.mrf.mxu0
      %v274 = vadd.f32 %v226, %v273
      %275 = vmatmul.f32.gmra.mxu0 %v174
      %v276 = vpop.f32.mrf.mxu0
      %v277 = vadd.f32 %v231, %v276
      %278 = vmatmul.f32.gmra.mxu0 %v177
      %v279 = vpop.f32.mrf.mxu0
      %v280 = vadd.f32 %v236, %v279
      %281 = vmatmul.f32.gmra.mxu0 %v180
      %v282 = vpop.f32.mrf.mxu0
      %v283 = vadd.f32 %v241, %v282
      %284 = vdwg.mxu0
      %285 = vmatpush.msra.mxu0 %v214
      %286 = vmatpush.msra.mxu0 %v213
      %287 = vmatpush.msra.mxu0 %v212
      %288 = vmatpush.msra.mxu0 %v211
      %289 = vmatpush.msra.mxu0 %v210
      %290 = vmatpush.msra.mxu0 %v209
      %291 = vmatpush.msra.mxu0 %v208
      %292 = vmatpush.msra.mxu0 %v207
      %293 = vmatpush.msra.mxu0 %v206
      %294 = vmatpush.msra.mxu0 %v205
      %295 = vmatpush.msra.mxu0 %v204
      %296 = vmatpush.msra.mxu0 %v203
      %297 = vmatpush.msra.mxu0 %v202
      %298 = vmatpush.msra.mxu0 %v201
      %299 = vmatpush.msra.mxu0 %v200
      %300 = vmatpush.msra.mxu0 %v199
      %301 = vmatmul.f32.gmra.mxu0 %v172
      %v302 = vpop.f32.mrf.mxu0
      %v303 = vadd.f32 %v274, %v302
      %304 = vmatmul.f32.gmra.mxu0 %v175
      %v305 = vpop.f32.mrf.mxu0
      %v306 = vadd.f32 %v277, %v305
      %307 = vmatmul.f32.gmra.mxu0 %v178
      %v308 = vpop.f32.mrf.mxu0
      %v309 = vadd.f32 %v280, %v308
      %310 = vmatmul.f32.gmra.mxu0 %v181
      %v311 = vpop.f32.mrf.mxu0
      %v312 = vadd.f32 %v283, %v311
      %313 = vdwg.mxu0
      %314 = vmatpush.msra.mxu0 0.0
      %315 = vmatpush.msra.mxu0 0.0
      %316 = vmatpush.msra.mxu0 0.0
      %317 = vmatpush.msra.mxu0 0.0
      %318 = vmatpush.msra.mxu0 0.0
      %319 = vmatpush.msra.mxu0 0.0
      %320 = vmatpush.msra.mxu0 0.0
      %321 = vmatpush.msra.mxu0 0.0
      %322 = vmatpush.msra.mxu0 0.0
      %323 = vmatpush.msra.mxu0 0.0
      %324 = vmatpush.msra.mxu0 0.0
      %325 = vmatpush.msra.mxu0 0.0
      %326 = vmatpush.msra.mxu0 %v218
      %327 = vmatpush.msra.mxu0 %v217
      %328 = vmatpush.msra.mxu0 %v216
      %329 = vmatpush.msra.mxu0 %v215
      %330 = vmatmul.f32.gmra.mxu0 %v245
      %v331 = vpop.f32.mrf.mxu0
      %v332 = vadd.f32 %v303, %v331
      %333 = vmatmul.f32.gmra.mxu0 %v248
      %v334 = vpop.f32.mrf.mxu0
      %v335 = vadd.f32 %v306, %v334
      %336 = vmatmul.f32.gmra.mxu0 %v251
      %v337 = vpop.f32.mrf.mxu0
      %v338 = vadd.f32 %v309, %v337
      %339 = vmatmul.f32.gmra.mxu0 %v254
      %v340 = vpop.f32.mrf.mxu0
      %v341 = vadd.f32 %v312, %v340
      %342 = vdwg.mxu0
      %vm343 = vcmask 130048
      %v344 = vsel %vm343, %v332, 0.0
      %345 = vadd.xlane.f32.xlu0 %v344
      %v346 = vpop.xlane.xlu0 %345
      %v347 = vsel %vm343, %v335, 0.0
      %348 = vadd.xlane.f32.xlu0 %v347
      %v349 = vpop.xlane.xlu0 %348
      %v350 = vsel %vm343, %v338, 0.0
      %351 = vadd.xlane.f32.xlu0 %v350
      %v352 = vpop.xlane.xlu0 %351
      %v353 = vsel %vm343, %v341, 0.0
      %354 = vadd.xlane.f32.xlu0 %v353
      %v355 = vpop.xlane.xlu0 %354
      %v356 = vrcp.pop 16.0
      %v357 = vmul.f32 16.0, %v356
      %v358 = vsub.f32 1.0, %v357
      %v359 = vmul.f32 %v356, %v358
      %v360 = vadd.f32 %v356, %v359
      %vm361 = vweird.f32 %v356
      %v362 = vsel %vm361, %v356, %v360
      %v363 = vmul.f32 %v346, %v362
      %v364 = vmul.f32 %v349, %v362
      %v365 = vmul.f32 %v352, %v362
      %v366 = vmul.f32 %v355, %v362
      %v367 = vmul.f32 %v332, %v332
      %v368 = vmul.f32 %v335, %v335
      %v369 = vmul.f32 %v338, %v338
      %v370 = vmul.f32 %v341, %v341
      %v371 = vsel %vm343, %v367, 0.0
      %372 = vadd.xlane.f32.xlu0 %v371
      %v373 = vpop.xlane.xlu0 %372
      %v374 = vsel %vm343, %v368, 0.0
      %375 = vadd.xlane.f32.xlu0 %v374
      %v376 = vpop.xlane.xlu0 %375
      %v377 = vsel %vm343, %v369, 0.0
      %378 = vadd.xlane.f32.xlu0 %v377
      %v379 = vpop.xlane.xlu0 %378
      %v380 = vsel %vm343, %v370, 0.0
      %381 = vadd.xlane.f32.xlu0 %v380
      %v382 = vpop.xlane.xlu0 %381
      %v383 = vmul.f32 %v373, %v362
      %v384 = vmul.f32 %v376, %v362
      %v385 = vmul.f32 %v379, %v362
      %v386 = vmul.f32 %v382, %v362
      %v387 = vmul.f32 %v363, %v363
      %v388 = vmul.f32 %v364, %v364
      %v389 = vmul.f32 %v365, %v365
      %v390 = vmul.f32 %v366, %v366
      %v391 = vsub.f32 %v383, %v387
      %v392 = vsub.f32 %v384, %v388
      %v393 = vsub.f32 %v385, %v389
      %v394 = vsub.f32 %v386, %v390
      %v395 = vsub.f32 %v332, %v363
      %v396 = vsub.f32 %v335, %v364
      %v397 = vsub.f32 %v338, %v365
      %v398 = vsub.f32 %v341, %v366
      %v399 = vadd.f32 %v391, 1e-05
      %v400 = vadd.f32 %v392, 1e-05
      %v401 = vadd.f32 %v393, 1e-05
      %v402 = vadd.f32 %v394, 1e-05
      %v403 = vrsqrt.pop %v399
      %v404 = vmul.f32 %v403, %v399
      %v405 = vmul.f32 %v404, %v403
      %v406 = vmul.f32 0.5, %v405
      %v407 = vsub.f32 1.5, %v406
      %v408 = vmul.f32 %v403, %v407
      %vm409 = vweird.f32 %v399
      %vm410 = vweird.f32 %v403
      %vm411 = vmor %vm409, %vm410
      %v412 = vsel %vm411, %v403, %v408
      %v413 = vrsqrt.pop %v400
      %v414 = vmul.f32 %v413, %v400
      %v415 = vmul.f32 %v414, %v413
      %v416 = vmul.f32 0.5, %v415
      %v417 = vsub.f32 1.5, %v416
      %v418 = vmul.f32 %v413, %v417
      %vm419 = vweird.f32 %v400
      %vm420 = vweird.f32 %v413
      %vm421 = vmor %vm419, %vm420
      %v422 = vsel %vm421, %v413, %v418
      %v423 = vrsqrt.pop %v401
      %v424 = vmul.f32 %v423, %v401
      %v425 = vmul.f32 %v424, %v423
      %v426 = vmul.f32 0.5, %v425
      %v427 = vsub.f32 1.5, %v426
      %v428 = vmul.f32 %v423, %v427
      %vm429 = vweird.f32 %v401
      %vm430 = vweird.f32 %v423
      %vm431 = vmor %vm429, %vm430
      %v432 = vsel %vm431, %v423, %v428
      %v433 = vrsqrt.pop %v402
      %v434 = vmul.f32 %v433, %v402
      %v435 = vmul.f32 %v434, %v433
      %v436 = vmul.f32 0.5, %v435
      %v437 = vsub.f32 1.5, %v436
      %v438 = vmul.f32 %v433, %v437
      %vm439 = vweird.f32 %v402
      %vm440 = vweird.f32 %v433
      %vm441 = vmor %vm439, %vm440
      %v442 = vsel %vm441, %v433, %v438
      %v443 = vmul.f32 %v395, %v412
      %v444 = vmul.f32 %v396, %v422
      %v445 = vmul.f32 %v397, %v432
      %v446 = vmul.f32 %v398, %v442
      %v447 = vmax.f32 %v443, 0.0
      %v448 = vmax.f32 %v444, 0.0
      %v449 = vmax.f32 %v445, 0.0
      %v450 = vmax.f32 %v446, 0.0
      %451 = vst.msk [vmem:[%s170] sm:$0xff] %vm343, %v447
      %452 = vst.msk [vmem:[%s170 + $0x8] sm:$0xff] %vm343, %v448
      %453 = vst.msk [vmem:[%s170 + $0x10] sm:$0xff] %vm343, %v449
      %454 = vst.msk [vmem:[%s170 + $0x18] sm:$0xff] %vm343, %v450
      %p455 = scmp.lt.s32.totalorder %s14, 1
      %s456 = scalar_select %p455, %s14, 1
      %s457 = smul.addr %s456, 4
      %s458 = smul.addr %s457, 8
      %s459 = scalar_lea.vmem %s3, %s458
      // Predicated region
      $region33: #{resnet_generator_forward.13} parent=31 // pred_check
        %p460 = pneg %p100
      $region34: #{resnet_generator_forward.13} parent=31 // pred_check_branch
        %462 = sbr.rel (%p460) target = $region36
      $region35: #{resnet_generator_forward.13} parent=31 // pred_region
        _
      $region36: #{resnet_generator_forward.13} parent=31 // pred_fallthru
        _
    $region32: #{resnet_generator_forward.13} parent=5 // pred_fallthru
      _
    %p463 = scmp.le.s32.totalorder 2, %s9
    // Predicated region
    $region37: #{resnet_generator_forward.13} parent=5 // pred_check
      %p464 = pneg %p463
    $region38: #{resnet_generator_forward.13} parent=5 // pred_check_branch
      %466 = sbr.rel (%p464) target = $region40
    $region39: #{resnet_generator_forward.13} parent=5 // pred_region
      %s467 = ssub.s32 %s9, 2
      // Predicated region
      $region41: #{resnet_generator_forward.13} parent=39 // pred_check
        %p468 = pneg %p106
      $region42: #{resnet_generator_forward.13} parent=39 // pred_check_branch
        %470 = sbr.rel (%p468) target = $region44
      $region43: #{resnet_generator_forward.13} parent=39 // pred_region
        %p471 = scmp.lt.s32.totalorder %s15, 1
        %s472 = scalar_select %p471, %s15, 1
        %s473 = smul.addr %s472, 4
        %s474 = smul.addr %s473, 8
        %s475 = scalar_lea.vmem %s3, %s474
      $region44: #{resnet_generator_forward.13} parent=39 // pred_fallthru
        _
    $region40: #{resnet_generator_forward.13} parent=5 // pred_fallthru
      _
  $region6: #{resnet_generator_forward.13} parent=0 // loop_footer
    %s13 = sadd.s32 1, %s9
  $region7: #{resnet_generator_forward.13} parent=0 // loop_footer_branch
    %8 = sbr.rel target = $region3
  $region8: #{resnet_generator_forward.13} parent=0 // loop_exit
    _

// kernel: resnet_generator_forward.14
$region0: #{resnet_generator_forward.14}
  #allocation0 [shape = 'u32[]', space=smem, size = 0x4, offset = 0x4, fixed_abs, tag = 'smem constant byte address 0x4 - core index']
  #allocation1 [shape = 'u32[72,128]{1,0:T(1,128)}', space=vmem, size = 0x9000, scoped, tag = 'internal scratch']
  %s0 = inlined_call_operand.vmem [shape: f32[2,288,16], index: 0, kind: input, shape index: {}]
  %s1 = inlined_call_operand.vmem [shape: f32[2,32,16], index: 1, kind: input, shape index: {}]
  %s2 = inlined_call_operand.vmem [shape: f32[32,288], index: 2, kind: input, shape index: {}]
  %s3 = inlined_call_operand.vmem [shape: f32[32,1], index: 3, kind: input, shape index: {}]
  %s4 = inlined_call_operand.vmem [shape: f32[2,32,16], index: 4, kind: output, shape index: {}]
  %s5 = sld [smem:[#allocation0]]
  $region49: #{resnet_generator_forward.14} parent=0
    _
  %s7 = ssub.s32 1, %s5
  %s8 = scalar_select 0, %s7, %s5
  loop: start=0, step=1, limit=4
  $region2: #{resnet_generator_forward.14} parent=0 // loop_pre_header
    _
  $region3: #{resnet_generator_forward.14} parent=0 // loop_header
    %s10 = sphi 0, %s14
    %p11 = scmp.ge.s32.totalorder %s10, 4
    %s20 = sphi 0, %s22
    %s23 = sphi 0, %s20
    %s24 = sphi 0, %s23
    %s40 = sphi 0, %s24
    %s46 = sphi 0, %s48
    %s49 = sphi 0, %s46
    %s50 = sphi 0, %s49
    %s66 = sphi 0, %s50
    %s70 = sphi 0, %s70
    %s72 = sphi 0, %s70
    %s73 = sphi 0, %s72
    %s87 = sphi 0, %s73
    %s91 = sphi 0, %s91
    %s93 = sphi 0, %s91
    %s94 = sphi 0, %s93
    %s108 = sphi 0, %s94
    %s114 = sphi 0, %s116
    %s117 = sphi 0, %s114
    %s118 = sphi 0, %s117
    %s134 = sphi 0, %s118
  $region4: #{resnet_generator_forward.14} parent=0 // loop_header_branch
    %13 = sbr.rel (%p11) target = $region8
  $region5: #{resnet_generator_forward.14} parent=0 // loop_body
    %s15 = ssub.s32 %s10, 1
    %s16 = ssub.s32 %s10, 2
    %s17 = sadd.s32 %s10, 1
    %s18 = ssub.s32 %s10, %s17
    %p19 = scmp.eq.s32.totalorder %s18, 0
    %s21 = sadd.s32 %s20, 1
    %s22 = scalar_select %p19, %s20, %s21
    %p25 = pneg %p19
    %p26 = scmp.eq.s32.totalorder %s10, 1
    %p27 = por %p25, %p26
    %p28 = scmp.ne.s32.totalorder %s20, %s23
    %p29 = scmp.eq.s32.totalorder %s10, 0
    %p30 = por %p28, %p29
    %p31 = scmp.ne.s32.totalorder %s20, %s23
    %p32 = scmp.eq.s32.totalorder %s15, 1
    %p33 = por %p31, %p32
    %p34 = scmp.ne.s32.totalorder %s23, %s24
    %p35 = scmp.eq.s32.totalorder %s15, 0
    %p36 = por %p34, %p35
    %p37 = scmp.ne.s32.totalorder %s23, %s24
    %p38 = scmp.eq.s32.totalorder %s16, 1
    %p39 = por %p37, %p38
    %p41 = scmp.ne.s32.totalorder %s24, %s40
    %p42 = scmp.eq.s32.totalorder %s16, 0
    %p43 = por %p41, %p42
    %s44 = ssub.s32 %s10, %s17
    %p45 = scmp.eq.s32.totalorder %s44, 0
    %s47 = sadd.s32 %s46, 1
    %s48 = scalar_select %p45, %s46, %s47
    %p51 = pneg %p45
    %p52 = scmp.eq.s32.totalorder %s10, 1
    %p53 = por %p51, %p52
    %p54 = scmp.ne.s32.totalorder %s46, %s49
    %p55 = scmp.eq.s32.totalorder %s10, 0
    %p56 = por %p54, %p55
    %p57 = scmp.ne.s32.totalorder %s46, %s49
    %p58 = scmp.eq.s32.totalorder %s15, 1
    %p59 = por %p57, %p58
    %p60 = scmp.ne.s32.totalorder %s49, %s50
    %p61 = scmp.eq.s32.totalorder %s15, 0
    %p62 = por %p60, %p61
    %p63 = scmp.ne.s32.totalorder %s49, %s50
    %p64 = scmp.eq.s32.totalorder %s16, 1
    %p65 = por %p63, %p64
    %p67 = scmp.ne.s32.totalorder %s50, %s66
    %p68 = scmp.eq.s32.totalorder %s16, 0
    %p69 = por %p67, %p68
    %s71 = sadd.s32 %s70, 1
    %p74 = scmp.eq.s32.totalorder %s10, 1
    %p75 = scmp.ne.s32.totalorder %s70, %s72
    %p76 = scmp.eq.s32.totalorder %s10, 0
    %p77 = por %p75, %p76
    %p78 = scmp.ne.s32.totalorder %s70, %s72
    %p79 = scmp.eq.s32.totalorder %s15, 1
    %p80 = por %p78, %p79
    %p81 = scmp.ne.s32.totalorder %s72, %s73
    %p82 = scmp.eq.s32.totalorder %s15, 0
    %p83 = por %p81, %p82
    %p84 = scmp.ne.s32.totalorder %s72, %s73
    %p85 = scmp.eq.s32.totalorder %s16, 1
    %p86 = por %p84, %p85
    %p88 = scmp.ne.s32.totalorder %s73, %s87
    %p89 = scmp.eq.s32.totalorder %s16, 0
    %p90 = por %p88, %p89
    %s92 = sadd.s32 %s91, 1
    %p95 = scmp.eq.s32.totalorder %s10, 1
    %p96 = scmp.ne.s32.totalorder %s91, %s93
    %p97 = scmp.eq.s32.totalorder %s10, 0
    %p98 = por %p96, %p97
    %p99 = scmp.ne.s32.totalorder %s91, %s93
    %p100 = scmp.eq.s32.totalorder %s15, 1
    %p101 = por %p99, %p100
    %p102 = scmp.ne.s32.totalorder %s93, %s94
    %p103 = scmp.eq.s32.totalorder %s15, 0
    %p104 = por %p102, %p103
    %p105 = scmp.ne.s32.totalorder %s93, %s94
    %p106 = scmp.eq.s32.totalorder %s16, 1
    %p107 = por %p105, %p106
    %p109 = scmp.ne.s32.totalorder %s94, %s108
    %p110 = scmp.eq.s32.totalorder %s16, 0
    %p111 = por %p109, %p110
    %s112 = ssub.s32 %s10, %s17
    %p113 = scmp.eq.s32.totalorder %s112, 0
    %s115 = sadd.s32 %s114, 1
    %s116 = scalar_select %p113, %s114, %s115
    %p119 = pneg %p113
    %p120 = scmp.eq.s32.totalorder %s10, 1
    %p121 = por %p119, %p120
    %p122 = scmp.ne.s32.totalorder %s114, %s117
    %p123 = scmp.eq.s32.totalorder %s10, 0
    %p124 = por %p122, %p123
    %p125 = scmp.ne.s32.totalorder %s114, %s117
    %p126 = scmp.eq.s32.totalorder %s15, 1
    %p127 = por %p125, %p126
    %p128 = scmp.ne.s32.totalorder %s117, %s118
    %p129 = scmp.eq.s32.totalorder %s15, 0
    %p130 = por %p128, %p129
    %p131 = scmp.ne.s32.totalorder %s117, %s118
    %p132 = scmp.eq.s32.totalorder %s16, 1
    %p133 = por %p131, %p132
    %p135 = scmp.ne.s32.totalorder %s118, %s134
    %p136 = scmp.eq.s32.totalorder %s16, 0
    %p137 = por %p135, %p136
    %p138 = scmp.le.s32.totalorder 1, %s10
    %p139 = scmp.lt.s32.totalorder %s10, 3
    %p140 = pnand %p138, %p139
    %p141 = pneg %p140
    // Predicated region
    $region9: #{resnet_generator_forward.14} parent=5 // pred_check
      _
    $region10: #{resnet_generator_forward.14} parent=5 // pred_check_branch
      %143 = sbr.rel (%p140) target = $region12
    $region11: #{resnet_generator_forward.14} parent=5 // pred_region
      %s144 = ssub.s32 %s10, 1
      // Predicated region
      $region13: #{resnet_generator_forward.14} parent=11 // pred_check
        %p145 = pneg %p83
      $region14: #{resnet_generator_forward.14} parent=11 // pred_check_branch
        %147 = sbr.rel (%p145) target = $region16
      $region15: #{resnet_generator_forward.14} parent=11 // pred_region
        _
      $region16: #{resnet_generator_forward.14} parent=11 // pred_fallthru
        _
      // Predicated region
      $region17: #{resnet_generator_forward.14} parent=11 // pred_check
        %p148 = pneg %p104
      $region18: #{resnet_generator_forward.14} parent=11 // pred_check_branch
        %150 = sbr.rel (%p148) target = $region20
      $region19: #{resnet_generator_forward.14} parent=11 // pred_region
        _
      $region20: #{resnet_generator_forward.14} parent=11 // pred_fallthru
        _
    $region12: #{resnet_generator_forward.14} parent=5 // pred_fallthru
      _
    %p151 = scmp.lt.s32.totalorder %s10, 2
    // Predicated region
    $region21: #{resnet_generator_forward.14} parent=5 // pred_check
      %p152 = pneg %p151
    $region22: #{resnet_generator_forward.14} parent=5 // pred_check_branch
      %154 = sbr.rel (%p152) target = $region24
    $region23: #{resnet_generator_forward.14} parent=5 // pred_region
      // Predicated region
      $region25: #{resnet_generator_forward.14} parent=23 // pred_check
        %p155 = pneg %p30
      $region26: #{resnet_generator_forward.14} parent=23 // pred_check_branch
        %157 = sbr.rel (%p155) target = $region28
      $region27: #{resnet_generator_forward.14} parent=23 // pred_region
        %p158 = scmp.lt.s32.totalorder %s10, 1
        %s159 = scalar_select %p158, %s10, 1
        %s160 = smul.addr %s159, 36
        %s161 = smul.addr %s160, 8
        %s162 = scalar_lea.vmem %s0, %s161
      $region28: #{resnet_generator_forward.14} parent=23 // pred_fallthru
        _
      // Predicated region
      $region29: #{resnet_generator_forward.14} parent=23 // pred_check
        %p163 = pneg %p56
      $region30: #{resnet_generator_forward.14} parent=23 // pred_check_branch
        %165 = sbr.rel (%p163) target = $region32
      $region31: #{resnet_generator_forward.14} parent=23 // pred_region
        %p166 = scmp.lt.s32.totalorder %s10, 1
        %s167 = scalar_select %p166, %s10, 1
        %s168 = smul.addr %s167, 4
        %s169 = smul.addr %s168, 8
        %s170 = scalar_lea.vmem %s1, %s169
      $region32: #{resnet_generator_forward.14} parent=23 // pred_fallthru
        _
    $region24: #{resnet_generator_forward.14} parent=5 // pred_fallthru
      _
    %p171 = scmp.le.s32.totalorder 1, %s10
    %p172 = scmp.lt.s32.totalorder %s10, 3
    %p173 = pnand %p171, %p172
    %p174 = pneg %p173
    // Predicated region
    $region33: #{resnet_generator_forward.14} parent=5 // pred_check
      _
    $region34: #{resnet_generator_forward.14} parent=5 // pred_check_branch
      %176 = sbr.rel (%p173) target = $region36
    $region35: #{resnet_generator_forward.14} parent=5 // pred_region
      %s177 = ssub.s32 %s10, 1
      %p178 = scmp.lt.s32.totalorder %s15, 1
      %s179 = scalar_select %p178, %s15, 1
      %s180 = smul.addr %s179, 36
      %s181 = smul.addr %s180, 8
      %s182 = scalar_lea.vmem %s0, %s181
      %p183 = pneg %p36
      %p184 = pneg %p33
      %p185 = scmp.lt.s32.totalorder %s15, 1
      %s186 = scalar_select %p185, %s15, 1
      %s187 = smul.addr %s186, 4
      %s188 = smul.addr %s187, 8
      %s189 = scalar_lea.vmem %s1, %s188
      %p190 = pneg %p62
      %p191 = pneg %p59
      %p192 = pneg %p83
      %p193 = pneg %p80
      %p194 = pneg %p104
      %p195 = pneg %p101
      %p196 = pneg %p130
      %p197 = pneg %p127
      %p198 = scmp.lt.s32.totalorder %s15, 1
      %s199 = scalar_select %p198, %s15, 1
      %s200 = smul.addr %s199, 4
      %s201 = smul.addr %s200, 8
      %s202 = scalar_lea.vmem %s4, %s201
      %p203 = scmp.lt.s32.totalorder %s15, 1
      %s204 = scalar_select %p203, %s15, 1
      %s205 = smul.addr %s204, 36
      %s206 = smul.addr %s205, 8
      %s207 = scalar_lea.vmem %s0, %s206
      %p208 = scmp.lt.s32.totalorder %s15, 1
      %s209 = scalar_select %p208, %s15, 1
      %s210 = smul.addr %s209, 4
      %s211 = smul.addr %s210, 8
      %s212 = scalar_lea.vmem %s1, %s211
      %p213 = scmp.lt.s32.totalorder %s15, 1
      %s214 = scalar_select %p213, %s15, 1
      %s215 = smul.addr %s214, 4
      %s216 = smul.addr %s215, 8
      %s217 = scalar_lea.vmem %s4, %s216
      %v218 = vld [vmem:[%s2] sm:$0xff]
      %v219 = vld [vmem:[%s2 + $0x8] sm:$0xff]
      %v220 = vld [vmem:[%s2 + $0x10] sm:$0xff]
      %v221 = vld [vmem:[%s2 + $0x18] sm:$0xff]
      %v222 = vld [vmem:[%s2 + $0x20] sm:$0xff]
      %v223 = vld [vmem:[%s2 + $0x28] sm:$0xff]
      %v224 = vld [vmem:[%s2 + $0x30] sm:$0xff]
      %v225 = vld [vmem:[%s2 + $0x38] sm:$0xff]
      %v226 = vld [vmem:[%s2 + $0x40] sm:$0xff]
      %v227 = vld [vmem:[%s2 + $0x48] sm:$0xff]
      %v228 = vld [vmem:[%s2 + $0x50] sm:$0xff]
      %v229 = vld [vmem:[%s2 + $0x58] sm:$0xff]
      %v230 = vld [vmem:[%s207] sm:$0xff]
      %v231 = vld [vmem:[%s207 + $0x8] sm:$0xff]
      %v232 = vld [vmem:[%s207 + $0x10] sm:$0xff]
      %v233 = vld [vmem:[%s207 + $0x18] sm:$0xff]
      %v234 = vld [vmem:[%s207 + $0x20] sm:$0xff]
      %v235 = vld [vmem:[%s207 + $0x28] sm:$0xff]
      %v236 = vld [vmem:[%s207 + $0x30] sm:$0xff]
      %v237 = vld [vmem:[%s207 + $0x38] sm:$0xff]
      %v238 = vld [vmem:[%s207 + $0x40] sm:$0xff]
      %v239 = vld [vmem:[%s207 + $0x48] sm:$0xff]
      %v240 = vld [vmem:[%s207 + $0x50] sm:$0xff]
      %v241 = vld [vmem:[%s207 + $0x58] sm:$0xff]
      %v242 = vld [vmem:[%s207 + $0x60] sm:$0xff]
      %v243 = vld [vmem:[%s207 + $0x68] sm:$0xff]
      %v244 = vld [vmem:[%s207 + $0x70] sm:$0xff]
      %v245 = vld [vmem:[%s207 + $0x78] sm:$0xff]
      %v246 = vld [vmem:[%s207 + $0x80] sm:$0xff]
      %v247 = vld [vmem:[%s207 + $0x88] sm:$0xff]
      %v248 = vld [vmem:[%s207 + $0x90] sm:$0xff]
      %v249 = vld [vmem:[%s207 + $0x98] sm:$0xff]
      %v250 = vld [vmem:[%s207 + $0xa0] sm:$0xff]
      %v251 = vld [vmem:[%s207 + $0xa8] sm:$0xff]
      %v252 = vld [vmem:[%s207 + $0xb0] sm:$0xff]
      %v253 = vld [vmem:[%s207 + $0xb8] sm:$0xff]
      %v254 = vld [vmem:[%s207 + $0xc0] sm:$0xff]
      %v255 = vld [vmem:[%s207 + $0xc8] sm:$0xff]
      %v256 = vld [vmem:[%s207 + $0xd0] sm:$0xff]
      %v257 = vld [vmem:[%s207 + $0xd8] sm:$0xff]
      %v258 = vld [vmem:[%s207 + $0xe0] sm:$0xff]
      %v259 = vld [vmem:[%s207 + $0xe8] sm:$0xff]
      %v260 = vld [vmem:[%s207 + $0xf0] sm:$0xff]
      %v261 = vld [vmem:[%s207 + $0xf8] sm:$0xff]
      %v262 = vld [vmem:[%s207 + $0x100] sm:$0xff]
      %v263 = vld [vmem:[%s207 + $0x108] sm:$0xff]
      %v264 = vld [vmem:[%s207 + $0x110] sm:$0xff]
      %v265 = vld [vmem:[%s207 + $0x118] sm:$0xff]
      %v266 = vld [vmem:[%s3] sm:$0xff]
      %v267 = vld [vmem:[%s3 + $0x8] sm:$0xff]
      %v268 = vld [vmem:[%s3 + $0x10] sm:$0xff]
      %v269 = vld [vmem:[%s3 + $0x18] sm:$0xff]
      %271 = vset.pattern.permute.xlu0 0
      %272 = vperm.xlu0 %271, %v266
      %v273 = vpop.permute.xlu0 %272
      %276 = vset.pattern.permute.xlu0 0
      %277 = vperm.xlu0 %276, %v267
      %v278 = vpop.permute.xlu0 %277
      %281 = vset.pattern.permute.xlu0 0
      %282 = vperm.xlu0 %281, %v268
      %v283 = vpop.permute.xlu0 %282
      %286 = vset.pattern.permute.xlu0 0
      %287 = vperm.xlu0 %286, %v269
      %v288 = vpop.permute.xlu0 %287
      %vm290 = vcmask 261120
      %v292 = vsel %vm290, %v220, 0
      %v295 = vsel %vm290, %v223, 0
      %v298 = vsel %vm290, %v226, 0
      %v301 = vsel %vm290, %v229, 0
      %303 = vmatpush.msra.mxu0 %v245
      %304 = vmatpush.msra.mxu0 %v244
      %305 = vmatpush.msra.mxu0 %v243
      %306 = vmatpush.msra.mxu0 %v242
      %307 = vmatpush.msra.mxu0 %v241
      %308 = vmatpush.msra.mxu0 %v240
      %309 = vmatpush.msra.mxu0 %v239
      %310 = vmatpush.msra.mxu0 %v238
      %311 = vmatpush.msra.mxu0 %v237
      %312 = vmatpush.msra.mxu0 %v236
      %313 = vmatpush.msra.mxu0 %v235
      %314 = vmatpush.msra.mxu0 %v234
      %315 = vmatpush.msra.mxu0 %v233
      %316 = vmatpush.msra.mxu0 %v232
      %317 = vmatpush.msra.mxu0 %v231
      %318 = vmatpush.msra.mxu0 %v230
      %319 = vmatmul.f32.gmra.mxu0 %v218
      %v320 = vpop.f32.mrf.mxu0
      %v321 = vadd.f32 %v273, %v320
      %322 = vmatmul.f32.gmra.mxu0 %v221
      %v323 = vpop.f32.mrf.mxu0
      %v324 = vadd.f32 %v278, %v323
      %325 = vmatmul.f32.gmra.mxu0 %v224
      %v326 = vpop.f32.mrf.mxu0
      %v327 = vadd.f32 %v283, %v326
      %328 = vmatmul.f32.gmra.mxu0 %v227
      %v329 = vpop.f32.mrf.mxu0
      %v330 = vadd.f32 %v288, %v329
      %331 = vdwg.mxu0
      %332 = vmatpush.msra.mxu0 %v261
      %333 = vmatpush.msra.mxu0 %v260
      %334 = vmatpush.msra.mxu0 %v259
      %335 = vmatpush.msra.mxu0 %v258
      %336 = vmatpush.msra.mxu0 %v257
      %337 = vmatpush.msra.mxu0 %v256
      %338 = vmatpush.msra.mxu0 %v255
      %339 = vmatpush.msra.mxu0 %v254
      %340 = vmatpush.msra.mxu0 %v253
      %341 = vmatpush.msra.mxu0 %v252
      %342 = vmatpush.msra.mxu0 %v251
      %343 = vmatpush.msra.mxu0 %v250
      %344 = vmatpush.msra.mxu0 %v249
      %345 = vmatpush.msra.mxu0 %v248
      %346 = vmatpush.msra.mxu0 %v247
      %347 = vmatpush.msra.mxu0 %v246
      %348 = vmatmul.f32.gmra.mxu0 %v219
      %v349 = vpop.f32.mrf.mxu0
      %v350 = vadd.f32 %v321, %v349
      %351 = vmatmul.f32.gmra.mxu0 %v222
      %v352 = vpop.f32.mrf.mxu0
      %v353 = vadd.f32 %v324, %v352
      %354 = vmatmul.f32.gmra.mxu0 %v225
      %v355 = vpop.f32.mrf.mxu0
      %v356 = vadd.f32 %v327, %v355
      %357 = vmatmul.f32.gmra.mxu0 %v228
      %v358 = vpop.f32.mrf.mxu0
      %v359 = vadd.f32 %v330, %v358
      %360 = vdwg.mxu0
      %361 = vmatpush.msra.mxu0 0.0
      %362 = vmatpush.msra.mxu0 0.0
      %363 = vmatpush.msra.mxu0 0.0
      %364 = vmatpush.msra.mxu0 0.0
      %365 = vmatpush.msra.mxu0 0.0
      %366 = vmatpush.msra.mxu0 0.0
      %367 = vmatpush.msra.mxu0 0.0
      %368 = vmatpush.msra.mxu0 0.0
      %369 = vmatpush.msra.mxu0 0.0
      %370 = vmatpush.msra.mxu0 0.0
      %371 = vmatpush.msra.mxu0 0.0
      %372 = vmatpush.msra.mxu0 0.0
      %373 = vmatpush.msra.mxu0 %v265
      %374 = vmatpush.msra.mxu0 %v264
      %375 = vmatpush.msra.mxu0 %v263
      %376 = vmatpush.msra.mxu0 %v262
      %377 = vmatmul.f32.gmra.mxu0 %v292
      %v378 = vpop.f32.mrf.mxu0
      %v379 = vadd.f32 %v350, %v378
      %380 = vmatmul.f32.gmra.mxu0 %v295
      %v381 = vpop.f32.mrf.mxu0
      %v382 = vadd.f32 %v353, %v381
      %383 = vmatmul.f32.gmra.mxu0 %v298
      %v384 = vpop.f32.mrf.mxu0
      %v385 = vadd.f32 %v356, %v384
      %386 = vmatmul.f32.gmra.mxu0 %v301
      %v387 = vpop.f32.mrf.mxu0
      %v388 = vadd.f32 %v359, %v387
      %389 = vdwg.mxu0
      %vm390 = vcmask 130048
      %v391 = vsel %vm390, %v379, 0.0
      %392 = vadd.xlane.f32.xlu0 %v391
      %v393 = vpop.xlane.xlu0 %392
      %v394 = vsel %vm390, %v382, 0.0
      %395 = vadd.xlane.f32.xlu0 %v394
      %v396 = vpop.xlane.xlu0 %395
      %v397 = vsel %vm390, %v385, 0.0
      %398 = vadd.xlane.f32.xlu0 %v397
      %v399 = vpop.xlane.xlu0 %398
      %v400 = vsel %vm390, %v388, 0.0
      %401 = vadd.xlane.f32.xlu0 %v400
      %v402 = vpop.xlane.xlu0 %401
      %v403 = vrcp.pop 16.0
      %v404 = vmul.f32 16.0, %v403
      %v405 = vsub.f32 1.0, %v404
      %v406 = vmul.f32 %v403, %v405
      %v407 = vadd.f32 %v403, %v406
      %vm408 = vweird.f32 %v403
      %v409 = vsel %vm408, %v403, %v407
      %v410 = vmul.f32 %v393, %v409
      %v411 = vmul.f32 %v396, %v409
      %v412 = vmul.f32 %v399, %v409
      %v413 = vmul.f32 %v402, %v409
      %v414 = vmul.f32 %v379, %v379
      %v415 = vmul.f32 %v382, %v382
      %v416 = vmul.f32 %v385, %v385
      %v417 = vmul.f32 %v388, %v388
      %v418 = vsel %vm390, %v414, 0.0
      %419 = vadd.xlane.f32.xlu0 %v418
      %v420 = vpop.xlane.xlu0 %419
      %v421 = vsel %vm390, %v415, 0.0
      %422 = vadd.xlane.f32.xlu0 %v421
      %v423 = vpop.xlane.xlu0 %422
      %v424 = vsel %vm390, %v416, 0.0
      %425 = vadd.xlane.f32.xlu0 %v424
      %v426 = vpop.xlane.xlu0 %425
      %v427 = vsel %vm390, %v417, 0.0
      %428 = vadd.xlane.f32.xlu0 %v427
      %v429 = vpop.xlane.xlu0 %428
      %v430 = vmul.f32 %v420, %v409
      %v431 = vmul.f32 %v423, %v409
      %v432 = vmul.f32 %v426, %v409
      %v433 = vmul.f32 %v429, %v409
      %v434 = vmul.f32 %v410, %v410
      %v435 = vmul.f32 %v411, %v411
      %v436 = vmul.f32 %v412, %v412
      %v437 = vmul.f32 %v413, %v413
      %v438 = vsub.f32 %v430, %v434
      %v439 = vsub.f32 %v431, %v435
      %v440 = vsub.f32 %v432, %v436
      %v441 = vsub.f32 %v433, %v437
      %v442 = vsub.f32 %v379, %v410
      %v443 = vsub.f32 %v382, %v411
      %v444 = vsub.f32 %v385, %v412
      %v445 = vsub.f32 %v388, %v413
      %v446 = vadd.f32 %v438, 1e-05
      %v447 = vadd.f32 %v439, 1e-05
      %v448 = vadd.f32 %v440, 1e-05
      %v449 = vadd.f32 %v441, 1e-05
      %v450 = vrsqrt.pop %v446
      %v451 = vmul.f32 %v450, %v446
      %v452 = vmul.f32 %v451, %v450
      %v453 = vmul.f32 0.5, %v452
      %v454 = vsub.f32 1.5, %v453
      %v455 = vmul.f32 %v450, %v454
      %vm456 = vweird.f32 %v446
      %vm457 = vweird.f32 %v450
      %vm458 = vmor %vm456, %vm457
      %v459 = vsel %vm458, %v450, %v455
      %v460 = vrsqrt.pop %v447
      %v461 = vmul.f32 %v460, %v447
      %v462 = vmul.f32 %v461, %v460
      %v463 = vmul.f32 0.5, %v462
      %v464 = vsub.f32 1.5, %v463
      %v465 = vmul.f32 %v460, %v464
      %vm466 = vweird.f32 %v447
      %vm467 = vweird.f32 %v460
      %vm468 = vmor %vm466, %vm467
      %v469 = vsel %vm468, %v460, %v465
      %v470 = vrsqrt.pop %v448
      %v471 = vmul.f32 %v470, %v448
      %v472 = vmul.f32 %v471, %v470
      %v473 = vmul.f32 0.5, %v472
      %v474 = vsub.f32 1.5, %v473
      %v475 = vmul.f32 %v470, %v474
      %vm476 = vweird.f32 %v448
      %vm477 = vweird.f32 %v470
      %vm478 = vmor %vm476, %vm477
      %v479 = vsel %vm478, %v470, %v475
      %v480 = vrsqrt.pop %v449
      %v481 = vmul.f32 %v480, %v449
      %v482 = vmul.f32 %v481, %v480
      %v483 = vmul.f32 0.5, %v482
      %v484 = vsub.f32 1.5, %v483
      %v485 = vmul.f32 %v480, %v484
      %vm486 = vweird.f32 %v449
      %vm487 = vweird.f32 %v480
      %vm488 = vmor %vm486, %vm487
      %v489 = vsel %vm488, %v480, %v485
      %v490 = vmul.f32 %v442, %v459
      %v491 = vmul.f32 %v443, %v469
      %v492 = vmul.f32 %v444, %v479
      %v493 = vmul.f32 %v445, %v489
      %v494 = vld [vmem:[%s212] sm:$0xff]
      %v495 = vld [vmem:[%s212 + $0x8] sm:$0xff]
      %v496 = vld [vmem:[%s212 + $0x10] sm:$0xff]
      %v497 = vld [vmem:[%s212 + $0x18] sm:$0xff]
      %v498 = vadd.f32 %v490, %v494
      %v499 = vadd.f32 %v491, %v495
      %v500 = vadd.f32 %v492, %v496
      %v501 = vadd.f32 %v493, %v497
      %502 = vst.msk [vmem:[%s217] sm:$0xff] %vm390, %v498
      %503 = vst.msk [vmem:[%s217 + $0x8] sm:$0xff] %vm390, %v499
      %504 = vst.msk [vmem:[%s217 + $0x10] sm:$0xff] %vm390, %v500
      %505 = vst.msk [vmem:[%s217 + $0x18] sm:$0xff] %vm390, %v501
      %p506 = scmp.lt.s32.totalorder %s15, 1
      %s507 = scalar_select %p506, %s15, 1
      %s508 = smul.addr %s507, 4
      %s509 = smul.addr %s508, 8
      %s510 = scalar_lea.vmem %s4, %s509
      // Predicated region
      $region37: #{resnet_generator_forward.14} parent=35 // pred_check
        %p511 = pneg %p127
      $region38: #{resnet_generator_forward.14} parent=35 // pred_check_branch
        %513 = sbr.rel (%p511) target = $region40
      $region39: #{resnet_generator_forward.14} parent=35 // pred_region
        _
      $region40: #{resnet_generator_forward.14} parent=35 // pred_fallthru
        _
    $region36: #{resnet_generator_forward.14} parent=5 // pred_fallthru
      _
    %p514 = scmp.le.s32.totalorder 2, %s10
    // Predicated region
    $region41: #{resnet_generator_forward.14} parent=5 // pred_check
      %p515 = pneg %p514
    $region42: #{resnet_generator_forward.14} parent=5 // pred_check_branch
      %517 = sbr.rel (%p515) target = $region44
    $region43: #{resnet_generator_forward.14} parent=5 // pred_region
      %s518 = ssub.s32 %s10, 2
      // Predicated region
      $region45: #{resnet_generator_forward.14} parent=43 // pred_check
        %p519 = pneg %p133
      $region46: #{resnet_generator_forward.14} parent=43 // pred_check_branch
        %521 = sbr.rel (%p519) target = $region48
      $region47: #{resnet_generator_forward.14} parent=43 // pred_region
        %p522 = scmp.lt.s32.totalorder %s16, 1
        %s523 = scalar_select %p522, %s16, 1
        %s524 = smul.addr %s523, 4
        %s525 = smul.addr %s524, 8
        %s526 = scalar_lea.vmem %s4, %s525
      $region48: #{resnet_generator_forward.14} parent=43 // pred_fallthru
        _
    $region44: #{resnet_generator_forward.14} parent=5 // pred_fallthru
      _
  $region6: #{resnet_generator_forward.14} parent=0 // loop_footer
    %s14 = sadd.s32 1, %s10
  $region7: #{resnet_generator_forward.14} parent=0 // loop_footer_branch
    %9 = sbr.rel target = $region3
  $region8: #{resnet_generator_forward.14} parent=0 // loop_exit
    _

// kernel: resnet_generator_forward.17
$region0: #{resnet_generator_forward.17}
  #allocation0 [shape = 'u32[]', space=smem, size = 0x4, offset = 0x4, fixed_abs, tag = 'smem constant byte address 0x4 - core index']
  #allocation1 [shape = 'u32[72,128]{1,0:T(1,128)}', space=vmem, size = 0x9000, scoped, tag = 'internal scratch']
  %s0 = inlined_call_operand.vmem [shape: f32[2,128,16], index: 0, kind: input, shape index: {}]
  %s1 = inlined_call_operand.vmem [shape: f32[4,16,128], index: 1, kind: input, shape index: {}]
  %s2 = inlined_call_operand.vmem [shape: f32[16,1], index: 2, kind: input, shape index: {}]
  %s3 = inlined_call_operand.vmem [shape: f32[2,4,16,16], index: 3, kind: output, shape index: {}]
  %s4 = sld [smem:[#allocation0]]
  $region45: #{resnet_generator_forward.17} parent=0
    _
  %s6 = ssub.s32 1, %s4
  %s7 = scalar_select 0, %s6, %s4
  loop: start=0, step=1, limit=4
  $region2: #{resnet_generator_forward.17} parent=0 // loop_pre_header
    _
  $region3: #{resnet_generator_forward.17} parent=0 // loop_header
    %s9 = sphi 0, %s13
    %p10 = scmp.ge.s32.totalorder %s9, 4
    %s19 = sphi 0, %s21
    %s22 = sphi 0, %s19
    %s23 = sphi 0, %s22
    %s39 = sphi 0, %s23
    %s43 = sphi 0, %s43
    %s45 = sphi 0, %s43
    %s46 = sphi 0, %s45
    %s60 = sphi 0, %s46
    %s64 = sphi 0, %s64
    %s66 = sphi 0, %s64
    %s67 = sphi 0, %s66
    %s81 = sphi 0, %s67
    %s87 = sphi 0, %s89
    %s90 = sphi 0, %s87
    %s91 = sphi 0, %s90
    %s107 = sphi 0, %s91
  $region4: #{resnet_generator_forward.17} parent=0 // loop_header_branch
    %12 = sbr.rel (%p10) target = $region8
  $region5: #{resnet_generator_forward.17} parent=0 // loop_body
    %s14 = ssub.s32 %s9, 1
    %s15 = ssub.s32 %s9, 2
    %s16 = sadd.s32 %s9, 1
    %s17 = ssub.s32 %s9, %s16
    %p18 = scmp.eq.s32.totalorder %s17, 0
    %s20 = sadd.s32 %s19, 1
    %s21 = scalar_select %p18, %s19, %s20
    %p24 = pneg %p18
    %p25 = scmp.eq.s32.totalorder %s9, 1
    %p26 = por %p24, %p25
    %p27 = scmp.ne.s32.totalorder %s19, %s22
    %p28 = scmp.eq.s32.totalorder %s9, 0
    %p29 = por %p27, %p28
    %p30 = scmp.ne.s32.totalorder %s19, %s22
    %p31 = scmp.eq.s32.totalorder %s14, 1
    %p32 = por %p30, %p31
    %p33 = scmp.ne.s32.totalorder %s22, %s23
    %p34 = scmp.eq.s32.totalorder %s14, 0
    %p35 = por %p33, %p34
    %p36 = scmp.ne.s32.totalorder %s22, %s23
    %p37 = scmp.eq.s32.totalorder %s15, 1
    %p38 = por %p36, %p37
    %p40 = scmp.ne.s32.totalorder %s23, %s39
    %p41 = scmp.eq.s32.totalorder %s15, 0
    %p42 = por %p40, %p41
    %s44 = sadd.s32 %s43, 1
    %p47 = scmp.eq.s32.totalorder %s9, 1
    %p48 = scmp.ne.s32.totalorder %s43, %s45
    %p49 = scmp.eq.s32.totalorder %s9, 0
    %p50 = por %p48, %p49
    %p51 = scmp.ne.s32.totalorder %s43, %s45
    %p52 = scmp.eq.s32.totalorder %s14, 1
    %p53 = por %p51, %p52
    %p54 = scmp.ne.s32.totalorder %s45, %s46
    %p55 = scmp.eq.s32.totalorder %s14, 0
    %p56 = por %p54, %p55
    %p57 = scmp.ne.s32.totalorder %s45, %s46
    %p58 = scmp.eq.s32.totalorder %s15, 1
    %p59 = por %p57, %p58
    %p61 = scmp.ne.s32.totalorder %s46, %s60
    %p62 = scmp.eq.s32.totalorder %s15, 0
    %p63 = por %p61, %p62
    %s65 = sadd.s32 %s64, 1
    %p68 = scmp.eq.s32.totalorder %s9, 1
    %p69 = scmp.ne.s32.totalorder %s64, %s66
    %p70 = scmp.eq.s32.totalorder %s9, 0
    %p71 = por %p69, %p70
    %p72 = scmp.ne.s32.totalorder %s64, %s66
    %p73 = scmp.eq.s32.totalorder %s14, 1
    %p74 = por %p72, %p73
    %p75 = scmp.ne.s32.totalorder %s66, %s67
    %p76 = scmp.eq.s32.totalorder %s14, 0
    %p77 = por %p75, %p76
    %p78 = scmp.ne.s32.totalorder %s66, %s67
    %p79 = scmp.eq.s32.totalorder %s15, 1
    %p80 = por %p78, %p79
    %p82 = scmp.ne.s32.totalorder %s67, %s81
    %p83 = scmp.eq.s32.totalorder %s15, 0
    %p84 = por %p82, %p83
    %s85 = ssub.s32 %s9, %s16
    %p86 = scmp.eq.s32.totalorder %s85, 0
    %s88 = sadd.s32 %s87, 1
    %s89 = scalar_select %p86, %s87, %s88
    %p92 = pneg %p86
    %p93 = scmp.eq.s32.totalorder %s9, 1
    %p94 = por %p92, %p93
    %p95 = scmp.ne.s32.totalorder %s87, %s90
    %p96 = scmp.eq.s32.totalorder %s9, 0
    %p97 = por %p95, %p96
    %p98 = scmp.ne.s32.totalorder %s87, %s90
    %p99 = scmp.eq.s32.totalorder %s14, 1
    %p100 = por %p98, %p99
    %p101 = scmp.ne.s32.totalorder %s90, %s91
    %p102 = scmp.eq.s32.totalorder %s14, 0
    %p103 = por %p101, %p102
    %p104 = scmp.ne.s32.totalorder %s90, %s91
    %p105 = scmp.eq.s32.totalorder %s15, 1
    %p106 = por %p104, %p105
    %p108 = scmp.ne.s32.totalorder %s91, %s107
    %p109 = scmp.eq.s32.totalorder %s15, 0
    %p110 = por %p108, %p109
    %p111 = scmp.le.s32.totalorder 1, %s9
    %p112 = scmp.lt.s32.totalorder %s9, 3
    %p113 = pnand %p111, %p112
    %p114 = pneg %p113
    // Predicated region
    $region9: #{resnet_generator_forward.17} parent=5 // pred_check
      _
    $region10: #{resnet_generator_forward.17} parent=5 // pred_check_branch
      %116 = sbr.rel (%p113) target = $region12
    $region11: #{resnet_generator_forward.17} parent=5 // pred_region
      %s117 = ssub.s32 %s9, 1
      // Predicated region
      $region13: #{resnet_generator_forward.17} parent=11 // pred_check
        %p118 = pneg %p56
      $region14: #{resnet_generator_forward.17} parent=11 // pred_check_branch
        %120 = sbr.rel (%p118) target = $region16
      $region15: #{resnet_generator_forward.17} parent=11 // pred_region
        _
      $region16: #{resnet_generator_forward.17} parent=11 // pred_fallthru
        _
      // Predicated region
      $region17: #{resnet_generator_forward.17} parent=11 // pred_check
        %p121 = pneg %p77
      $region18: #{resnet_generator_forward.17} parent=11 // pred_check_branch
        %123 = sbr.rel (%p121) target = $region20
      $region19: #{resnet_generator_forward.17} parent=11 // pred_region
        _
      $region20: #{resnet_generator_forward.17} parent=11 // pred_fallthru
        _
    $region12: #{resnet_generator_forward.17} parent=5 // pred_fallthru
      _
    %p124 = scmp.lt.s32.totalorder %s9, 2
    // Predicated region
    $region21: #{resnet_generator_forward.17} parent=5 // pred_check
      %p125 = pneg %p124
    $region22: #{resnet_generator_forward.17} parent=5 // pred_check_branch
      %127 = sbr.rel (%p125) target = $region24
    $region23: #{resnet_generator_forward.17} parent=5 // pred_region
      // Predicated region
      $region25: #{resnet_generator_forward.17} parent=23 // pred_check
        %p128 = pneg %p29
      $region26: #{resnet_generator_forward.17} parent=23 // pred_check_branch
        %130 = sbr.rel (%p128) target = $region28
      $region27: #{resnet_generator_forward.17} parent=23 // pred_region
        %p131 = scmp.lt.s32.totalorder %s9, 1
        %s132 = scalar_select %p131, %s9, 1
        %s133 = smul.addr %s132, 16
        %s134 = smul.addr %s133, 8
        %s135 = scalar_lea.vmem %s0, %s134
      $region28: #{resnet_generator_forward.17} parent=23 // pred_fallthru
        _
    $region24: #{resnet_generator_forward.17} parent=5 // pred_fallthru
      _
    %p136 = scmp.le.s32.totalorder 1, %s9
    %p137 = scmp.lt.s32.totalorder %s9, 3
    %p138 = pnand %p136, %p137
    %p139 = pneg %p138
    // Predicated region
    $region29: #{resnet_generator_forward.17} parent=5 // pred_check
      _
    $region30: #{resnet_generator_forward.17} parent=5 // pred_check_branch
      %141 = sbr.rel (%p138) target = $region32
    $region31: #{resnet_generator_forward.17} parent=5 // pred_region
      %s142 = ssub.s32 %s9, 1
      %p143 = scmp.lt.s32.totalorder %s14, 1
      %s144 = scalar_select %p143, %s14, 1
      %s145 = smul.addr %s144, 16
      %s146 = smul.addr %s145, 8
      %s147 = scalar_lea.vmem %s0, %s146
      %p148 = pneg %p35
      %p149 = pneg %p32
      %p150 = pneg %p56
      %p151 = pneg %p53
      %p152 = pneg %p77
      %p153 = pneg %p74
      %p154 = pneg %p103
      %p155 = pneg %p100
      %p156 = scmp.lt.s32.totalorder %s14, 1
      %s157 = scalar_select %p156, %s14, 1
      %s158 = smul.addr %s157, 8
      %s159 = smul.addr %s158, 8
      %s160 = scalar_lea.vmem %s3, %s159
      %p161 = scmp.lt.s32.totalorder %s14, 1
      %s162 = scalar_select %p161, %s14, 1
      %s163 = smul.addr %s162, 16
      %s164 = smul.addr %s163, 8
      %s165 = scalar_lea.vmem %s0, %s164
      %p166 = scmp.lt.s32.totalorder %s14, 1
      %s167 = scalar_select %p166, %s14, 1
      %s168 = smul.addr %s167, 8
      %s169 = smul.addr %s168, 8
      %s170 = scalar_lea.vmem %s3, %s169
      %v171 = vld [vmem:[%s165] sm:$0xff]
      %v172 = vld [vmem:[%s165 + $0x8] sm:$0xff]
      %v173 = vld [vmem:[%s165 + $0x10] sm:$0xff]
      %v174 = vld [vmem:[%s165 + $0x18] sm:$0xff]
      %v175 = vld [vmem:[%s165 + $0x20] sm:$0xff]
      %v176 = vld [vmem:[%s165 + $0x28] sm:$0xff]
      %v177 = vld [vmem:[%s165 + $0x30] sm:$0xff]
      %v178 = vld [vmem:[%s165 + $0x38] sm:$0xff]
      %v179 = vld [vmem:[%s165 + $0x40] sm:$0xff]
      %v180 = vld [vmem:[%s165 + $0x48] sm:$0xff]
      %v181 = vld [vmem:[%s165 + $0x50] sm:$0xff]
      %v182 = vld [vmem:[%s165 + $0x58] sm:$0xff]
      %v183 = vld [vmem:[%s165 + $0x60] sm:$0xff]
      %v184 = vld [vmem:[%s165 + $0x68] sm:$0xff]
      %v185 = vld [vmem:[%s165 + $0x70] sm:$0xff]
      %v186 = vld [vmem:[%s165 + $0x78] sm:$0xff]
      %v187 = vld [vmem:[%s2] sm:$0xff]
      %v188 = vld [vmem:[%s2 + $0x8] sm:$0xff]
      %v189 = vld [vmem:[%s1] sm:$0xff]
      %v190 = vld [vmem:[%s1 + $0x8] sm:$0xff]
      %192 = vset.pattern.permute.xlu0 0
      %193 = vperm.xlu0 %192, %v187
      %v194 = vpop.permute.xlu0 %193
      %197 = vset.pattern.permute.xlu0 0
      %198 = vperm.xlu0 %197, %v188
      %v199 = vpop.permute.xlu0 %198
      %201 = vmatpush.msra.mxu0 %v186
      %202 = vmatpush.msra.mxu0 %v185
      %203 = vmatpush.msra.mxu0 %v184
      %204 = vmatpush.msra.mxu0 %v183
      %205 = vmatpush.msra.mxu0 %v182
      %206 = vmatpush.msra.mxu0 %v181
      %207 = vmatpush.msra.mxu0 %v180
      %208 = vmatpush.msra.mxu0 %v179
      %209 = vmatpush.msra.mxu0 %v178
      %210 = vmatpush.msra.mxu0 %v177
      %211 = vmatpush.msra.mxu0 %v176
      %212 = vmatpush.msra.mxu0 %v175
      %213 = vmatpush.msra.mxu0 %v174
      %214 = vmatpush.msra.mxu0 %v173
      %215 = vmatpush.msra.mxu0 %v172
      %216 = vmatpush.msra.mxu0 %v171
      %217 = vmatmul.f32.gmra.mxu0 %v189
      %v218 = vpop.f32.mrf.mxu0
      %v219 = vadd.f32 %v194, %v218
      %220 = vmatmul.f32.gmra.mxu0 %v190
      %v221 = vpop.f32.mrf.mxu0
      %v222 = vadd.f32 %v199, %v221
      %223 = vdwg.mxu0
      %s224 = scalar_lea.vmem %s1, 16
      %v225 = vld [vmem:[%s224] sm:$0xff]
      %v226 = vld [vmem:[%s224 + $0x8] sm:$0xff]
      %227 = vmatpush.msra.mxu0 %v186
      %228 = vmatpush.msra.mxu0 %v185
      %229 = vmatpush.msra.mxu0 %v184
      %230 = vmatpush.msra.mxu0 %v183
      %231 = vmatpush.msra.mxu0 %v182
      %232 = vmatpush.msra.mxu0 %v181
      %233 = vmatpush.msra.mxu0 %v180
      %234 = vmatpush.msra.mxu0 %v179
      %235 = vmatpush.msra.mxu0 %v178
      %236 = vmatpush.msra.mxu0 %v177
      %237 = vmatpush.msra.mxu0 %v176
      %238 = vmatpush.msra.mxu0 %v175
      %239 = vmatpush.msra.mxu0 %v174
      %240 = vmatpush.msra.mxu0 %v173
      %241 = vmatpush.msra.mxu0 %v172
      %242 = vmatpush.msra.mxu0 %v171
      %243 = vmatmul.f32.gmra.mxu0 %v225
      %v244 = vpop.f32.mrf.mxu0
      %v245 = vadd.f32 %v194, %v244
      %246 = vmatmul.f32.gmra.mxu0 %v226
      %v247 = vpop.f32.mrf.mxu0
      %v248 = vadd.f32 %v199, %v247
      %249 = vdwg.mxu0
      %s250 = scalar_lea.vmem %s1, 32
      %v251 = vld [vmem:[%s250] sm:$0xff]
      %v252 = vld [vmem:[%s250 + $0x8] sm:$0xff]
      %253 = vmatpush.msra.mxu0 %v186
      %254 = vmatpush.msra.mxu0 %v185
      %255 = vmatpush.msra.mxu0 %v184
      %256 = vmatpush.msra.mxu0 %v183
      %257 = vmatpush.msra.mxu0 %v182
      %258 = vmatpush.msra.mxu0 %v181
      %259 = vmatpush.msra.mxu0 %v180
      %260 = vmatpush.msra.mxu0 %v179
      %261 = vmatpush.msra.mxu0 %v178
      %262 = vmatpush.msra.mxu0 %v177
      %263 = vmatpush.msra.mxu0 %v176
      %264 = vmatpush.msra.mxu0 %v175
      %265 = vmatpush.msra.mxu0 %v174
      %266 = vmatpush.msra.mxu0 %v173
      %267 = vmatpush.msra.mxu0 %v172
      %268 = vmatpush.msra.mxu0 %v171
      %269 = vmatmul.f32.gmra.mxu0 %v251
      %v270 = vpop.f32.mrf.mxu0
      %v271 = vadd.f32 %v194, %v270
      %272 = vmatmul.f32.gmra.mxu0 %v252
      %v273 = vpop.f32.mrf.mxu0
      %v274 = vadd.f32 %v199, %v273
      %275 = vdwg.mxu0
      %s276 = scalar_lea.vmem %s1, 48
      %v277 = vld [vmem:[%s276] sm:$0xff]
      %v278 = vld [vmem:[%s276 + $0x8] sm:$0xff]
      %279 = vmatpush.msra.mxu0 %v186
      %280 = vmatpush.msra.mxu0 %v185
      %281 = vmatpush.msra.mxu0 %v184
      %282 = vmatpush.msra.mxu0 %v183
      %283 = vmatpush.msra.mxu0 %v182
      %284 = vmatpush.msra.mxu0 %v181
      %285 = vmatpush.msra.mxu0 %v180
      %286 = vmatpush.msra.mxu0 %v179
      %287 = vmatpush.msra.mxu0 %v178
      %288 = vmatpush.msra.mxu0 %v177
      %289 = vmatpush.msra.mxu0 %v176
      %290 = vmatpush.msra.mxu0 %v175
      %291 = vmatpush.msra.mxu0 %v174
      %292 = vmatpush.msra.mxu0 %v173
      %293 = vmatpush.msra.mxu0 %v172
      %294 = vmatpush.msra.mxu0 %v171
      %295 = vmatmul.f32.gmra.mxu0 %v277
      %v296 = vpop.f32.mrf.mxu0
      %v297 = vadd.f32 %v194, %v296
      %298 = vmatmul.f32.gmra.mxu0 %v278
      %v299 = vpop.f32.mrf.mxu0
      %v300 = vadd.f32 %v199, %v299
      %301 = vdwg.mxu0
      %vm302 = vcmask 130048
      %v303 = vsel %vm302, %v219, 0.0
      %304 = vadd.xlane.f32.xlu0 %v303
      %v305 = vpop.xlane.xlu0 %304
      %v306 = vsel %vm302, %v222, 0.0
      %307 = vadd.xlane.f32.xlu0 %v306
      %v308 = vpop.xlane.xlu0 %307
      %v309 = vadd.f32 %v305, 0.0
      %v310 = vadd.f32 %v308, 0.0
      %v311 = vsel %vm302, %v245, 0.0
      %312 = vadd.xlane.f32.xlu0 %v311
      %v313 = vpop.xlane.xlu0 %312
      %v314 = vsel %vm302, %v248, 0.0
      %315 = vadd.xlane.f32.xlu0 %v314
      %v316 = vpop.xlane.xlu0 %315
      %v317 = vadd.f32 %v309, %v313
      %v318 = vadd.f32 %v310, %v316
      %v319 = vsel %vm302, %v271, 0.0
      %320 = vadd.xlane.f32.xlu0 %v319
      %v321 = vpop.xlane.xlu0 %320
      %v322 = vsel %vm302, %v274, 0.0
      %323 = vadd.xlane.f32.xlu0 %v322
      %v324 = vpop.xlane.xlu0 %323
      %v325 = vadd.f32 %v317, %v321
      %v326 = vadd.f32 %v318, %v324
      %v327 = vsel %vm302, %v297, 0.0
      %328 = vadd.xlane.f32.xlu0 %v327
      %v329 = vpop.xlane.xlu0 %328
      %v330 = vsel %vm302, %v300, 0.0
      %331 = vadd.xlane.f32.xlu0 %v330
      %v332 = vpop.xlane.xlu0 %331
      %v333 = vadd.f32 %v325, %v329
      %v334 = vadd.f32 %v326, %v332
      %v335 = vmul.f32 %v219, %v219
      %v336 = vmul.f32 %v222, %v222
      %v337 = vsel %vm302, %v335, 0.0
      %338 = vadd.xlane.f32.xlu0 %v337
      %v339 = vpop.xlane.xlu0 %338
      %v340 = vsel %vm302, %v336, 0.0
      %341 = vadd.xlane.f32.xlu0 %v340
      %v342 = vpop.xlane.xlu0 %341
      %v343 = vadd.f32 %v339, 0.0
      %v344 = vadd.f32 %v342, 0.0
      %v345 = vmul.f32 %v245, %v245
      %v346 = vmul.f32 %v248, %v248
      %v347 = vsel %vm302, %v345, 0.0
      %348 = vadd.xlane.f32.xlu0 %v347
      %v349 = vpop.xlane.xlu0 %348
      %v350 = vsel %vm302, %v346, 0.0
      %351 = vadd.xlane.f32.xlu0 %v350
      %v352 = vpop.xlane.xlu0 %351
      %v353 = vadd.f32 %v343, %v349
      %v354 = vadd.f32 %v344, %v352
      %v355 = vmul.f32 %v271, %v271
      %v356 = vmul.f32 %v274, %v274
      %v357 = vsel %vm302, %v355, 0.0
      %358 = vadd.xlane.f32.xlu0 %v357
      %v359 = vpop.xlane.xlu0 %358
      %v360 = vsel %vm302, %v356, 0.0
      %361 = vadd.xlane.f32.xlu0 %v360
      %v362 = vpop.xlane.xlu0 %361
      %v363 = vadd.f32 %v353, %v359
      %v364 = vadd.f32 %v354, %v362
      %v365 = vmul.f32 %v297, %v297
      %v366 = vmul.f32 %v300, %v300
      %v367 = vsel %vm302, %v365, 0.0
      %368 = vadd.xlane.f32.xlu0 %v367
      %v369 = vpop.xlane.xlu0 %368
      %v370 = vsel %vm302, %v366, 0.0
      %371 = vadd.xlane.f32.xlu0 %v370
      %v372 = vpop.xlane.xlu0 %371
      %v373 = vadd.f32 %v363, %v369
      %v374 = vadd.f32 %v364, %v372
      %v375 = vrcp.pop 64.0
      %v376 = vmul.f32 64.0, %v375
      %v377 = vsub.f32 1.0, %v376
      %v378 = vmul.f32 %v375, %v377
      %v379 = vadd.f32 %v375, %v378
      %vm380 = vweird.f32 %v375
      %v381 = vsel %vm380, %v375, %v379
      %v382 = vmul.f32 %v333, %v381
      %v383 = vmul.f32 %v334, %v381
      %v384 = vmul.f32 %v373, %v381
      %v385 = vmul.f32 %v374, %v381
      %v386 = vmul.f32 %v382, %v382
      %v387 = vmul.f32 %v383, %v383
      %v388 = vsub.f32 %v384, %v386
      %v389 = vsub.f32 %v385, %v387
      %v390 = vadd.f32 %v388, 1e-05
      %v391 = vadd.f32 %v389, 1e-05
      %v392 = vrsqrt.pop %v390
      %v393 = vmul.f32 %v392, %v390
      %v394 = vmul.f32 %v393, %v392
      %v395 = vmul.f32 0.5, %v394
      %v396 = vsub.f32 1.5, %v395
      %v397 = vmul.f32 %v392, %v396
      %vm398 = vweird.f32 %v390
      %vm399 = vweird.f32 %v392
      %vm400 = vmor %vm398, %vm399
      %v401 = vsel %vm400, %v392, %v397
      %v402 = vrsqrt.pop %v391
      %v403 = vmul.f32 %v402, %v391
      %v404 = vmul.f32 %v403, %v402
      %v405 = vmul.f32 0.5, %v404
      %v406 = vsub.f32 1.5, %v405
      %v407 = vmul.f32 %v402, %v406
      %vm408 = vweird.f32 %v391
      %vm409 = vweird.f32 %v402
      %vm410 = vmor %vm408, %vm409
      %v411 = vsel %vm410, %v402, %v407
      %v412 = vsub.f32 %v219, %v382
      %v413 = vsub.f32 %v222, %v383
      %v414 = vmul.f32 %v412, %v401
      %v415 = vmul.f32 %v413, %v411
      %v416 = vmax.f32 %v414, 0.0
      %v417 = vmax.f32 %v415, 0.0
      %v418 = vmin.f32 %v414, 0.0
      %v419 = vmin.f32 %v415, 0.0
      %v420 = vmul.f32 %v418, 1.442695
      %v421 = vpow.pop %v420
      %v422 = vmul.f32 %v419, 1.442695
      %v423 = vpow.pop %v422
      %v424 = vsub.f32 %v421, 1.0
      %v425 = vsub.f32 %v423, 1.0
      %v426 = vmul.f32 %v424, 1.6732632
      %v427 = vmul.f32 %v425, 1.6732632
      %v428 = vadd.f32 %v416, %v426
      %v429 = vadd.f32 %v417, %v427
      %v430 = vmul.f32 %v428, 1.050701
      %v431 = vmul.f32 %v429, 1.050701
      %432 = vst.msk [vmem:[%s170] sm:$0xff] %vm302, %v430
      %433 = vst.msk [vmem:[%s170 + $0x8] sm:$0xff] %vm302, %v431
      %v434 = vsub.f32 %v245, %v382
      %v435 = vsub.f32 %v248, %v383
      %v436 = vmul.f32 %v434, %v401
      %v437 = vmul.f32 %v435, %v411
      %v438 = vmax.f32 %v436, 0.0
      %v439 = vmax.f32 %v437, 0.0
      %v440 = vmin.f32 %v436, 0.0
      %v441 = vmin.f32 %v437, 0.0
      %v442 = vmul.f32 %v440, 1.442695
      %v443 = vpow.pop %v442
      %v444 = vmul.f32 %v441, 1.442695
      %v445 = vpow.pop %v444
      %v446 = vsub.f32 %v443, 1.0
      %v447 = vsub.f32 %v445, 1.0
      %v448 = vmul.f32 %v446, 1.6732632
      %v449 = vmul.f32 %v447, 1.6732632
      %v450 = vadd.f32 %v438, %v448
      %v451 = vadd.f32 %v439, %v449
      %v452 = vmul.f32 %v450, 1.050701
      %v453 = vmul.f32 %v451, 1.050701
      %s454 = scalar_lea.vmem %s170, 16
      %455 = vst.msk [vmem:[%s454] sm:$0xff] %vm302, %v452
      %456 = vst.msk [vmem:[%s454 + $0x8] sm:$0xff] %vm302, %v453
      %v457 = vsub.f32 %v271, %v382
      %v458 = vsub.f32 %v274, %v383
      %v459 = vmul.f32 %v457, %v401
      %v460 = vmul.f32 %v458, %v411
      %v461 = vmax.f32 %v459, 0.0
      %v462 = vmax.f32 %v460, 0.0
      %v463 = vmin.f32 %v459, 0.0
      %v464 = vmin.f32 %v460, 0.0
      %v465 = vmul.f32 %v463, 1.442695
      %v466 = vpow.pop %v465
      %v467 = vmul.f32 %v464, 1.442695
      %v468 = vpow.pop %v467
      %v469 = vsub.f32 %v466, 1.0
      %v470 = vsub.f32 %v468, 1.0
      %v471 = vmul.f32 %v469, 1.6732632
      %v472 = vmul.f32 %v470, 1.6732632
      %v473 = vadd.f32 %v461, %v471
      %v474 = vadd.f32 %v462, %v472
      %v475 = vmul.f32 %v473, 1.050701
      %v476 = vmul.f32 %v474, 1.050701
      %s477 = scalar_lea.vmem %s170, 32
      %478 = vst.msk [vmem:[%s477] sm:$0xff] %vm302, %v475
      %479 = vst.msk [vmem:[%s477 + $0x8] sm:$0xff] %vm302, %v476
      %v480 = vsub.f32 %v297, %v382
      %v481 = vsub.f32 %v300, %v383
      %v482 = vmul.f32 %v480, %v401
      %v483 = vmul.f32 %v481, %v411
      %v484 = vmax.f32 %v482, 0.0
      %v485 = vmax.f32 %v483, 0.0
      %v486 = vmin.f32 %v482, 0.0
      %v487 = vmin.f32 %v483, 0.0
      %v488 = vmul.f32 %v486, 1.442695
      %v489 = vpow.pop %v488
      %v490 = vmul.f32 %v487, 1.442695
      %v491 = vpow.pop %v490
      %v492 = vsub.f32 %v489, 1.0
      %v493 = vsub.f32 %v491, 1.0
      %v494 = vmul.f32 %v492, 1.6732632
      %v495 = vmul.f32 %v493, 1.6732632
      %v496 = vadd.f32 %v484, %v494
      %v497 = vadd.f32 %v485, %v495
      %v498 = vmul.f32 %v496, 1.050701
      %v499 = vmul.f32 %v497, 1.050701
      %s500 = scalar_lea.vmem %s170, 48
      %501 = vst.msk [vmem:[%s500] sm:$0xff] %vm302, %v498
      %502 = vst.msk [vmem:[%s500 + $0x8] sm:$0xff] %vm302, %v499
      %p503 = scmp.lt.s32.totalorder %s14, 1
      %s504 = scalar_select %p503, %s14, 1
      %s505 = smul.addr %s504, 8
      %s506 = smul.addr %s505, 8
      %s507 = scalar_lea.vmem %s3, %s506
      // Predicated region
      $region33: #{resnet_generator_forward.17} parent=31 // pred_check
        %p508 = pneg %p100
      $region34: #{resnet_generator_forward.17} parent=31 // pred_check_branch
        %510 = sbr.rel (%p508) target = $region36
      $region35: #{resnet_generator_forward.17} parent=31 // pred_region
        _
      $region36: #{resnet_generator_forward.17} parent=31 // pred_fallthru
        _
    $region32: #{resnet_generator_forward.17} parent=5 // pred_fallthru
      _
    %p511 = scmp.le.s32.totalorder 2, %s9
    // Predicated region
    $region37: #{resnet_generator_forward.17} parent=5 // pred_check
      %p512 = pneg %p511
    $region38: #{resnet_generator_forward.17} parent=5 // pred_check_branch
      %514 = sbr.rel (%p512) target = $region40
    $region39: #{resnet_generator_forward.17} parent=5 // pred_region
      %s515 = ssub.s32 %s9, 2
      // Predicated region
      $region41: #{resnet_generator_forward.17} parent=39 // pred_check
        %p516 = pneg %p106
      $region42: #{resnet_generator_forward.17} parent=39 // pred_check_branch
        %518 = sbr.rel (%p516) target = $region44
      $region43: #{resnet_generator_forward.17} parent=39 // pred_region
        %p519 = scmp.lt.s32.totalorder %s15, 1
        %s520 = scalar_select %p519, %s15, 1
        %s521 = smul.addr %s520, 8
        %s522 = smul.addr %s521, 8
        %s523 = scalar_lea.vmem %s3, %s522
      $region44: #{resnet_generator_forward.17} parent=39 // pred_fallthru
        _
    $region40: #{resnet_generator_forward.17} parent=5 // pred_fallthru
      _
  $region6: #{resnet_generator_forward.17} parent=0 // loop_footer
    %s13 = sadd.s32 1, %s9
  $region7: #{resnet_generator_forward.17} parent=0 // loop_footer_branch
    %8 = sbr.rel target = $region3
  $region8: #{resnet_generator_forward.17} parent=0 // loop_exit
    _

// kernel: resnet_generator_forward.18
$region0: #{resnet_generator_forward.18}
  #allocation0 [shape = 'u32[]', space=smem, size = 0x4, offset = 0x4, fixed_abs, tag = 'smem constant byte address 0x4 - core index']
  #allocation1 [shape = 'u32[72,128]{1,0:T(1,128)}', space=vmem, size = 0x9000, scoped, tag = 'internal scratch']
  %s0 = inlined_call_operand.vmem [shape: f32[2,64,64], index: 0, kind: input, shape index: {}]
  %s1 = inlined_call_operand.vmem [shape: f32[4,8,64], index: 1, kind: input, shape index: {}]
  %s2 = inlined_call_operand.vmem [shape: f32[8,1], index: 2, kind: input, shape index: {}]
  %s3 = inlined_call_operand.vmem [shape: f32[2,4,8,64], index: 3, kind: output, shape index: {}]
  %s4 = sld [smem:[#allocation0]]
  $region45: #{resnet_generator_forward.18} parent=0
    _
  %s6 = ssub.s32 1, %s4
  %s7 = scalar_select 0, %s6, %s4
  loop: start=0, step=1, limit=4
  $region2: #{resnet_generator_forward.18} parent=0 // loop_pre_header
    _
  $region3: #{resnet_generator_forward.18} parent=0 // loop_header
    %s9 = sphi 0, %s13
    %p10 = scmp.ge.s32.totalorder %s9, 4
    %s19 = sphi 0, %s21
    %s22 = sphi 0, %s19
    %s23 = sphi 0, %s22
    %s39 = sphi 0, %s23
    %s43 = sphi 0, %s43
    %s45 = sphi 0, %s43
    %s46 = sphi 0, %s45
    %s60 = sphi 0, %s46
    %s64 = sphi 0, %s64
    %s66 = sphi 0, %s64
    %s67 = sphi 0, %s66
    %s81 = sphi 0, %s67
    %s87 = sphi 0, %s89
    %s90 = sphi 0, %s87
    %s91 = sphi 0, %s90
    %s107 = sphi 0, %s91
  $region4: #{resnet_generator_forward.18} parent=0 // loop_header_branch
    %12 = sbr.rel (%p10) target = $region8
  $region5: #{resnet_generator_forward.18} parent=0 // loop_body
    %s14 = ssub.s32 %s9, 1
    %s15 = ssub.s32 %s9, 2
    %s16 = sadd.s32 %s9, 1
    %s17 = ssub.s32 %s9, %s16
    %p18 = scmp.eq.s32.totalorder %s17, 0
    %s20 = sadd.s32 %s19, 1
    %s21 = scalar_select %p18, %s19, %s20
    %p24 = pneg %p18
    %p25 = scmp.eq.s32.totalorder %s9, 1
    %p26 = por %p24, %p25
    %p27 = scmp.ne.s32.totalorder %s19, %s22
    %p28 = scmp.eq.s32.totalorder %s9, 0
    %p29 = por %p27, %p28
    %p30 = scmp.ne.s32.totalorder %s19, %s22
    %p31 = scmp.eq.s32.totalorder %s14, 1
    %p32 = por %p30, %p31
    %p33 = scmp.ne.s32.totalorder %s22, %s23
    %p34 = scmp.eq.s32.totalorder %s14, 0
    %p35 = por %p33, %p34
    %p36 = scmp.ne.s32.totalorder %s22, %s23
    %p37 = scmp.eq.s32.totalorder %s15, 1
    %p38 = por %p36, %p37
    %p40 = scmp.ne.s32.totalorder %s23, %s39
    %p41 = scmp.eq.s32.totalorder %s15, 0
    %p42 = por %p40, %p41
    %s44 = sadd.s32 %s43, 1
    %p47 = scmp.eq.s32.totalorder %s9, 1
    %p48 = scmp.ne.s32.totalorder %s43, %s45
    %p49 = scmp.eq.s32.totalorder %s9, 0
    %p50 = por %p48, %p49
    %p51 = scmp.ne.s32.totalorder %s43, %s45
    %p52 = scmp.eq.s32.totalorder %s14, 1
    %p53 = por %p51, %p52
    %p54 = scmp.ne.s32.totalorder %s45, %s46
    %p55 = scmp.eq.s32.totalorder %s14, 0
    %p56 = por %p54, %p55
    %p57 = scmp.ne.s32.totalorder %s45, %s46
    %p58 = scmp.eq.s32.totalorder %s15, 1
    %p59 = por %p57, %p58
    %p61 = scmp.ne.s32.totalorder %s46, %s60
    %p62 = scmp.eq.s32.totalorder %s15, 0
    %p63 = por %p61, %p62
    %s65 = sadd.s32 %s64, 1
    %p68 = scmp.eq.s32.totalorder %s9, 1
    %p69 = scmp.ne.s32.totalorder %s64, %s66
    %p70 = scmp.eq.s32.totalorder %s9, 0
    %p71 = por %p69, %p70
    %p72 = scmp.ne.s32.totalorder %s64, %s66
    %p73 = scmp.eq.s32.totalorder %s14, 1
    %p74 = por %p72, %p73
    %p75 = scmp.ne.s32.totalorder %s66, %s67
    %p76 = scmp.eq.s32.totalorder %s14, 0
    %p77 = por %p75, %p76
    %p78 = scmp.ne.s32.totalorder %s66, %s67
    %p79 = scmp.eq.s32.totalorder %s15, 1
    %p80 = por %p78, %p79
    %p82 = scmp.ne.s32.totalorder %s67, %s81
    %p83 = scmp.eq.s32.totalorder %s15, 0
    %p84 = por %p82, %p83
    %s85 = ssub.s32 %s9, %s16
    %p86 = scmp.eq.s32.totalorder %s85, 0
    %s88 = sadd.s32 %s87, 1
    %s89 = scalar_select %p86, %s87, %s88
    %p92 = pneg %p86
    %p93 = scmp.eq.s32.totalorder %s9, 1
    %p94 = por %p92, %p93
    %p95 = scmp.ne.s32.totalorder %s87, %s90
    %p96 = scmp.eq.s32.totalorder %s9, 0
    %p97 = por %p95, %p96
    %p98 = scmp.ne.s32.totalorder %s87, %s90
    %p99 = scmp.eq.s32.totalorder %s14, 1
    %p100 = por %p98, %p99
    %p101 = scmp.ne.s32.totalorder %s90, %s91
    %p102 = scmp.eq.s32.totalorder %s14, 0
    %p103 = por %p101, %p102
    %p104 = scmp.ne.s32.totalorder %s90, %s91
    %p105 = scmp.eq.s32.totalorder %s15, 1
    %p106 = por %p104, %p105
    %p108 = scmp.ne.s32.totalorder %s91, %s107
    %p109 = scmp.eq.s32.totalorder %s15, 0
    %p110 = por %p108, %p109
    %p111 = scmp.le.s32.totalorder 1, %s9
    %p112 = scmp.lt.s32.totalorder %s9, 3
    %p113 = pnand %p111, %p112
    %p114 = pneg %p113
    // Predicated region
    $region9: #{resnet_generator_forward.18} parent=5 // pred_check
      _
    $region10: #{resnet_generator_forward.18} parent=5 // pred_check_branch
      %116 = sbr.rel (%p113) target = $region12
    $region11: #{resnet_generator_forward.18} parent=5 // pred_region
      %s117 = ssub.s32 %s9, 1
      // Predicated region
      $region13: #{resnet_generator_forward.18} parent=11 // pred_check
        %p118 = pneg %p56
      $region14: #{resnet_generator_forward.18} parent=11 // pred_check_branch
        %120 = sbr.rel (%p118) target = $region16
      $region15: #{resnet_generator_forward.18} parent=11 // pred_region
        _
      $region16: #{resnet_generator_forward.18} parent=11 // pred_fallthru
        _
      // Predicated region
      $region17: #{resnet_generator_forward.18} parent=11 // pred_check
        %p121 = pneg %p77
      $region18: #{resnet_generator_forward.18} parent=11 // pred_check_branch
        %123 = sbr.rel (%p121) target = $region20
      $region19: #{resnet_generator_forward.18} parent=11 // pred_region
        _
      $region20: #{resnet_generator_forward.18} parent=11 // pred_fallthru
        _
    $region12: #{resnet_generator_forward.18} parent=5 // pred_fallthru
      _
    %p124 = scmp.lt.s32.totalorder %s9, 2
    // Predicated region
    $region21: #{resnet_generator_forward.18} parent=5 // pred_check
      %p125 = pneg %p124
    $region22: #{resnet_generator_forward.18} parent=5 // pred_check_branch
      %127 = sbr.rel (%p125) target = $region24
    $region23: #{resnet_generator_forward.18} parent=5 // pred_region
      // Predicated region
      $region25: #{resnet_generator_forward.18} parent=23 // pred_check
        %p128 = pneg %p29
      $region26: #{resnet_generator_forward.18} parent=23 // pred_check_branch
        %130 = sbr.rel (%p128) target = $region28
      $region27: #{resnet_generator_forward.18} parent=23 // pred_region
        %p131 = scmp.lt.s32.totalorder %s9, 1
        %s132 = scalar_select %p131, %s9, 1
        %s133 = smul.addr %s132, 8
        %s134 = smul.addr %s133, 8
        %s135 = scalar_lea.vmem %s0, %s134
      $region28: #{resnet_generator_forward.18} parent=23 // pred_fallthru
        _
    $region24: #{resnet_generator_forward.18} parent=5 // pred_fallthru
      _
    %p136 = scmp.le.s32.totalorder 1, %s9
    %p137 = scmp.lt.s32.totalorder %s9, 3
    %p138 = pnand %p136, %p137
    %p139 = pneg %p138
    // Predicated region
    $region29: #{resnet_generator_forward.18} parent=5 // pred_check
      _
    $region30: #{resnet_generator_forward.18} parent=5 // pred_check_branch
      %141 = sbr.rel (%p138) target = $region32
    $region31: #{resnet_generator_forward.18} parent=5 // pred_region
      %s142 = ssub.s32 %s9, 1
      %p143 = scmp.lt.s32.totalorder %s14, 1
      %s144 = scalar_select %p143, %s14, 1
      %s145 = smul.addr %s144, 8
      %s146 = smul.addr %s145, 8
      %s147 = scalar_lea.vmem %s0, %s146
      %p148 = pneg %p35
      %p149 = pneg %p32
      %p150 = pneg %p56
      %p151 = pneg %p53
      %p152 = pneg %p77
      %p153 = pneg %p74
      %p154 = pneg %p103
      %p155 = pneg %p100
      %p156 = scmp.lt.s32.totalorder %s14, 1
      %s157 = scalar_select %p156, %s14, 1
      %s158 = smul.addr %s157, 4
      %s159 = smul.addr %s158, 8
      %s160 = scalar_lea.vmem %s3, %s159
      %p161 = scmp.lt.s32.totalorder %s14, 1
      %s162 = scalar_select %p161, %s14, 1
      %s163 = smul.addr %s162, 8
      %s164 = smul.addr %s163, 8
      %s165 = scalar_lea.vmem %s0, %s164
      %p166 = scmp.lt.s32.totalorder %s14, 1
      %s167 = scalar_select %p166, %s14, 1
      %s168 = smul.addr %s167, 4
      %s169 = smul.addr %s168, 8
      %s170 = scalar_lea.vmem %s3, %s169
      %v171 = vld [vmem:[%s165] sm:$0xff]
      %v172 = vld [vmem:[%s165 + $0x8] sm:$0xff]
      %v173 = vld [vmem:[%s165 + $0x10] sm:$0xff]
      %v174 = vld [vmem:[%s165 + $0x18] sm:$0xff]
      %v175 = vld [vmem:[%s165 + $0x20] sm:$0xff]
      %v176 = vld [vmem:[%s165 + $0x28] sm:$0xff]
      %v177 = vld [vmem:[%s165 + $0x30] sm:$0xff]
      %v178 = vld [vmem:[%s165 + $0x38] sm:$0xff]
      %v179 = vld [vmem:[%s2] sm:$0xff]
      %v180 = vld [vmem:[%s1] sm:$0xff]
      %182 = vset.pattern.permute.xlu0 0
      %183 = vperm.xlu0 %182, %v179
      %v184 = vpop.permute.xlu0 %183
      %vm186 = vcmask 523264
      %v188 = vsel %vm186, %v180, 0
      %190 = vmatpush.msra.mxu0 0.0
      %191 = vmatpush.msra.mxu0 0.0
      %192 = vmatpush.msra.mxu0 0.0
      %193 = vmatpush.msra.mxu0 0.0
      %194 = vmatpush.msra.mxu0 0.0
      %195 = vmatpush.msra.mxu0 0.0
      %196 = vmatpush.msra.mxu0 0.0
      %197 = vmatpush.msra.mxu0 0.0
      %198 = vmatpush.msra.mxu0 %v178
      %199 = vmatpush.msra.mxu0 %v177
      %200 = vmatpush.msra.mxu0 %v176
      %201 = vmatpush.msra.mxu0 %v175
      %202 = vmatpush.msra.mxu0 %v174
      %203 = vmatpush.msra.mxu0 %v173
      %204 = vmatpush.msra.mxu0 %v172
      %205 = vmatpush.msra.mxu0 %v171
      %206 = vmatmul.f32.gmra.mxu0 %v188
      %v207 = vpop.f32.mrf.mxu0
      %v208 = vadd.f32 %v184, %v207
      %209 = vdwg.mxu0
      %s210 = scalar_lea.vmem %s1, 8
      %v211 = vld [vmem:[%s210] sm:$0xff]
      %v213 = vsel %vm186, %v211, 0
      %215 = vmatpush.msra.mxu0 0.0
      %216 = vmatpush.msra.mxu0 0.0
      %217 = vmatpush.msra.mxu0 0.0
      %218 = vmatpush.msra.mxu0 0.0
      %219 = vmatpush.msra.mxu0 0.0
      %220 = vmatpush.msra.mxu0 0.0
      %221 = vmatpush.msra.mxu0 0.0
      %222 = vmatpush.msra.mxu0 0.0
      %223 = vmatpush.msra.mxu0 %v178
      %224 = vmatpush.msra.mxu0 %v177
      %225 = vmatpush.msra.mxu0 %v176
      %226 = vmatpush.msra.mxu0 %v175
      %227 = vmatpush.msra.mxu0 %v174
      %228 = vmatpush.msra.mxu0 %v173
      %229 = vmatpush.msra.mxu0 %v172
      %230 = vmatpush.msra.mxu0 %v171
      %231 = vmatmul.f32.gmra.mxu0 %v213
      %v232 = vpop.f32.mrf.mxu0
      %v233 = vadd.f32 %v184, %v232
      %234 = vdwg.mxu0
      %s235 = scalar_lea.vmem %s1, 16
      %v236 = vld [vmem:[%s235] sm:$0xff]
      %v238 = vsel %vm186, %v236, 0
      %240 = vmatpush.msra.mxu0 0.0
      %241 = vmatpush.msra.mxu0 0.0
      %242 = vmatpush.msra.mxu0 0.0
      %243 = vmatpush.msra.mxu0 0.0
      %244 = vmatpush.msra.mxu0 0.0
      %245 = vmatpush.msra.mxu0 0.0
      %246 = vmatpush.msra.mxu0 0.0
      %247 = vmatpush.msra.mxu0 0.0
      %248 = vmatpush.msra.mxu0 %v178
      %249 = vmatpush.msra.mxu0 %v177
      %250 = vmatpush.msra.mxu0 %v176
      %251 = vmatpush.msra.mxu0 %v175
      %252 = vmatpush.msra.mxu0 %v174
      %253 = vmatpush.msra.mxu0 %v173
      %254 = vmatpush.msra.mxu0 %v172
      %255 = vmatpush.msra.mxu0 %v171
      %256 = vmatmul.f32.gmra.mxu0 %v238
      %v257 = vpop.f32.mrf.mxu0
      %v258 = vadd.f32 %v184, %v257
      %259 = vdwg.mxu0
      %s260 = scalar_lea.vmem %s1, 24
      %v261 = vld [vmem:[%s260] sm:$0xff]
      %v263 = vsel %vm186, %v261, 0
      %265 = vmatpush.msra.mxu0 0.0
      %266 = vmatpush.msra.mxu0 0.0
      %267 = vmatpush.msra.mxu0 0.0
      %268 = vmatpush.msra.mxu0 0.0
      %269 = vmatpush.msra.mxu0 0.0
      %270 = vmatpush.msra.mxu0 0.0
      %271 = vmatpush.msra.mxu0 0.0
      %272 = vmatpush.msra.mxu0 0.0
      %273 = vmatpush.msra.mxu0 %v178
      %274 = vmatpush.msra.mxu0 %v177
      %275 = vmatpush.msra.mxu0 %v176
      %276 = vmatpush.msra.mxu0 %v175
      %277 = vmatpush.msra.mxu0 %v174
      %278 = vmatpush.msra.mxu0 %v173
      %279 = vmatpush.msra.mxu0 %v172
      %280 = vmatpush.msra.mxu0 %v171
      %281 = vmatmul.f32.gmra.mxu0 %v263
      %v282 = vpop.f32.mrf.mxu0
      %v283 = vadd.f32 %v184, %v282
      %284 = vdwg.mxu0
      %v285 = vsel %vm186, %v208, 0.0
      %286 = vadd.xlane.f32.xlu0 %v285
      %v287 = vpop.xlane.xlu0 %286
      %v288 = vadd.f32 %v287, 0.0
      %v289 = vsel %vm186, %v233, 0.0
      %290 = vadd.xlane.f32.xlu0 %v289
      %v291 = vpop.xlane.xlu0 %290
      %v292 = vadd.f32 %v288, %v291
      %v293 = vsel %vm186, %v258, 0.0
      %294 = vadd.xlane.f32.xlu0 %v293
      %v295 = vpop.xlane.xlu0 %294
      %v296 = vadd.f32 %v292, %v295
      %v297 = vsel %vm186, %v283, 0.0
      %298 = vadd.xlane.f32.xlu0 %v297
      %v299 = vpop.xlane.xlu0 %298
      %v300 = vadd.f32 %v296, %v299
      %v301 = vmul.f32 %v208, %v208
      %v302 = vsel %vm186, %v301, 0.0
      %303 = vadd.xlane.f32.xlu0 %v302
      %v304 = vpop.xlane.xlu0 %303
      %v305 = vadd.f32 %v304, 0.0
      %v306 = vmul.f32 %v233, %v233
      %v307 = vsel %vm186, %v306, 0.0
      %308 = vadd.xlane.f32.xlu0 %v307
      %v309 = vpop.xlane.xlu0 %308
      %v310 = vadd.f32 %v305, %v309
      %v311 = vmul.f32 %v258, %v258
      %v312 = vsel %vm186, %v311, 0.0
      %313 = vadd.xlane.f32.xlu0 %v312
      %v314 = vpop.xlane.xlu0 %313
      %v315 = vadd.f32 %v310, %v314
      %v316 = vmul.f32 %v283, %v283
      %v317 = vsel %vm186, %v316, 0.0
      %318 = vadd.xlane.f32.xlu0 %v317
      %v319 = vpop.xlane.xlu0 %318
      %v320 = vadd.f32 %v315, %v319
      %v321 = vrcp.pop 256.0
      %v322 = vmul.f32 256.0, %v321
      %v323 = vsub.f32 1.0, %v322
      %v324 = vmul.f32 %v321, %v323
      %v325 = vadd.f32 %v321, %v324
      %vm326 = vweird.f32 %v321
      %v327 = vsel %vm326, %v321, %v325
      %v328 = vmul.f32 %v300, %v327
      %v329 = vmul.f32 %v320, %v327
      %v330 = vmul.f32 %v328, %v328
      %v331 = vsub.f32 %v329, %v330
      %v332 = vadd.f32 %v331, 1e-05
      %v333 = vrsqrt.pop %v332
      %v334 = vmul.f32 %v333, %v332
      %v335 = vmul.f32 %v334, %v333
      %v336 = vmul.f32 0.5, %v335
      %v337 = vsub.f32 1.5, %v336
      %v338 = vmul.f32 %v333, %v337
      %vm339 = vweird.f32 %v332
      %vm340 = vweird.f32 %v333
      %vm341 = vmor %vm339, %vm340
      %v342 = vsel %vm341, %v333, %v338
      %v343 = vsub.f32 %v208, %v328
      %v344 = vmul.f32 %v343, %v342
      %v345 = vmax.f32 %v344, 0.0
      %v346 = vmin.f32 %v344, 0.0
      %v347 = vmul.f32 %v346, 1.442695
      %v348 = vpow.pop %v347
      %v349 = vsub.f32 %v348, 1.0
      %v350 = vmul.f32 %v349, 1.6732632
      %v351 = vadd.f32 %v345, %v350
      %v352 = vmul.f32 %v351, 1.050701
      %353 = vst.msk [vmem:[%s170] sm:$0xff] %vm186, %v352
      %v354 = vsub.f32 %v233, %v328
      %v355 = vmul.f32 %v354, %v342
      %v356 = vmax.f32 %v355, 0.0
      %v357 = vmin.f32 %v355, 0.0
      %v358 = vmul.f32 %v357, 1.442695
      %v359 = vpow.pop %v358
      %v360 = vsub.f32 %v359, 1.0
      %v361 = vmul.f32 %v360, 1.6732632
      %v362 = vadd.f32 %v356, %v361
      %v363 = vmul.f32 %v362, 1.050701
      %s364 = scalar_lea.vmem %s170, 8
      %365 = vst.msk [vmem:[%s364] sm:$0xff] %vm186, %v363
      %v366 = vsub.f32 %v258, %v328
      %v367 = vmul.f32 %v366, %v342
      %v368 = vmax.f32 %v367, 0.0
      %v369 = vmin.f32 %v367, 0.0
      %v370 = vmul.f32 %v369, 1.442695
      %v371 = vpow.pop %v370
      %v372 = vsub.f32 %v371, 1.0
      %v373 = vmul.f32 %v372, 1.6732632
      %v374 = vadd.f32 %v368, %v373
      %v375 = vmul.f32 %v374, 1.050701
      %s376 = scalar_lea.vmem %s170, 16
      %377 = vst.msk [vmem:[%s376] sm:$0xff] %vm186, %v375
      %v378 = vsub.f32 %v283, %v328
      %v379 = vmul.f32 %v378, %v342
      %v380 = vmax.f32 %v379, 0.0
      %v381 = vmin.f32 %v379, 0.0
      %v382 = vmul.f32 %v381, 1.442695
      %v383 = vpow.pop %v382
      %v384 = vsub.f32 %v383, 1.0
      %v385 = vmul.f32 %v384, 1.6732632
      %v386 = vadd.f32 %v380, %v385
      %v387 = vmul.f32 %v386, 1.050701
      %s388 = scalar_lea.vmem %s170, 24
      %389 = vst.msk [vmem:[%s388] sm:$0xff] %vm186, %v387
      %p390 = scmp.lt.s32.totalorder %s14, 1
      %s391 = scalar_select %p390, %s14, 1
      %s392 = smul.addr %s391, 4
      %s393 = smul.addr %s392, 8
      %s394 = scalar_lea.vmem %s3, %s393
      // Predicated region
      $region33: #{resnet_generator_forward.18} parent=31 // pred_check
        %p395 = pneg %p100
      $region34: #{resnet_generator_forward.18} parent=31 // pred_check_branch
        %397 = sbr.rel (%p395) target = $region36
      $region35: #{resnet_generator_forward.18} parent=31 // pred_region
        _
      $region36: #{resnet_generator_forward.18} parent=31 // pred_fallthru
        _
    $region32: #{resnet_generator_forward.18} parent=5 // pred_fallthru
      _
    %p398 = scmp.le.s32.totalorder 2, %s9
    // Predicated region
    $region37: #{resnet_generator_forward.18} parent=5 // pred_check
      %p399 = pneg %p398
    $region38: #{resnet_generator_forward.18} parent=5 // pred_check_branch
      %401 = sbr.rel (%p399) target = $region40
    $region39: #{resnet_generator_forward.18} parent=5 // pred_region
      %s402 = ssub.s32 %s9, 2
      // Predicated region
      $region41: #{resnet_generator_forward.18} parent=39 // pred_check
        %p403 = pneg %p106
      $region42: #{resnet_generator_forward.18} parent=39 // pred_check_branch
        %405 = sbr.rel (%p403) target = $region44
      $region43: #{resnet_generator_forward.18} parent=39 // pred_region
        %p406 = scmp.lt.s32.totalorder %s15, 1
        %s407 = scalar_select %p406, %s15, 1
        %s408 = smul.addr %s407, 4
        %s409 = smul.addr %s408, 8
        %s410 = scalar_lea.vmem %s3, %s409
      $region44: #{resnet_generator_forward.18} parent=39 // pred_fallthru
        _
    $region40: #{resnet_generator_forward.18} parent=5 // pred_fallthru
      _
  $region6: #{resnet_generator_forward.18} parent=0 // loop_footer
    %s13 = sadd.s32 1, %s9
  $region7: #{resnet_generator_forward.18} parent=0 // loop_footer_branch
    %8 = sbr.rel target = $region3
  $region8: #{resnet_generator_forward.18} parent=0 // loop_exit
    _

// kernel: resnet_generator_forward.19
$region0: #{resnet_generator_forward.19}
  #allocation0 [shape = 'u32[]', space=smem, size = 0x4, offset = 0x4, fixed_abs, tag = 'smem constant byte address 0x4 - core index']
  #allocation1 [shape = 'u32[72,128]{1,0:T(1,128)}', space=vmem, size = 0x9000, scoped, tag = 'internal scratch']
  %s0 = inlined_call_operand.vmem [shape: f32[2,392,256], index: 0, kind: input, shape index: {}]
  %s1 = inlined_call_operand.vmem [shape: f32[3,392], index: 1, kind: input, shape index: {}]
  %s2 = inlined_call_operand.vmem [shape: f32[3,1], index: 2, kind: input, shape index: {}]
  %s3 = inlined_call_operand.vmem [shape: f32[2,3,256], index: 3, kind: output, shape index: {}]
  %s4 = sld [smem:[#allocation0]]
  $region45: #{resnet_generator_forward.19} parent=0
    _
  %s6 = ssub.s32 1, %s4
  %s7 = scalar_select 0, %s6, %s4
  loop: start=0, step=1, limit=4
  $region2: #{resnet_generator_forward.19} parent=0 // loop_pre_header
    _
  $region3: #{resnet_generator_forward.19} parent=0 // loop_header
    %s9 = sphi 0, %s13
    %p10 = scmp.ge.s32.totalorder %s9, 4
    %s19 = sphi 0, %s21
    %s22 = sphi 0, %s19
    %s23 = sphi 0, %s22
    %s39 = sphi 0, %s23
    %s43 = sphi 0, %s43
    %s45 = sphi 0, %s43
    %s46 = sphi 0, %s45
    %s60 = sphi 0, %s46
    %s64 = sphi 0, %s64
    %s66 = sphi 0, %s64
    %s67 = sphi 0, %s66
    %s81 = sphi 0, %s67
    %s87 = sphi 0, %s89
    %s90 = sphi 0, %s87
    %s91 = sphi 0, %s90
    %s107 = sphi 0, %s91
  $region4: #{resnet_generator_forward.19} parent=0 // loop_header_branch
    %12 = sbr.rel (%p10) target = $region8
  $region5: #{resnet_generator_forward.19} parent=0 // loop_body
    %s14 = ssub.s32 %s9, 1
    %s15 = ssub.s32 %s9, 2
    %s16 = sadd.s32 %s9, 1
    %s17 = ssub.s32 %s9, %s16
    %p18 = scmp.eq.s32.totalorder %s17, 0
    %s20 = sadd.s32 %s19, 1
    %s21 = scalar_select %p18, %s19, %s20
    %p24 = pneg %p18
    %p25 = scmp.eq.s32.totalorder %s9, 1
    %p26 = por %p24, %p25
    %p27 = scmp.ne.s32.totalorder %s19, %s22
    %p28 = scmp.eq.s32.totalorder %s9, 0
    %p29 = por %p27, %p28
    %p30 = scmp.ne.s32.totalorder %s19, %s22
    %p31 = scmp.eq.s32.totalorder %s14, 1
    %p32 = por %p30, %p31
    %p33 = scmp.ne.s32.totalorder %s22, %s23
    %p34 = scmp.eq.s32.totalorder %s14, 0
    %p35 = por %p33, %p34
    %p36 = scmp.ne.s32.totalorder %s22, %s23
    %p37 = scmp.eq.s32.totalorder %s15, 1
    %p38 = por %p36, %p37
    %p40 = scmp.ne.s32.totalorder %s23, %s39
    %p41 = scmp.eq.s32.totalorder %s15, 0
    %p42 = por %p40, %p41
    %s44 = sadd.s32 %s43, 1
    %p47 = scmp.eq.s32.totalorder %s9, 1
    %p48 = scmp.ne.s32.totalorder %s43, %s45
    %p49 = scmp.eq.s32.totalorder %s9, 0
    %p50 = por %p48, %p49
    %p51 = scmp.ne.s32.totalorder %s43, %s45
    %p52 = scmp.eq.s32.totalorder %s14, 1
    %p53 = por %p51, %p52
    %p54 = scmp.ne.s32.totalorder %s45, %s46
    %p55 = scmp.eq.s32.totalorder %s14, 0
    %p56 = por %p54, %p55
    %p57 = scmp.ne.s32.totalorder %s45, %s46
    %p58 = scmp.eq.s32.totalorder %s15, 1
    %p59 = por %p57, %p58
    %p61 = scmp.ne.s32.totalorder %s46, %s60
    %p62 = scmp.eq.s32.totalorder %s15, 0
    %p63 = por %p61, %p62
    %s65 = sadd.s32 %s64, 1
    %p68 = scmp.eq.s32.totalorder %s9, 1
    %p69 = scmp.ne.s32.totalorder %s64, %s66
    %p70 = scmp.eq.s32.totalorder %s9, 0
    %p71 = por %p69, %p70
    %p72 = scmp.ne.s32.totalorder %s64, %s66
    %p73 = scmp.eq.s32.totalorder %s14, 1
    %p74 = por %p72, %p73
    %p75 = scmp.ne.s32.totalorder %s66, %s67
    %p76 = scmp.eq.s32.totalorder %s14, 0
    %p77 = por %p75, %p76
    %p78 = scmp.ne.s32.totalorder %s66, %s67
    %p79 = scmp.eq.s32.totalorder %s15, 1
    %p80 = por %p78, %p79
    %p82 = scmp.ne.s32.totalorder %s67, %s81
    %p83 = scmp.eq.s32.totalorder %s15, 0
    %p84 = por %p82, %p83
    %s85 = ssub.s32 %s9, %s16
    %p86 = scmp.eq.s32.totalorder %s85, 0
    %s88 = sadd.s32 %s87, 1
    %s89 = scalar_select %p86, %s87, %s88
    %p92 = pneg %p86
    %p93 = scmp.eq.s32.totalorder %s9, 1
    %p94 = por %p92, %p93
    %p95 = scmp.ne.s32.totalorder %s87, %s90
    %p96 = scmp.eq.s32.totalorder %s9, 0
    %p97 = por %p95, %p96
    %p98 = scmp.ne.s32.totalorder %s87, %s90
    %p99 = scmp.eq.s32.totalorder %s14, 1
    %p100 = por %p98, %p99
    %p101 = scmp.ne.s32.totalorder %s90, %s91
    %p102 = scmp.eq.s32.totalorder %s14, 0
    %p103 = por %p101, %p102
    %p104 = scmp.ne.s32.totalorder %s90, %s91
    %p105 = scmp.eq.s32.totalorder %s15, 1
    %p106 = por %p104, %p105
    %p108 = scmp.ne.s32.totalorder %s91, %s107
    %p109 = scmp.eq.s32.totalorder %s15, 0
    %p110 = por %p108, %p109
    %p111 = scmp.le.s32.totalorder 1, %s9
    %p112 = scmp.lt.s32.totalorder %s9, 3
    %p113 = pnand %p111, %p112
    %p114 = pneg %p113
    // Predicated region
    $region9: #{resnet_generator_forward.19} parent=5 // pred_check
      _
    $region10: #{resnet_generator_forward.19} parent=5 // pred_check_branch
      %116 = sbr.rel (%p113) target = $region12
    $region11: #{resnet_generator_forward.19} parent=5 // pred_region
      %s117 = ssub.s32 %s9, 1
      // Predicated region
      $region13: #{resnet_generator_forward.19} parent=11 // pred_check
        %p118 = pneg %p56
      $region14: #{resnet_generator_forward.19} parent=11 // pred_check_branch
        %120 = sbr.rel (%p118) target = $region16
      $region15: #{resnet_generator_forward.19} parent=11 // pred_region
        _
      $region16: #{resnet_generator_forward.19} parent=11 // pred_fallthru
        _
      // Predicated region
      $region17: #{resnet_generator_forward.19} parent=11 // pred_check
        %p121 = pneg %p77
      $region18: #{resnet_generator_forward.19} parent=11 // pred_check_branch
        %123 = sbr.rel (%p121) target = $region20
      $region19: #{resnet_generator_forward.19} parent=11 // pred_region
        _
      $region20: #{resnet_generator_forward.19} parent=11 // pred_fallthru
        _
    $region12: #{resnet_generator_forward.19} parent=5 // pred_fallthru
      _
    %p124 = scmp.lt.s32.totalorder %s9, 2
    // Predicated region
    $region21: #{resnet_generator_forward.19} parent=5 // pred_check
      %p125 = pneg %p124
    $region22: #{resnet_generator_forward.19} parent=5 // pred_check_branch
      %127 = sbr.rel (%p125) target = $region24
    $region23: #{resnet_generator_forward.19} parent=5 // pred_region
      // Predicated region
      $region25: #{resnet_generator_forward.19} parent=23 // pred_check
        %p128 = pneg %p29
      $region26: #{resnet_generator_forward.19} parent=23 // pred_check_branch
        %130 = sbr.rel (%p128) target = $region28
      $region27: #{resnet_generator_forward.19} parent=23 // pred_region
        %p131 = scmp.lt.s32.totalorder %s9, 1
        %s132 = scalar_select %p131, %s9, 1
        %s133 = smul.addr %s132, 98
        %s134 = smul.addr %s133, 8
        %s135 = scalar_lea.vmem %s0, %s134
      $region28: #{resnet_generator_forward.19} parent=23 // pred_fallthru
        _
    $region24: #{resnet_generator_forward.19} parent=5 // pred_fallthru
      _
    %p136 = scmp.le.s32.totalorder 1, %s9
    %p137 = scmp.lt.s32.totalorder %s9, 3
    %p138 = pnand %p136, %p137
    %p139 = pneg %p138
    // Predicated region
    $region29: #{resnet_generator_forward.19} parent=5 // pred_check
      _
    $region30: #{resnet_generator_forward.19} parent=5 // pred_check_branch
      %141 = sbr.rel (%p138) target = $region32
    $region31: #{resnet_generator_forward.19} parent=5 // pred_region
      %s142 = ssub.s32 %s9, 1
      %p143 = scmp.lt.s32.totalorder %s14, 1
      %s144 = scalar_select %p143, %s14, 1
      %s145 = smul.addr %s144, 98
      %s146 = smul.addr %s145, 8
      %s147 = scalar_lea.vmem %s0, %s146
      %p148 = pneg %p35
      %p149 = pneg %p32
      %p150 = pneg %p56
      %p151 = pneg %p53
      %p152 = pneg %p77
      %p153 = pneg %p74
      %p154 = pneg %p103
      %p155 = pneg %p100
      %p156 = scmp.lt.s32.totalorder %s14, 1
      %s157 = scalar_select %p156, %s14, 1
      %s158 = smul.addr %s157, 2
      %s159 = smul.addr %s158, 4
      %s160 = scalar_lea.vmem %s3, %s159
      %p161 = scmp.lt.s32.totalorder %s14, 1
      %s162 = scalar_select %p161, %s14, 1
      %s163 = smul.addr %s162, 98
      %s164 = smul.addr %s163, 8
      %s165 = scalar_lea.vmem %s0, %s164
      %p166 = scmp.lt.s32.totalorder %s14, 1
      %s167 = scalar_select %p166, %s14, 1
      %s168 = smul.addr %s167, 2
      %s169 = smul.addr %s168, 4
      %s170 = scalar_lea.vmem %s3, %s169
      %v171 = vld [vmem:[%s1] sm:$0x77]
      %v172 = vld [vmem:[%s1 + $0x8] sm:$0x77]
      %v173 = vld [vmem:[%s165] sm:$0xff]
      %v174 = vld [vmem:[%s165 + $0x8] sm:$0xff]
      %v175 = vld [vmem:[%s165 + $0x10] sm:$0xff]
      %v176 = vld [vmem:[%s165 + $0x18] sm:$0xff]
      %v177 = vld [vmem:[%s165 + $0x20] sm:$0xff]
      %v178 = vld [vmem:[%s165 + $0x28] sm:$0xff]
      %v179 = vld [vmem:[%s165 + $0x30] sm:$0xff]
      %v180 = vld [vmem:[%s165 + $0x38] sm:$0xff]
      %v181 = vld [vmem:[%s165 + $0x40] sm:$0xff]
      %v182 = vld [vmem:[%s165 + $0x48] sm:$0xff]
      %v183 = vld [vmem:[%s165 + $0x50] sm:$0xff]
      %v184 = vld [vmem:[%s165 + $0x58] sm:$0xff]
      %v185 = vld [vmem:[%s165 + $0x60] sm:$0xff]
      %v186 = vld [vmem:[%s165 + $0x68] sm:$0xff]
      %v187 = vld [vmem:[%s165 + $0x70] sm:$0xff]
      %v188 = vld [vmem:[%s165 + $0x78] sm:$0xff]
      %v189 = vld [vmem:[%s165 + $0x80] sm:$0xff]
      %v190 = vld [vmem:[%s165 + $0x88] sm:$0xff]
      %v191 = vld [vmem:[%s165 + $0x90] sm:$0xff]
      %v192 = vld [vmem:[%s165 + $0x98] sm:$0xff]
      %v193 = vld [vmem:[%s165 + $0xa0] sm:$0xff]
      %v194 = vld [vmem:[%s165 + $0xa8] sm:$0xff]
      %v195 = vld [vmem:[%s165 + $0xb0] sm:$0xff]
      %v196 = vld [vmem:[%s165 + $0xb8] sm:$0xff]
      %v197 = vld [vmem:[%s165 + $0xc0] sm:$0xff]
      %v198 = vld [vmem:[%s165 + $0xc8] sm:$0xff]
      %v199 = vld [vmem:[%s165 + $0xd0] sm:$0xff]
      %v200 = vld [vmem:[%s165 + $0xd8] sm:$0xff]
      %v201 = vld [vmem:[%s165 + $0xe0] sm:$0xff]
      %v202 = vld [vmem:[%s165 + $0xe8] sm:$0xff]
      %v203 = vld [vmem:[%s165 + $0xf0] sm:$0xff]
      %v204 = vld [vmem:[%s165 + $0xf8] sm:$0xff]
      %v205 = vld [vmem:[%s165 + $0x100] sm:$0xff]
      %v206 = vld [vmem:[%s165 + $0x108] sm:$0xff]
      %v207 = vld [vmem:[%s165 + $0x110] sm:$0xff]
      %v208 = vld [vmem:[%s165 + $0x118] sm:$0xff]
      %v209 = vld [vmem:[%s165 + $0x120] sm:$0xff]
      %v210 = vld [vmem:[%s165 + $0x128] sm:$0xff]
      %v211 = vld [vmem:[%s165 + $0x130] sm:$0xff]
      %v212 = vld [vmem:[%s165 + $0x138] sm:$0xff]
      %v213 = vld [vmem:[%s165 + $0x140] sm:$0xff]
      %v214 = vld [vmem:[%s165 + $0x148] sm:$0xff]
      %v215 = vld [vmem:[%s165 + $0x150] sm:$0xff]
      %v216 = vld [vmem:[%s165 + $0x158] sm:$0xff]
      %v217 = vld [vmem:[%s165 + $0x160] sm:$0xff]
      %v218 = vld [vmem:[%s165 + $0x168] sm:$0xff]
      %v219 = vld [vmem:[%s165 + $0x170] sm:$0xff]
      %v220 = vld [vmem:[%s165 + $0x178] sm:$0xff]
      %v221 = vld [vmem:[%s165 + $0x180] sm:$0xff]
      %v222 = vld [vmem:[%s165 + $0x188] sm:$0xff]
      %v223 = vld [vmem:[%s165 + $0x190] sm:$0xff]
      %v224 = vld [vmem:[%s165 + $0x198] sm:$0xff]
      %v225 = vld [vmem:[%s165 + $0x1a0] sm:$0xff]
      %v226 = vld [vmem:[%s165 + $0x1a8] sm:$0xff]
      %v227 = vld [vmem:[%s165 + $0x1b0] sm:$0xff]
      %v228 = vld [vmem:[%s165 + $0x1b8] sm:$0xff]
      %v229 = vld [vmem:[%s165 + $0x1c0] sm:$0xff]
      %v230 = vld [vmem:[%s165 + $0x1c8] sm:$0xff]
      %v231 = vld [vmem:[%s165 + $0x1d0] sm:$0xff]
      %v232 = vld [vmem:[%s165 + $0x1d8] sm:$0xff]
      %v233 = vld [vmem:[%s165 + $0x1e0] sm:$0xff]
      %v234 = vld [vmem:[%s165 + $0x1e8] sm:$0xff]
      %v235 = vld [vmem:[%s165 + $0x1f0] sm:$0xff]
      %v236 = vld [vmem:[%s165 + $0x1f8] sm:$0xff]
      %v237 = vld [vmem:[%s165 + $0x200] sm:$0xff]
      %v238 = vld [vmem:[%s165 + $0x208] sm:$0xff]
      %v239 = vld [vmem:[%s165 + $0x210] sm:$0xff]
      %v240 = vld [vmem:[%s165 + $0x218] sm:$0xff]
      %v241 = vld [vmem:[%s165 + $0x220] sm:$0xff]
      %v242 = vld [vmem:[%s165 + $0x228] sm:$0xff]
      %v243 = vld [vmem:[%s165 + $0x230] sm:$0xff]
      %v244 = vld [vmem:[%s165 + $0x238] sm:$0xff]
      %v245 = vld [vmem:[%s165 + $0x240] sm:$0xff]
      %v246 = vld [vmem:[%s165 + $0x248] sm:$0xff]
      %v247 = vld [vmem:[%s165 + $0x250] sm:$0xff]
      %v248 = vld [vmem:[%s165 + $0x258] sm:$0xff]
      %v249 = vld [vmem:[%s165 + $0x260] sm:$0xff]
      %v250 = vld [vmem:[%s165 + $0x268] sm:$0xff]
      %v251 = vld [vmem:[%s165 + $0x270] sm:$0xff]
      %v252 = vld [vmem:[%s165 + $0x278] sm:$0xff]
      %v253 = vld [vmem:[%s165 + $0x280] sm:$0xff]
      %v254 = vld [vmem:[%s165 + $0x288] sm:$0xff]
      %v255 = vld [vmem:[%s165 + $0x290] sm:$0xff]
      %v256 = vld [vmem:[%s165 + $0x298] sm:$0xff]
      %v257 = vld [vmem:[%s165 + $0x2a0] sm:$0xff]
      %v258 = vld [vmem:[%s165 + $0x2a8] sm:$0xff]
      %v259 = vld [vmem:[%s165 + $0x2b0] sm:$0xff]
      %v260 = vld [vmem:[%s165 + $0x2b8] sm:$0xff]
      %v261 = vld [vmem:[%s165 + $0x2c0] sm:$0xff]
      %v262 = vld [vmem:[%s165 + $0x2c8] sm:$0xff]
      %v263 = vld [vmem:[%s165 + $0x2d0] sm:$0xff]
      %v264 = vld [vmem:[%s165 + $0x2d8] sm:$0xff]
      %v265 = vld [vmem:[%s165 + $0x2e0] sm:$0xff]
      %v266 = vld [vmem:[%s165 + $0x2e8] sm:$0xff]
      %v267 = vld [vmem:[%s165 + $0x2f0] sm:$0xff]
      %v268 = vld [vmem:[%s165 + $0x2f8] sm:$0xff]
      %v269 = vld [vmem:[%s165 + $0x300] sm:$0xff]
      %v270 = vld [vmem:[%s165 + $0x308] sm:$0xff]
      %v271 = vld [vmem:[%s2] sm:$0x7]
      %273 = vset.pattern.permute.xlu0 0
      %274 = vperm.xlu0 %273, %v271
      %v275 = vpop.permute.xlu0 %274
      %279 = vst [vmem:[#allocation1] ss:$2 sm:$0xff] %v171
      %s280 = scalar_lea.vmem [#allocation1], 16
      %281 = vst [vmem:[%s280] ss:$2 sm:$0xff] %v172
      %v282 = vld.sshfl [vmem:[#allocation1] sm:$0xff pattern:$0x75316420]
      %v283 = vld.sshfl [vmem:[#allocation1 + $0x8] sm:$0xff pattern:$0x75316420]
      %v284 = vld.sshfl [vmem:[#allocation1 + $0x10] sm:$0xff pattern:$0x75316420]
      %v285 = vld.sshfl [vmem:[#allocation1 + $0x18] sm:$0xff pattern:$0x75316420]
      %vm289 = vcmask 64512
      %v290 = vsel %vm289, %v285, 0
      %292 = vmatpush.msra.mxu0 %v203
      %293 = vmatpush.msra.mxu0 %v201
      %294 = vmatpush.msra.mxu0 %v199
      %295 = vmatpush.msra.mxu0 %v197
      %296 = vmatpush.msra.mxu0 %v195
      %297 = vmatpush.msra.mxu0 %v193
      %298 = vmatpush.msra.mxu0 %v191
      %299 = vmatpush.msra.mxu0 %v189
      %300 = vmatpush.msra.mxu0 %v187
      %301 = vmatpush.msra.mxu0 %v185
      %302 = vmatpush.msra.mxu0 %v183
      %303 = vmatpush.msra.mxu0 %v181
      %304 = vmatpush.msra.mxu0 %v179
      %305 = vmatpush.msra.mxu0 %v177
      %306 = vmatpush.msra.mxu0 %v175
      %307 = vmatpush.msra.mxu0 %v173
      %308 = vmatmul.f32.gmra.mxu0 %v282
      %v309 = vpop.f32.mrf.mxu0
      %v310 = vadd.f32 %v275, %v309
      %311 = vdwg.mxu0
      %312 = vmatpush.msra.mxu0 %v235
      %313 = vmatpush.msra.mxu0 %v233
      %314 = vmatpush.msra.mxu0 %v231
      %315 = vmatpush.msra.mxu0 %v229
      %316 = vmatpush.msra.mxu0 %v227
      %317 = vmatpush.msra.mxu0 %v225
      %318 = vmatpush.msra.mxu0 %v223
      %319 = vmatpush.msra.mxu0 %v221
      %320 = vmatpush.msra.mxu0 %v219
      %321 = vmatpush.msra.mxu0 %v217
      %322 = vmatpush.msra.mxu0 %v215
      %323 = vmatpush.msra.mxu0 %v213
      %324 = vmatpush.msra.mxu0 %v211
      %325 = vmatpush.msra.mxu0 %v209
      %326 = vmatpush.msra.mxu0 %v207
      %327 = vmatpush.msra.mxu0 %v205
      %328 = vmatmul.f32.gmra.mxu0 %v283
      %v329 = vpop.f32.mrf.mxu0
      %v330 = vadd.f32 %v310, %v329
      %331 = vdwg.mxu0
      %332 = vmatpush.msra.mxu0 %v267
      %333 = vmatpush.msra.mxu0 %v265
      %334 = vmatpush.msra.mxu0 %v263
      %335 = vmatpush.msra.mxu0 %v261
      %336 = vmatpush.msra.mxu0 %v259
      %337 = vmatpush.msra.mxu0 %v257
      %338 = vmatpush.msra.mxu0 %v255
      %339 = vmatpush.msra.mxu0 %v253
      %340 = vmatpush.msra.mxu0 %v251
      %341 = vmatpush.msra.mxu0 %v249
      %342 = vmatpush.msra.mxu0 %v247
      %343 = vmatpush.msra.mxu0 %v245
      %344 = vmatpush.msra.mxu0 %v243
      %345 = vmatpush.msra.mxu0 %v241
      %346 = vmatpush.msra.mxu0 %v239
      %347 = vmatpush.msra.mxu0 %v237
      %348 = vmatmul.f32.gmra.mxu0 %v284
      %v349 = vpop.f32.mrf.mxu0
      %v350 = vadd.f32 %v330, %v349
      %351 = vdwg.mxu0
      %352 = vmatpush.msra.mxu0 0.0
      %353 = vmatpush.msra.mxu0 0.0
      %354 = vmatpush.msra.mxu0 0.0
      %355 = vmatpush.msra.mxu0 0.0
      %356 = vmatpush.msra.mxu0 0.0
      %357 = vmatpush.msra.mxu0 0.0
      %358 = vmatpush.msra.mxu0 0.0
      %359 = vmatpush.msra.mxu0 0.0
      %360 = vmatpush.msra.mxu0 0.0
      %361 = vmatpush.msra.mxu0 0.0
      %362 = vmatpush.msra.mxu0 0.0
      %363 = vmatpush.msra.mxu0 0.0
      %364 = vmatpush.msra.mxu0 0.0
      %365 = vmatpush.msra.mxu0 0.0
      %366 = vmatpush.msra.mxu0 0.0
      %367 = vmatpush.msra.mxu0 %v269
      %368 = vmatmul.f32.gmra.mxu0 %v290
      %v369 = vpop.f32.mrf.mxu0
      %v370 = vadd.f32 %v350, %v369
      %371 = vdwg.mxu0
      %372 = vmatpush.msra.mxu0 %v204
      %373 = vmatpush.msra.mxu0 %v202
      %374 = vmatpush.msra.mxu0 %v200
      %375 = vmatpush.msra.mxu0 %v198
      %376 = vmatpush.msra.mxu0 %v196
      %377 = vmatpush.msra.mxu0 %v194
      %378 = vmatpush.msra.mxu0 %v192
      %379 = vmatpush.msra.mxu0 %v190
      %380 = vmatpush.msra.mxu0 %v188
      %381 = vmatpush.msra.mxu0 %v186
      %382 = vmatpush.msra.mxu0 %v184
      %383 = vmatpush.msra.mxu0 %v182
      %384 = vmatpush.msra.mxu0 %v180
      %385 = vmatpush.msra.mxu0 %v178
      %386 = vmatpush.msra.mxu0 %v176
      %387 = vmatpush.msra.mxu0 %v174
      %388 = vmatmul.f32.gmra.mxu0 %v282
      %v389 = vpop.f32.mrf.mxu0
      %v390 = vadd.f32 %v275, %v389
      %391 = vdwg.mxu0
      %392 = vmatpush.msra.mxu0 %v236
      %393 = vmatpush.msra.mxu0 %v234
      %394 = vmatpush.msra.mxu0 %v232
      %395 = vmatpush.msra.mxu0 %v230
      %396 = vmatpush.msra.mxu0 %v228
      %397 = vmatpush.msra.mxu0 %v226
      %398 = vmatpush.msra.mxu0 %v224
      %399 = vmatpush.msra.mxu0 %v222
      %400 = vmatpush.msra.mxu0 %v220
      %401 = vmatpush.msra.mxu0 %v218
      %402 = vmatpush.msra.mxu0 %v216
      %403 = vmatpush.msra.mxu0 %v214
      %404 = vmatpush.msra.mxu0 %v212
      %405 = vmatpush.msra.mxu0 %v210
      %406 = vmatpush.msra.mxu0 %v208
      %407 = vmatpush.msra.mxu0 %v206
      %408 = vmatmul.f32.gmra.mxu0 %v283
      %v409 = vpop.f32.mrf.mxu0
      %v410 = vadd.f32 %v390, %v409
      %411 = vdwg.mxu0
      %412 = vmatpush.msra.mxu0 %v268
      %413 = vmatpush.msra.mxu0 %v266
      %414 = vmatpush.msra.mxu0 %v264
      %415 = vmatpush.msra.mxu0 %v262
      %416 = vmatpush.msra.mxu0 %v260
      %417 = vmatpush.msra.mxu0 %v258
      %418 = vmatpush.msra.mxu0 %v256
      %419 = vmatpush.msra.mxu0 %v254
      %420 = vmatpush.msra.mxu0 %v252
      %421 = vmatpush.msra.mxu0 %v250
      %422 = vmatpush.msra.mxu0 %v248
      %423 = vmatpush.msra.mxu0 %v246
      %424 = vmatpush.msra.mxu0 %v244
      %425 = vmatpush.msra.mxu0 %v242
      %426 = vmatpush.msra.mxu0 %v240
      %427 = vmatpush.msra.mxu0 %v238
      %428 = vmatmul.f32.gmra.mxu0 %v284
      %v429 = vpop.f32.mrf.mxu0
      %v430 = vadd.f32 %v410, %v429
      %431 = vdwg.mxu0
      %432 = vmatpush.msra.mxu0 0.0
      %433 = vmatpush.msra.mxu0 0.0
      %434 = vmatpush.msra.mxu0 0.0
      %435 = vmatpush.msra.mxu0 0.0
      %436 = vmatpush.msra.mxu0 0.0
      %437 = vmatpush.msra.mxu0 0.0
      %438 = vmatpush.msra.mxu0 0.0
      %439 = vmatpush.msra.mxu0 0.0
      %440 = vmatpush.msra.mxu0 0.0
      %441 = vmatpush.msra.mxu0 0.0
      %442 = vmatpush.msra.mxu0 0.0
      %443 = vmatpush.msra.mxu0 0.0
      %444 = vmatpush.msra.mxu0 0.0
      %445 = vmatpush.msra.mxu0 0.0
      %446 = vmatpush.msra.mxu0 0.0
      %447 = vmatpush.msra.mxu0 %v270
      %448 = vmatmul.f32.gmra.mxu0 %v290
      %v449 = vpop.f32.mrf.mxu0
      %v450 = vadd.f32 %v430, %v449
      %451 = vdwg.mxu0
      %v452 = vtanh.pop %v370
      %v453 = vtanh.pop %v450
      %v456 = vrot.slane %v453, 4
      %vm457 = vcmask 1043456
      %v458 = vsel %vm457, %v452, %v456
      %460 = vst [vmem:[%s170] sm:$0x77] %v458
      %p461 = scmp.lt.s32.totalorder %s14, 1
      %s462 = scalar_select %p461, %s14, 1
      %s463 = smul.addr %s462, 2
      %s464 = smul.addr %s463, 4
      %s465 = scalar_lea.vmem %s3, %s464
      // Predicated region
      $region33: #{resnet_generator_forward.19} parent=31 // pred_check
        %p466 = pneg %p100
      $region34: #{resnet_generator_forward.19} parent=31 // pred_check_branch
        %468 = sbr.rel (%p466) target = $region36
      $region35: #{resnet_generator_forward.19} parent=31 // pred_region
        _
      $region36: #{resnet_generator_forward.19} parent=31 // pred_fallthru
        _
    $region32: #{resnet_generator_forward.19} parent=5 // pred_fallthru
      _
    %p469 = scmp.le.s32.totalorder 2, %s9
    // Predicated region
    $region37: #{resnet_generator_forward.19} parent=5 // pred_check
      %p470 = pneg %p469
    $region38: #{resnet_generator_forward.19} parent=5 // pred_check_branch
      %472 = sbr.rel (%p470) target = $region40
    $region39: #{resnet_generator_forward.19} parent=5 // pred_region
      %s473 = ssub.s32 %s9, 2
      // Predicated region
      $region41: #{resnet_generator_forward.19} parent=39 // pred_check
        %p474 = pneg %p106
      $region42: #{resnet_generator_forward.19} parent=39 // pred_check_branch
        %476 = sbr.rel (%p474) target = $region44
      $region43: #{resnet_generator_forward.19} parent=39 // pred_region
        %p477 = scmp.lt.s32.totalorder %s15, 1
        %s478 = scalar_select %p477, %s15, 1
        %s479 = smul.addr %s478, 2
        %s480 = smul.addr %s479, 4
        %s481 = scalar_lea.vmem %s3, %s480
      $region44: #{resnet_generator_forward.19} parent=39 // pred_fallthru
        _
    $region40: #{resnet_generator_forward.19} parent=5 // pred_fallthru
      _
  $region6: #{resnet_generator_forward.19} parent=0 // loop_footer
    %s13 = sadd.s32 1, %s9
  $region7: #{resnet_generator_forward.19} parent=0 // loop_footer_branch
    %8 = sbr.rel target = $region3
  $region8: #{resnet_generator_forward.19} parent=0 // loop_exit
    _

</llo_original>
